<compile_context>
chip_gen: v6e
topology: v6e:2x2x1
jax: 0.10.0
libtpu: 0.0.40
codegen_flags: <defaults>
</compile_context>

<pallas_src>
from functools import partial

import numpy as np
import jax
import jax.numpy as jnp
from jax.experimental import pallas as pl
from jax.experimental.pallas import tpu as pltpu

NEG_SLOPE = 0.2      # LeakyReLU negative_slope (module default)
PAD_NEG = -1e9       # logit for padded src nodes (exp -> 0, no inf*0 NaNs)


def _round_up(x, m):
    return ((x + m - 1) // m) * m


def _tile_plan(n, tm, tk):
    """Tile sizes: multiples of 128 that divide the 128-aligned node count
    (no padding beyond lane alignment) and, when possible, give >= 2 dst
    tiles so the 'parallel' dst axis shards across v7x's 2 TensorCores."""
    n_pad = _round_up(max(n, 1), 128)
    k = n_pad // 128
    m = max(1, min(tm // 128, k if k < 2 else k // 2))
    while k % m:
        m -= 1
    s = max(1, min(tk // 128, k))
    while k % s:
        s -= 1
    return m * 128, s * 128, n_pad


def prepare_gat_adjacency(adj):
    """Cast the dense 0/1 edge mask (adj[v, u] = 1 iff edge u->v) to int8 and
    pad it to a 128-aligned square.  adj is the only O(N^2) stream in the
    forward pass: call this ONCE per graph, outside the per-call jit path."""
    n = adj.shape[0]
    n_pad = _round_up(max(n, 1), 128)
    a8 = (adj != 0).astype(jnp.int8)
    if n_pad == n:
        return a8
    return jnp.zeros((n_pad, n_pad), jnp.int8).at[:n, :n].set(a8)


# --------------------------------------------------------------------------
# Stage 1: node projection  z = feat @ W ,  (el | er) = z @ Mlr
# --------------------------------------------------------------------------
def _gat_proj_kernel(feat_ref, w_ref, mlr_ref, z_ref, e_ref):
    # feat_ref: [PM, Din] bf16   w_ref: [Din, HF] bf16   mlr_ref: [HF, 2H] f32
    z = jnp.dot(feat_ref[...], w_ref[...], preferred_element_type=jnp.float32)
    # f32 second dot: these are softmax logits (precision > tiny MXU saving).
    e_ref[...] = jnp.dot(z, mlr_ref[...], preferred_element_type=jnp.float32)
    z_ref[...] = z.astype(z_ref.dtype)           # bf16 copy for aggregation


# --------------------------------------------------------------------------
# Stage 2: masked edge-softmax + message aggregation
# --------------------------------------------------------------------------
def _gat_attn_kernel(er_ref, m_ref, elT_ref, z_ref, adj_ref, bias_ref, out_ref,
                     acc_scr, *, num_heads, out_feats):
    # er_ref : [TM, H]        f32  dst-side attention terms
    # m_ref  : [TM, H]        f32  per-(dst, head) softmax shift (upper bound)
    # elT_ref: [H, TK]        f32  src-side attention terms
    # z_ref  : [TK, H*(F+1)]  bf16 per-head messages + trailing ones column
    # adj_ref: [TM, TK]       int8 0/1 mask, adj[v, u]
    # out_ref: [TM, H*F]      f32  (same block across src axis)
    # acc_scr: [TM, H*(F+1)]  f32  unnormalized numerators + denominators
    j = pl.program_id(1)
    H, F = num_heads, out_feats
    Fa = F + 1

    @pl.when(j == 0)
    def _init():
        acc_scr[...] = jnp.zeros_like(acc_scr)

    er = er_ref[...]                                   # [TM, H]
    m = m_ref[...]                                     # [TM, H]
    elT = elT_ref[...]                                 # [H, TK]
    adj = adj_ref[...].astype(jnp.float32)             # converted once per tile
    z = z_ref[...]                                     # [TK, H*Fa] bf16

    for h in range(H):
        t = er[:, h:h + 1] + elT[h:h + 1, :]           # [TM, TK]
        e = jnp.maximum(t, NEG_SLOPE * t)              # LeakyReLU (1 mul + 1 max)
        p = jnp.exp(e - m[:, h:h + 1]) * adj           # multiplicative edge mask
        # [TM, F+1]: columns 0..F-1 = weighted messages, column F = sum_u p
        acc_scr[:, h * Fa:(h + 1) * Fa] += jnp.dot(
            p.astype(z.dtype), z[:, h * Fa:(h + 1) * Fa],
            preferred_element_type=jnp.float32)

    @pl.when(j == pl.num_programs(1) - 1)
    def _finalize():
        for h in range(H):
            num = acc_scr[:, h * Fa:h * Fa + F]                       # [TM, F]
            inv_l = pl.reciprocal(acc_scr[:, h * Fa + F:(h + 1) * Fa],
                                  approx=True)                        # [TM, 1]
            out_ref[:, h * F:(h + 1) * F] = (
                num * inv_l + bias_ref[:, h * F:(h + 1) * F]
            ).astype(out_ref.dtype)


# --------------------------------------------------------------------------
# Wrapper
# --------------------------------------------------------------------------
def gat_conv_pallas(feat, W, attn_l, attn_r, adj, bias, *, tm=256, tk=1024):
    """Forward pass of _GATConv (residual=False, no dropout, no activation).

    adj: preferably the padded int8 mask from prepare_gat_adjacency (done once
    per graph); a raw [N, N] 0/1 mask is also accepted (it is then cast/padded
    per call, which costs an extra O(N^2) HBM pass).  Every node must have
    in-degree >= 1 (the module itself raises otherwise).
    """
    N, Din = feat.shape
    H, F = attn_l.shape
    HF, Fa = H * F, F + 1
    assert W.shape == (Din, HF)
    f32, bf16 = jnp.float32, jnp.bfloat16

    tm_e, tk_e, n_pad = _tile_plan(N, tm, tk)

    if adj.dtype == jnp.int8 and adj.shape == (n_pad, n_pad):
        adj_p = adj
    else:
        adj_p = prepare_gat_adjacency(adj)     # fallback; prefer doing this once

    # ---- parameter plumbing (tiny, all jnp) ------------------------------
    head_of_col = jnp.arange(HF) // F
    onehot = (head_of_col[:, None] == jnp.arange(H)[None, :]).astype(f32)  # [HF,H]
    mlr = jnp.concatenate(
        [onehot * jnp.reshape(attn_l, (HF, 1)).astype(f32),
         onehot * jnp.reshape(attn_r, (HF, 1)).astype(f32)], axis=1)       # [HF,2H]
    bias2d = jnp.reshape(bias, (1, HF)).astype(f32)

    feat_p = jnp.zeros((n_pad, Din), bf16).at[:N].set(feat.astype(bf16))
    w_bf = W.astype(bf16)

    # ---- stage 1: projection --------------------------------------------
    pm = max(tm_e, tk_e)
    z_p, e_p = pl.pallas_call(
        _gat_proj_kernel,
        out_shape=(jax.ShapeDtypeStruct((n_pad, HF), bf16),
                   jax.ShapeDtypeStruct((n_pad, 2 * H), f32)),
        grid_spec=pltpu.PrefetchScalarGridSpec(
            num_scalar_prefetch=0,
            grid=(n_pad // pm,),
            in_specs=[pl.BlockSpec((pm, Din), lambda i: (i, 0)),
                      pl.BlockSpec((Din, HF), lambda i: (0, 0)),
                      pl.BlockSpec((HF, 2 * H), lambda i: (0, 0))],
            out_specs=[pl.BlockSpec((pm, HF), lambda i: (i, 0)),
                       pl.BlockSpec((pm, 2 * H), lambda i: (i, 0))]),
        compiler_params=pltpu.CompilerParams(
            dimension_semantics=("parallel",)),
    )(feat_p, w_bf, mlr)

    # ---- separable softmax shift + augmented message layout (O(N*HF), tiny)
    el = e_p[:, :H]                                              # [n_pad, H]
    er = e_p[:, H:]                                              # [n_pad, H]
    el = jnp.where(jnp.arange(n_pad)[:, None] < N, el, PAD_NEG)  # kill pad src
    el_max = jnp.max(el[:N], axis=0, keepdims=True)              # [1, H]
    t = er + el_max
    m_d = jnp.maximum(t, NEG_SLOPE * t)          # m[v,h] >= every unmasked score
    el_t = jnp.transpose(el)                                     # [H, n_pad]

    ones = jnp.ones((n_pad, H, 1), bf16)                         # denominator col
    z_aug = jnp.concatenate([z_p.reshape(n_pad, H, F), ones],
                            axis=2).reshape(n_pad, H * Fa)       # [n_pad, H*(F+1)]

    # ---- stage 2: tiled edge softmax + aggregation -----------------------
    out = pl.pallas_call(
        partial(_gat_attn_kernel, num_heads=H, out_feats=F),
        out_shape=jax.ShapeDtypeStruct((n_pad, HF), f32),
        grid_spec=pltpu.PrefetchScalarGridSpec(
            num_scalar_prefetch=0,
            grid=(n_pad // tm_e, n_pad // tk_e),                  # (dst, src)
            in_specs=[pl.BlockSpec((tm_e, H), lambda i, j: (i, 0)),       # er
                      pl.BlockSpec((tm_e, H), lambda i, j: (i, 0)),       # m
                      pl.BlockSpec((H, tk_e), lambda i, j: (0, j)),       # el^T
                      pl.BlockSpec((tk_e, H * Fa), lambda i, j: (j, 0)),  # z_aug
                      pl.BlockSpec((tm_e, tk_e), lambda i, j: (i, j)),    # adj
                      pl.BlockSpec((1, HF), lambda i, j: (0, 0))],        # bias
            out_specs=pl.BlockSpec((tm_e, HF), lambda i, j: (i, 0)),
            scratch_shapes=[pltpu.VMEM((tm_e, H * Fa), f32)]),
        compiler_params=pltpu.CompilerParams(
            dimension_semantics=("parallel", "arbitrary")),
    )(er, m_d, el_t, z_aug, adj_p, bias2d)

    return out[:N].reshape(N, H, F)


# --------------------------------------------------------------------------
# Pure-JAX reference mirroring the PyTorch forward
# --------------------------------------------------------------------------
def gat_conv_ref(feat, W, attn_l, attn_r, adj, bias):
    H, F = attn_l.shape
    z = feat @ W                                           # [N, H*F]
    zhf = z.reshape(-1, H, F)                              # [N, H, F]
    el = (zhf * attn_l[None]).sum(-1)                      # [N, H]
    er = (zhf * attn_r[None]).sum(-1)                      # [N, H]
    e = el[None, :, :] + er[:, None, :]                    # [Ndst, Nsrc, H]
    e = jnp.where(e >= 0, e, NEG_SLOPE * e)
    mask = adj[:, :, None] > 0
    e = jnp.where(mask, e, -jnp.inf)
    a = jax.nn.softmax(e, axis=1)
    a = jnp.where(mask, a, 0.0)
    rst = jnp.einsum('vuh,uhf->vhf', a, zhf)
    return rst + bias.reshape(1, H, F)


if __name__ == "__main__":
    # Small deterministic problem that still exercises the 2x2 tiled grid.
    N, IN_FEATS, OUT_FEATS, HEADS = 256, 32, 8, 4
    key = jax.random.PRNGKey(0)
    k_feat, k_w, k_al, k_ar, k_adj = jax.random.split(key, 5)

    gain = float(np.sqrt(2.0))  # nn.init.calculate_gain('relu')

    feat = jax.random.normal(k_feat, (N, IN_FEATS), jnp.float32)

    # fc: Linear(in_feats, out_feats*heads, bias=False), xavier-normal init.
    std_w = gain * np.sqrt(2.0 / (IN_FEATS + OUT_FEATS * HEADS))
    W = std_w * jax.random.normal(k_w, (IN_FEATS, OUT_FEATS * HEADS), jnp.float32)

    # attn_l / attn_r: (1, heads, out_feats) -> stored as (heads, out_feats).
    std_a = gain * np.sqrt(2.0 / (HEADS + OUT_FEATS))
    attn_l = std_a * jax.random.normal(k_al, (HEADS, OUT_FEATS), jnp.float32)
    attn_r = std_a * jax.random.normal(k_ar, (HEADS, OUT_FEATS), jnp.float32)

    # bias: (heads*out_feats,), zero-initialized (matches reset_parameters).
    bias = jnp.zeros((HEADS * OUT_FEATS,), jnp.float32)
    # TODO(synk): residual branch (residual=False by default) and dropout
    # (p=0.0 by default) are identity at inference and are not materialized.

    # Random graph + self-loops so every node has in-degree >= 1
    # (the module raises on zero-in-degree graphs by default).
    adj = jax.random.bernoulli(k_adj, 0.1, (N, N)).astype(jnp.float32)
    adj = jnp.maximum(adj, jnp.eye(N, dtype=jnp.float32))

    # One-time per-graph prep (int8 cast + 128-alignment), kept OUT of the
    # per-call path so the O(N^2) mask is not re-materialized on every call.
    adj_i8 = prepare_gat_adjacency(adj)

    # tm=256/tk=128: the tile planner yields a 2x2 grid here, exercising both
    # the >=2-dst-tile (megacore) split and multi-src-tile accumulation.
    gat_fn = jax.jit(partial(gat_conv_pallas, tm=256, tk=128))
    out = jax.block_until_ready(gat_fn(feat, W, attn_l, attn_r, adj_i8, bias))

    ref = gat_conv_ref(feat, W, attn_l, attn_r, adj, bias)
    # bf16 feat/W/z/p streaming (f32 accumulation) + approx reciprocal ->
    # ~1e-2-level relative error vs the f32 reference.
    np.testing.assert_allclose(np.asarray(out), np.asarray(ref),
                               rtol=3e-2, atol=3e-2)
    print("KERNEL_OK")
</pallas_src>

<mosaic_0001>
module attributes {stable_mosaic.version = 11 : i64} {
  func.func @_gat_proj_kernel(%arg0: i32, %arg1: memref<128x32xbf16, #tpu.memory_space<vmem>>, %arg2: memref<32x32xbf16, #tpu.memory_space<vmem>>, %arg3: memref<32x8xf32, #tpu.memory_space<vmem>>, %arg4: memref<128x32xbf16, #tpu.memory_space<vmem>>, %arg5: memref<128x8xf32, #tpu.memory_space<vmem>>) attributes {dimension_semantics = [#tpu.dimension_semantics<parallel>], iteration_bounds = array<i64: 2>, scalar_prefetch = 0 : i64, scratch_operands = 0 : i64, tpu.core_type = #tpu.core_type<tc>, window_params = [{transform_indices = @transform_0, window_bounds = array<i64: 128, 32>}, {pipeline_mode = #tpu.pipeline_mode<synchronous>, transform_indices = @transform_1, window_bounds = array<i64: 32, 32>}, {pipeline_mode = #tpu.pipeline_mode<synchronous>, transform_indices = @transform_2, window_bounds = array<i64: 32, 8>}, {transform_indices = @transform_3, window_bounds = array<i64: 128, 32>}, {transform_indices = @transform_4, window_bounds = array<i64: 128, 8>}]} {
    %c0 = arith.constant 0 : index
    %c0_0 = arith.constant 0 : index
    %0 = vector.load %arg1[%c0, %c0_0] : memref<128x32xbf16, #tpu.memory_space<vmem>>, vector<128x32xbf16>
    %c0_1 = arith.constant 0 : index
    %c0_2 = arith.constant 0 : index
    %1 = vector.load %arg2[%c0_1, %c0_2] : memref<32x32xbf16, #tpu.memory_space<vmem>>, vector<32x32xbf16>
    %cst = arith.constant dense<0.000000e+00> : vector<128x32xf32>
    %2 = tpu.matmul %0, %1, %cst {dimension_numbers = #tpu.dot_dimension_numbers<[1], [0], [0], [1], [0, 0, 1, 1], [], []>} : vector<128x32xbf16>, vector<32x32xbf16>, vector<128x32xf32> -> vector<128x32xf32>
    %c0_3 = arith.constant 0 : index
    %c0_4 = arith.constant 0 : index
    %3 = vector.load %arg3[%c0_3, %c0_4] : memref<32x8xf32, #tpu.memory_space<vmem>>, vector<32x8xf32>
    %cst_5 = arith.constant dense<0.000000e+00> : vector<128x8xf32>
    %4 = tpu.matmul %2, %3, %cst_5 {dimension_numbers = #tpu.dot_dimension_numbers<[1], [0], [0], [1], [0, 0, 1, 1], [], []>} : vector<128x32xf32>, vector<32x8xf32>, vector<128x8xf32> -> vector<128x8xf32>
    %c0_6 = arith.constant 0 : index
    %c0_7 = arith.constant 0 : index
    %5 = vector.load %arg5[%c0_6, %c0_7] : memref<128x8xf32, #tpu.memory_space<vmem>>, vector<128x8xf32>
    tpu.vector_store %arg5[%c0_6, %c0_7], %4 {strides = array<i32>} : memref<128x8xf32, #tpu.memory_space<vmem>>, vector<128x8xf32>,
    %6 = arith.truncf %2 : vector<128x32xf32> to vector<128x32xbf16>
    %c0_8 = arith.constant 0 : index
    %c0_9 = arith.constant 0 : index
    %7 = vector.load %arg4[%c0_8, %c0_9] : memref<128x32xbf16, #tpu.memory_space<vmem>>, vector<128x32xbf16>
    tpu.vector_store %arg4[%c0_8, %c0_9], %6 {strides = array<i32>} : memref<128x32xbf16, #tpu.memory_space<vmem>>, vector<128x32xbf16>,
    return
  }
  func.func @transform_0(%arg0: i32) -> (i32, i32) {
    %c0_i32 = arith.constant 0 : i32
    %c0_i32_0 = arith.constant 0 : i32
    return %arg0, %c0_i32 : i32, i32
  }
  func.func @transform_1(%arg0: i32) -> (i32, i32) {
    %c0_i32 = arith.constant 0 : i32
    %c0_i32_0 = arith.constant 0 : i32
    %c0_i32_1 = arith.constant 0 : i32
    return %c0_i32, %c0_i32_0 : i32, i32
  }
  func.func @transform_2(%arg0: i32) -> (i32, i32) {
    %c0_i32 = arith.constant 0 : i32
    %c0_i32_0 = arith.constant 0 : i32
    %c0_i32_1 = arith.constant 0 : i32
    return %c0_i32, %c0_i32_0 : i32, i32
  }
  func.func @transform_3(%arg0: i32) -> (i32, i32) {
    %c0_i32 = arith.constant 0 : i32
    %c0_i32_0 = arith.constant 0 : i32
    return %arg0, %c0_i32 : i32, i32
  }
  func.func @transform_4(%arg0: i32) -> (i32, i32) {
    %c0_i32 = arith.constant 0 : i32
    %c0_i32_0 = arith.constant 0 : i32
    return %arg0, %c0_i32 : i32, i32
  }
}

module attributes {stable_mosaic.version = 11 : i64} {
  func.func @_gat_attn_kernel(%arg0: i32, %arg1: i32, %arg2: memref<128x4xf32, #tpu.memory_space<vmem>>, %arg3: memref<128x4xf32, #tpu.memory_space<vmem>>, %arg4: memref<4x128xf32, #tpu.memory_space<vmem>>, %arg5: memref<128x36xbf16, #tpu.memory_space<vmem>>, %arg6: memref<128x128xi8, #tpu.memory_space<vmem>>, %arg7: memref<1x32xf32, #tpu.memory_space<vmem>>, %arg8: memref<128x32xf32, #tpu.memory_space<vmem>>, %arg9: memref<128x36xf32, #tpu.memory_space<vmem>>) attributes {dimension_semantics = [#tpu.dimension_semantics<parallel>, #tpu.dimension_semantics<arbitrary>], iteration_bounds = array<i64: 2, 2>, scalar_prefetch = 0 : i64, scratch_operands = 1 : i64, tpu.core_type = #tpu.core_type<tc>, window_params = [{transform_indices = @transform_0, window_bounds = array<i64: 128, 4>}, {transform_indices = @transform_1, window_bounds = array<i64: 128, 4>}, {transform_indices = @transform_2, window_bounds = array<i64: 4, 128>}, {transform_indices = @transform_3, window_bounds = array<i64: 128, 36>}, {transform_indices = @transform_4, window_bounds = array<i64: 128, 128>}, {pipeline_mode = #tpu.pipeline_mode<synchronous>, transform_indices = @transform_5, window_bounds = array<i64: 1, 32>}, {transform_indices = @transform_6, window_bounds = array<i64: 128, 32>}]} {
    %c0_i32 = arith.constant 0 : i32
    %0 = arith.cmpi eq, %arg1, %c0_i32 : i32
    %1 = arith.extui %0 : i1 to i32
    %c0_i32_0 = arith.constant 0 : i32
    %2 = arith.cmpi ne, %1, %c0_i32_0 : i32
    scf.if %2 {
      %cst_31 = arith.constant 0.000000e+00 : f32
      %88 = vector.broadcast %cst_31 : f32 to vector<128x36xf32>
      %c0_32 = arith.constant 0 : index
      %c0_33 = arith.constant 0 : index
      %89 = vector.load %arg9[%c0_32, %c0_33] : memref<128x36xf32, #tpu.memory_space<vmem>>, vector<128x36xf32>
      tpu.vector_store %arg9[%c0_32, %c0_33], %88 {strides = array<i32>} : memref<128x36xf32, #tpu.memory_space<vmem>>, vector<128x36xf32>,
    } else {
    }
    %c0 = arith.constant 0 : index
    %c0_1 = arith.constant 0 : index
    %3 = vector.load %arg2[%c0, %c0_1] : memref<128x4xf32, #tpu.memory_space<vmem>>, vector<128x4xf32>
    %c0_2 = arith.constant 0 : index
    %c0_3 = arith.constant 0 : index
    %4 = vector.load %arg3[%c0_2, %c0_3] : memref<128x4xf32, #tpu.memory_space<vmem>>, vector<128x4xf32>
    %c0_4 = arith.constant 0 : index
    %c0_5 = arith.constant 0 : index
    %5 = vector.load %arg4[%c0_4, %c0_5] : memref<4x128xf32, #tpu.memory_space<vmem>>, vector<4x128xf32>
    %c0_6 = arith.constant 0 : index
    %c0_7 = arith.constant 0 : index
    %6 = vector.load %arg6[%c0_6, %c0_7] : memref<128x128xi8, #tpu.memory_space<vmem>>, vector<128x128xi8>
    %7 = arith.sitofp %6 : vector<128x128xi8> to vector<128x128xf32>
    %c0_8 = arith.constant 0 : index
    %c0_9 = arith.constant 0 : index
    %8 = vector.load %arg5[%c0_8, %c0_9] : memref<128x36xbf16, #tpu.memory_space<vmem>>, vector<128x36xbf16>
    %9 = vector.extract_strided_slice %3 {offsets = [0, 0], sizes = [128, 1], strides = [1, 1]} : vector<128x4xf32> to vector<128x1xf32>
    %10 = vector.extract_strided_slice %5 {offsets = [0, 0], sizes = [1, 128], strides = [1, 1]} : vector<4x128xf32> to vector<1x128xf32>
    %11 = vector.broadcast %9 : vector<128x1xf32> to vector<128x128xf32>
    %12 = vector.broadcast %10 : vector<1x128xf32> to vector<128x128xf32>
    %13 = arith.addf %11, %12 : vector<128x128xf32>
    %cst = arith.constant 2.000000e-01 : f32
    %14 = vector.broadcast %cst : f32 to vector<128x128xf32>
    %15 = arith.mulf %14, %13 : vector<128x128xf32>
    %16 = arith.maximumf %13, %15 : vector<128x128xf32>
    %17 = vector.extract_strided_slice %4 {offsets = [0, 0], sizes = [128, 1], strides = [1, 1]} : vector<128x4xf32> to vector<128x1xf32>
    %18 = vector.broadcast %17 : vector<128x1xf32> to vector<128x128xf32>
    %19 = arith.subf %16, %18 : vector<128x128xf32>
    %20 = math.exp %19 : vector<128x128xf32>
    %21 = arith.mulf %20, %7 : vector<128x128xf32>
    %c0_10 = arith.constant 0 : index
    %c0_11 = arith.constant 0 : index
    %22 = vector.load %arg9[%c0_10, %c0_11] : memref<128x36xf32, #tpu.memory_space<vmem>>, vector<128x9xf32>
    %23 = arith.truncf %21 : vector<128x128xf32> to vector<128x128xbf16>
    %24 = vector.extract_strided_slice %8 {offsets = [0, 0], sizes = [128, 9], strides = [1, 1]} : vector<128x36xbf16> to vector<128x9xbf16>
    %cst_12 = arith.constant dense<0.000000e+00> : vector<128x9xf32>
    %25 = tpu.matmul %23, %24, %cst_12 {dimension_numbers = #tpu.dot_dimension_numbers<[1], [0], [0], [1], [0, 0, 1, 1], [], []>} : vector<128x128xbf16>, vector<128x9xbf16>, vector<128x9xf32> -> vector<128x9xf32>
    %26 = arith.addf %22, %25 : vector<128x9xf32>
    %c0_13 = arith.constant 0 : index
    %c0_14 = arith.constant 0 : index
    %27 = vector.load %arg9[%c0_13, %c0_14] : memref<128x36xf32, #tpu.memory_space<vmem>>, vector<128x9xf32>
    tpu.vector_store %arg9[%c0_13, %c0_14], %26 {strides = array<i32>} : memref<128x36xf32, #tpu.memory_space<vmem>>, vector<128x9xf32>,
    %28 = vector.extract_strided_slice %3 {offsets = [0, 1], sizes = [128, 1], strides = [1, 1]} : vector<128x4xf32> to vector<128x1xf32>
    %29 = vector.extract_strided_slice %5 {offsets = [1, 0], sizes = [1, 128], strides = [1, 1]} : vector<4x128xf32> to vector<1x128xf32>
    %30 = vector.broadcast %28 : vector<128x1xf32> to vector<128x128xf32>
    %31 = vector.broadcast %29 : vector<1x128xf32> to vector<128x128xf32>
    %32 = arith.addf %30, %31 : vector<128x128xf32>
    %cst_15 = arith.constant 2.000000e-01 : f32
    %33 = vector.broadcast %cst_15 : f32 to vector<128x128xf32>
    %34 = arith.mulf %33, %32 : vector<128x128xf32>
    %35 = arith.maximumf %32, %34 : vector<128x128xf32>
    %36 = vector.extract_strided_slice %4 {offsets = [0, 1], sizes = [128, 1], strides = [1, 1]} : vector<128x4xf32> to vector<128x1xf32>
    %37 = vector.broadcast %36 : vector<128x1xf32> to vector<128x128xf32>
    %38 = arith.subf %35, %37 : vector<128x128xf32>
    %39 = math.exp %38 : vector<128x128xf32>
    %40 = arith.mulf %39, %7 : vector<128x128xf32>
    %c0_16 = arith.constant 0 : index
    %c9 = arith.constant 9 : index
    %41 = vector.load %arg9[%c0_16, %c9] : memref<128x36xf32, #tpu.memory_space<vmem>>, vector<128x9xf32>
    %42 = arith.truncf %40 : vector<128x128xf32> to vector<128x128xbf16>
    %43 = vector.extract_strided_slice %8 {offsets = [0, 9], sizes = [128, 9], strides = [1, 1]} : vector<128x36xbf16> to vector<128x9xbf16>
    %cst_17 = arith.constant dense<0.000000e+00> : vector<128x9xf32>
    %44 = tpu.matmul %42, %43, %cst_17 {dimension_numbers = #tpu.dot_dimension_numbers<[1], [0], [0], [1], [0, 0, 1, 1], [], []>} : vector<128x128xbf16>, vector<128x9xbf16>, vector<128x9xf32> -> vector<128x9xf32>
    %45 = arith.addf %41, %44 : vector<128x9xf32>
    %c0_18 = arith.constant 0 : index
    %c9_19 = arith.constant 9 : index
    %46 = vector.load %arg9[%c0_18, %c9_19] : memref<128x36xf32, #tpu.memory_space<vmem>>, vector<128x9xf32>
    tpu.vector_store %arg9[%c0_18, %c9_19], %45 {strides = array<i32>} : memref<128x36xf32, #tpu.memory_space<vmem>>, vector<128x9xf32>,
    %47 = vector.extract_strided_slice %3 {offsets = [0, 2], sizes = [128, 1], strides = [1, 1]} : vector<128x4xf32> to vector<128x1xf32>
    %48 = vector.extract_strided_slice %5 {offsets = [2, 0], sizes = [1, 128], strides = [1, 1]} : vector<4x128xf32> to vector<1x128xf32>
    %49 = vector.broadcast %47 : vector<128x1xf32> to vector<128x128xf32>
    %50 = vector.broadcast %48 : vector<1x128xf32> to vector<128x128xf32>
    %51 = arith.addf %49, %50 : vector<128x128xf32>
    %cst_20 = arith.constant 2.000000e-01 : f32
    %52 = vector.broadcast %cst_20 : f32 to vector<128x128xf32>
    %53 = arith.mulf %52, %51 : vector<128x128xf32>
    %54 = arith.maximumf %51, %53 : vector<128x128xf32>
    %55 = vector.extract_strided_slice %4 {offsets = [0, 2], sizes = [128, 1], strides = [1, 1]} : vector<128x4xf32> to vector<128x1xf32>
    %56 = vector.broadcast %55 : vector<128x1xf32> to vector<128x128xf32>
    %57 = arith.subf %54, %56 : vector<128x128xf32>
    %58 = math.exp %57 : vector<128x128xf32>
    %59 = arith.mulf %58, %7 : vector<128x128xf32>
    %c0_21 = arith.constant 0 : index
    %c18 = arith.constant 18 : index
    %60 = vector.load %arg9[%c0_21, %c18] : memref<128x36xf32, #tpu.memory_space<vmem>>, vector<128x9xf32>
    %61 = arith.truncf %59 : vector<128x128xf32> to vector<128x128xbf16>
    %62 = vector.extract_strided_slice %8 {offsets = [0, 18], sizes = [128, 9], strides = [1, 1]} : vector<128x36xbf16> to vector<128x9xbf16>
    %cst_22 = arith.constant dense<0.000000e+00> : vector<128x9xf32>
    %63 = tpu.matmul %61, %62, %cst_22 {dimension_numbers = #tpu.dot_dimension_numbers<[1], [0], [0], [1], [0, 0, 1, 1], [], []>} : vector<128x128xbf16>, vector<128x9xbf16>, vector<128x9xf32> -> vector<128x9xf32>
    %64 = arith.addf %60, %63 : vector<128x9xf32>
    %c0_23 = arith.constant 0 : index
    %c18_24 = arith.constant 18 : index
    %65 = vector.load %arg9[%c0_23, %c18_24] : memref<128x36xf32, #tpu.memory_space<vmem>>, vector<128x9xf32>
    tpu.vector_store %arg9[%c0_23, %c18_24], %64 {strides = array<i32>} : memref<128x36xf32, #tpu.memory_space<vmem>>, vector<128x9xf32>,
    %66 = vector.extract_strided_slice %3 {offsets = [0, 3], sizes = [128, 1], strides = [1, 1]} : vector<128x4xf32> to vector<128x1xf32>
    %67 = vector.extract_strided_slice %5 {offsets = [3, 0], sizes = [1, 128], strides = [1, 1]} : vector<4x128xf32> to vector<1x128xf32>
    %68 = vector.broadcast %66 : vector<128x1xf32> to vector<128x128xf32>
    %69 = vector.broadcast %67 : vector<1x128xf32> to vector<128x128xf32>
    %70 = arith.addf %68, %69 : vector<128x128xf32>
    %cst_25 = arith.constant 2.000000e-01 : f32
    %71 = vector.broadcast %cst_25 : f32 to vector<128x128xf32>
    %72 = arith.mulf %71, %70 : vector<128x128xf32>
    %73 = arith.maximumf %70, %72 : vector<128x128xf32>
    %74 = vector.extract_strided_slice %4 {offsets = [0, 3], sizes = [128, 1], strides = [1, 1]} : vector<128x4xf32> to vector<128x1xf32>
    %75 = vector.broadcast %74 : vector<128x1xf32> to vector<128x128xf32>
    %76 = arith.subf %73, %75 : vector<128x128xf32>
    %77 = math.exp %76 : vector<128x128xf32>
    %78 = arith.mulf %77, %7 : vector<128x128xf32>
    %c0_26 = arith.constant 0 : index
    %c27 = arith.constant 27 : index
    %79 = vector.load %arg9[%c0_26, %c27] : memref<128x36xf32, #tpu.memory_space<vmem>>, vector<128x9xf32>
    %80 = arith.truncf %78 : vector<128x128xf32> to vector<128x128xbf16>
    %81 = vector.extract_strided_slice %8 {offsets = [0, 27], sizes = [128, 9], strides = [1, 1]} : vector<128x36xbf16> to vector<128x9xbf16>
    %cst_27 = arith.constant dense<0.000000e+00> : vector<128x9xf32>
    %82 = tpu.matmul %80, %81, %cst_27 {dimension_numbers = #tpu.dot_dimension_numbers<[1], [0], [0], [1], [0, 0, 1, 1], [], []>} : vector<128x128xbf16>, vector<128x9xbf16>, vector<128x9xf32> -> vector<128x9xf32>
    %83 = arith.addf %79, %82 : vector<128x9xf32>
    %c0_28 = arith.constant 0 : index
    %c27_29 = arith.constant 27 : index
    %84 = vector.load %arg9[%c0_28, %c27_29] : memref<128x36xf32, #tpu.memory_space<vmem>>, vector<128x9xf32>
    tpu.vector_store %arg9[%c0_28, %c27_29], %83 {strides = array<i32>} : memref<128x36xf32, #tpu.memory_space<vmem>>, vector<128x9xf32>,
    %c1_i32 = arith.constant 1 : i32
    %85 = arith.cmpi eq, %arg1, %c1_i32 : i32
    %86 = arith.extui %85 : i1 to i32
    %c0_i32_30 = arith.constant 0 : i32
    %87 = arith.cmpi ne, %86, %c0_i32_30 : i32
    scf.if %87 {
      %c0_31 = arith.constant 0 : index
      %c0_32 = arith.constant 0 : index
      %88 = vector.load %arg9[%c0_31, %c0_32] : memref<128x36xf32, #tpu.memory_space<vmem>>, vector<128x8xf32>
      %c0_33 = arith.constant 0 : index
      %c8 = arith.constant 8 : index
      %89 = vector.load %arg9[%c0_33, %c8] : memref<128x36xf32, #tpu.memory_space<vmem>>, vector<128x1xf32>
      %90 = tpu.reciprocal %89 {approx = true} : vector<128x1xf32> -> vector<128x1xf32>
      %91 = vector.broadcast %90 : vector<128x1xf32> to vector<128x8xf32>
      %92 = arith.mulf %88, %91 : vector<128x8xf32>
      %c0_34 = arith.constant 0 : index
      %c0_35 = arith.constant 0 : index
      %93 = vector.load %arg7[%c0_34, %c0_35] : memref<1x32xf32, #tpu.memory_space<vmem>>, vector<1x8xf32>
      %94 = vector.broadcast %93 : vector<1x8xf32> to vector<128x8xf32>
      %95 = arith.addf %92, %94 : vector<128x8xf32>
      %c0_36 = arith.constant 0 : index
      %c0_37 = arith.constant 0 : index
      %96 = vector.load %arg8[%c0_36, %c0_37] : memref<128x32xf32, #tpu.memory_space<vmem>>, vector<128x8xf32>
      tpu.vector_store %arg8[%c0_36, %c0_37], %95 {strides = array<i32>} : memref<128x32xf32, #tpu.memory_space<vmem>>, vector<128x8xf32>,
      %c0_38 = arith.constant 0 : index
      %c9_39 = arith.constant 9 : index
      %97 = vector.load %arg9[%c0_38, %c9_39] : memref<128x36xf32, #tpu.memory_space<vmem>>, vector<128x8xf32>
      %c0_40 = arith.constant 0 : index
      %c17 = arith.constant 17 : index
      %98 = vector.load %arg9[%c0_40, %c17] : memref<128x36xf32, #tpu.memory_space<vmem>>, vector<128x1xf32>
      %99 = tpu.reciprocal %98 {approx = true} : vector<128x1xf32> -> vector<128x1xf32>
      %100 = vector.broadcast %99 : vector<128x1xf32> to vector<128x8xf32>
      %101 = arith.mulf %97, %100 : vector<128x8xf32>
      %c0_41 = arith.constant 0 : index
      %c8_42 = arith.constant 8 : index
      %102 = vector.load %arg7[%c0_41, %c8_42] : memref<1x32xf32, #tpu.memory_space<vmem>>, vector<1x8xf32>
      %103 = vector.broadcast %102 : vector<1x8xf32> to vector<128x8xf32>
      %104 = arith.addf %101, %103 : vector<128x8xf32>
      %c0_43 = arith.constant 0 : index
      %c8_44 = arith.constant 8 : index
      %105 = vector.load %arg8[%c0_43, %c8_44] : memref<128x32xf32, #tpu.memory_space<vmem>>, vector<128x8xf32>
      tpu.vector_store %arg8[%c0_43, %c8_44], %104 {strides = array<i32>} : memref<128x32xf32, #tpu.memory_space<vmem>>, vector<128x8xf32>,
      %c0_45 = arith.constant 0 : index
      %c18_46 = arith.constant 18 : index
      %106 = vector.load %arg9[%c0_45, %c18_46] : memref<128x36xf32, #tpu.memory_space<vmem>>, vector<128x8xf32>
      %c0_47 = arith.constant 0 : index
      %c26 = arith.constant 26 : index
      %107 = vector.load %arg9[%c0_47, %c26] : memref<128x36xf32, #tpu.memory_space<vmem>>, vector<128x1xf32>
      %108 = tpu.reciprocal %107 {approx = true} : vector<128x1xf32> -> vector<128x1xf32>
      %109 = vector.broadcast %108 : vector<128x1xf32> to vector<128x8xf32>
      %110 = arith.mulf %106, %109 : vector<128x8xf32>
      %c0_48 = arith.constant 0 : index
      %c16 = arith.constant 16 : index
      %111 = vector.load %arg7[%c0_48, %c16] : memref<1x32xf32, #tpu.memory_space<vmem>>, vector<1x8xf32>
      %112 = vector.broadcast %111 : vector<1x8xf32> to vector<128x8xf32>
      %113 = arith.addf %110, %112 : vector<128x8xf32>
      %c0_49 = arith.constant 0 : index
      %c16_50 = arith.constant 16 : index
      %114 = vector.load %arg8[%c0_49, %c16_50] : memref<128x32xf32, #tpu.memory_space<vmem>>, vector<128x8xf32>
      tpu.vector_store %arg8[%c0_49, %c16_50], %113 {strides = array<i32>} : memref<128x32xf32, #tpu.memory_space<vmem>>, vector<128x8xf32>,
      %c0_51 = arith.constant 0 : index
      %c27_52 = arith.constant 27 : index
      %115 = vector.load %arg9[%c0_51, %c27_52] : memref<128x36xf32, #tpu.memory_space<vmem>>, vector<128x8xf32>
      %c0_53 = arith.constant 0 : index
      %c35 = arith.constant 35 : index
      %116 = vector.load %arg9[%c0_53, %c35] : memref<128x36xf32, #tpu.memory_space<vmem>>, vector<128x1xf32>
      %117 = tpu.reciprocal %116 {approx = true} : vector<128x1xf32> -> vector<128x1xf32>
      %118 = vector.broadcast %117 : vector<128x1xf32> to vector<128x8xf32>
      %119 = arith.mulf %115, %118 : vector<128x8xf32>
      %c0_54 = arith.constant 0 : index
      %c24 = arith.constant 24 : index
      %120 = vector.load %arg7[%c0_54, %c24] : memref<1x32xf32, #tpu.memory_space<vmem>>, vector<1x8xf32>
      %121 = vector.broadcast %120 : vector<1x8xf32> to vector<128x8xf32>
      %122 = arith.addf %119, %121 : vector<128x8xf32>
      %c0_55 = arith.constant 0 : index
      %c24_56 = arith.constant 24 : index
      %123 = vector.load %arg8[%c0_55, %c24_56] : memref<128x32xf32, #tpu.memory_space<vmem>>, vector<128x8xf32>
      tpu.vector_store %arg8[%c0_55, %c24_56], %122 {strides = array<i32>} : memref<128x32xf32, #tpu.memory_space<vmem>>, vector<128x8xf32>,
    } else {
    }
    return
  }
  func.func @transform_0(%arg0: i32, %arg1: i32) -> (i32, i32) {
    %c0_i32 = arith.constant 0 : i32
    %c0_i32_0 = arith.constant 0 : i32
    return %arg0, %c0_i32 : i32, i32
  }
  func.func @transform_1(%arg0: i32, %arg1: i32) -> (i32, i32) {
    %c0_i32 = arith.constant 0 : i32
    %c0_i32_0 = arith.constant 0 : i32
    return %arg0, %c0_i32 : i32, i32
  }
  func.func @transform_2(%arg0: i32, %arg1: i32) -> (i32, i32) {
    %c0_i32 = arith.constant 0 : i32
    %c0_i32_0 = arith.constant 0 : i32
    return %c0_i32, %arg1 : i32, i32
  }
  func.func @transform_3(%arg0: i32, %arg1: i32) -> (i32, i32) {
    %c0_i32 = arith.constant 0 : i32
    %c0_i32_0 = arith.constant 0 : i32
    return %arg1, %c0_i32 : i32, i32
  }
  func.func @transform_4(%arg0: i32, %arg1: i32) -> (i32, i32) {
    %c0_i32 = arith.constant 0 : i32
    return %arg0, %arg1 : i32, i32
  }
  func.func @transform_5(%arg0: i32, %arg1: i32) -> (i32, i32) {
    %c0_i32 = arith.constant 0 : i32
    %c0_i32_0 = arith.constant 0 : i32
    %c0_i32_1 = arith.constant 0 : i32
    return %c0_i32, %c0_i32_0 : i32, i32
  }
  func.func @transform_6(%arg0: i32, %arg1: i32) -> (i32, i32) {
    %c0_i32 = arith.constant 0 : i32
    %c0_i32_0 = arith.constant 0 : i32
    return %arg0, %c0_i32 : i32, i32
  }
}

</mosaic_0001>

<llo_original>
// kernel: mul.12
$region0: #{mul.12}
  %s0 = inlined_call_operand.vmem [shape: f32[4,8], index: 0, kind: input, shape index: {}]
  %s1 = inlined_call_operand.vmem [shape: f32[32], index: 1, kind: output, shape index: {}]
  $region1: #{mul.12} parent=0
    #allocation0 [shape = 'u8[4096]{0}', space=vmem, size = 0x1000, scoped, tag = 'scoped mem for output reshape']
    #allocation1 [shape = 'u8[4096]{0}', space=vmem, size = 0x1000, scoped, tag = 'scoped mem for input reshape']
    %s3 = sshll.u32 1, 4
    %s4 = ssub.s32 %s3, 1
    %v5 = vld [vmem:[%s0] sm:%s4]
    %6 = vst [vmem:[#allocation1] sm:%s4] %v5
    %v7 = vld [vmem:[#allocation1] sm:$0x1]
    %vm8 = vcmask 64512
    %9 = vst.msk [vmem:[#allocation0] sm:$0x1] %vm8, %v7
    %s10 = scalar_lea.vmem [#allocation1], 3
    %v11 = vld [vmem:[%s10] sm:$0x1]
    %12 = vrot.lane.b32.xlu0 %v11, 24
    %v13 = vpop.permute.xlu0 %12
    %vm14 = vcmask 261312
    %15 = vst.msk [vmem:[#allocation0] sm:$0x1] %vm14, %v13
    %s16 = scalar_lea.vmem [#allocation1], 2
    %v17 = vld [vmem:[%s16] sm:$0x1]
    %18 = vrot.lane.b32.xlu0 %v17, 16
    %v19 = vpop.permute.xlu0 %18
    %vm20 = vcmask 195712
    %21 = vst.msk [vmem:[#allocation0] sm:$0x1] %vm20, %v19
    %s22 = scalar_lea.vmem [#allocation1], 1
    %v23 = vld [vmem:[%s22] sm:$0x1]
    %24 = vrot.lane.b32.xlu0 %v23, 8
    %v25 = vpop.permute.xlu0 %24
    %vm26 = vcmask 130112
    %27 = vst.msk [vmem:[#allocation0] sm:$0x1] %vm26, %v25
    %s29 = sshll.u32 1, 1
    %s30 = ssub.s32 %s29, 1
    %v32 = vld [vmem:[#allocation0] sm:%s30]
    %s33 = sshll.u32 1, 1
    %s34 = ssub.s32 %s33, 1
    %35 = vst [vmem:[%s1] sm:%s34] %v32

// kernel: gat_conv_pallas.2
$region0: #{gat_conv_pallas.2}
  #allocation0 [shape = 'u32[]', space=smem, size = 0x4, offset = 0x4, fixed_abs, tag = 'smem constant byte address 0x4 - core index']
  #allocation1 [shape = 'u32[144,128]{1,0:T(1,128)}', space=vmem, size = 0x12000, scoped, tag = 'internal scratch']
  %s0 = inlined_call_operand.vmem [shape: bf16[256,32], index: 0, kind: input, shape index: {}]
  %s1 = inlined_call_operand.vmem [shape: bf16[32,32], index: 1, kind: input, shape index: {}]
  %s2 = inlined_call_operand.vmem [shape: f32[32,8], index: 2, kind: input, shape index: {}]
  %s3 = inlined_call_operand.vmem [shape: bf16[256,32], index: 3, kind: output, shape index: {0}]
  %s4 = inlined_call_operand.vmem [shape: f32[256,8], index: 4, kind: output, shape index: {1}]
  %5 = xla_tuple %s3, %s4
  %s6 = sld [smem:[#allocation0]]
  $region53: #{gat_conv_pallas.2} parent=0
    _
  %s8 = ssub.s32 1, %s6
  %s9 = scalar_select 0, %s8, %s6
  loop: start=0, step=1, limit=4
  $region2: #{gat_conv_pallas.2} parent=0 // loop_pre_header
    _
  $region3: #{gat_conv_pallas.2} parent=0 // loop_header
    %s11 = sphi 0, %s15
    %p12 = scmp.ge.s32.totalorder %s11, 4
    %s21 = sphi 0, %s23
    %s24 = sphi 0, %s21
    %s25 = sphi 0, %s24
    %s41 = sphi 0, %s25
    %s45 = sphi 0, %s45
    %s47 = sphi 0, %s45
    %s48 = sphi 0, %s47
    %s62 = sphi 0, %s48
    %s66 = sphi 0, %s66
    %s68 = sphi 0, %s66
    %s69 = sphi 0, %s68
    %s83 = sphi 0, %s69
    %s89 = sphi 0, %s91
    %s92 = sphi 0, %s89
    %s93 = sphi 0, %s92
    %s109 = sphi 0, %s93
    %s115 = sphi 0, %s117
    %s118 = sphi 0, %s115
    %s119 = sphi 0, %s118
    %s135 = sphi 0, %s119
  $region4: #{gat_conv_pallas.2} parent=0 // loop_header_branch
    %14 = sbr.rel (%p12) target = $region8
  $region5: #{gat_conv_pallas.2} parent=0 // loop_body
    %s16 = ssub.s32 %s11, 1
    %s17 = ssub.s32 %s11, 2
    %s18 = sadd.s32 %s11, 1
    %s19 = ssub.s32 %s11, %s18
    %p20 = scmp.eq.s32.totalorder %s19, 0
    %s22 = sadd.s32 %s21, 1
    %s23 = scalar_select %p20, %s21, %s22
    %p26 = pneg %p20
    %p27 = scmp.eq.s32.totalorder %s11, 1
    %p28 = por %p26, %p27
    %p29 = scmp.ne.s32.totalorder %s21, %s24
    %p30 = scmp.eq.s32.totalorder %s11, 0
    %p31 = por %p29, %p30
    %p32 = scmp.ne.s32.totalorder %s21, %s24
    %p33 = scmp.eq.s32.totalorder %s16, 1
    %p34 = por %p32, %p33
    %p35 = scmp.ne.s32.totalorder %s24, %s25
    %p36 = scmp.eq.s32.totalorder %s16, 0
    %p37 = por %p35, %p36
    %p38 = scmp.ne.s32.totalorder %s24, %s25
    %p39 = scmp.eq.s32.totalorder %s17, 1
    %p40 = por %p38, %p39
    %p42 = scmp.ne.s32.totalorder %s25, %s41
    %p43 = scmp.eq.s32.totalorder %s17, 0
    %p44 = por %p42, %p43
    %s46 = sadd.s32 %s45, 1
    %p49 = scmp.eq.s32.totalorder %s11, 1
    %p50 = scmp.ne.s32.totalorder %s45, %s47
    %p51 = scmp.eq.s32.totalorder %s11, 0
    %p52 = por %p50, %p51
    %p53 = scmp.ne.s32.totalorder %s45, %s47
    %p54 = scmp.eq.s32.totalorder %s16, 1
    %p55 = por %p53, %p54
    %p56 = scmp.ne.s32.totalorder %s47, %s48
    %p57 = scmp.eq.s32.totalorder %s16, 0
    %p58 = por %p56, %p57
    %p59 = scmp.ne.s32.totalorder %s47, %s48
    %p60 = scmp.eq.s32.totalorder %s17, 1
    %p61 = por %p59, %p60
    %p63 = scmp.ne.s32.totalorder %s48, %s62
    %p64 = scmp.eq.s32.totalorder %s17, 0
    %p65 = por %p63, %p64
    %s67 = sadd.s32 %s66, 1
    %p70 = scmp.eq.s32.totalorder %s11, 1
    %p71 = scmp.ne.s32.totalorder %s66, %s68
    %p72 = scmp.eq.s32.totalorder %s11, 0
    %p73 = por %p71, %p72
    %p74 = scmp.ne.s32.totalorder %s66, %s68
    %p75 = scmp.eq.s32.totalorder %s16, 1
    %p76 = por %p74, %p75
    %p77 = scmp.ne.s32.totalorder %s68, %s69
    %p78 = scmp.eq.s32.totalorder %s16, 0
    %p79 = por %p77, %p78
    %p80 = scmp.ne.s32.totalorder %s68, %s69
    %p81 = scmp.eq.s32.totalorder %s17, 1
    %p82 = por %p80, %p81
    %p84 = scmp.ne.s32.totalorder %s69, %s83
    %p85 = scmp.eq.s32.totalorder %s17, 0
    %p86 = por %p84, %p85
    %s87 = ssub.s32 %s11, %s18
    %p88 = scmp.eq.s32.totalorder %s87, 0
    %s90 = sadd.s32 %s89, 1
    %s91 = scalar_select %p88, %s89, %s90
    %p94 = pneg %p88
    %p95 = scmp.eq.s32.totalorder %s11, 1
    %p96 = por %p94, %p95
    %p97 = scmp.ne.s32.totalorder %s89, %s92
    %p98 = scmp.eq.s32.totalorder %s11, 0
    %p99 = por %p97, %p98
    %p100 = scmp.ne.s32.totalorder %s89, %s92
    %p101 = scmp.eq.s32.totalorder %s16, 1
    %p102 = por %p100, %p101
    %p103 = scmp.ne.s32.totalorder %s92, %s93
    %p104 = scmp.eq.s32.totalorder %s16, 0
    %p105 = por %p103, %p104
    %p106 = scmp.ne.s32.totalorder %s92, %s93
    %p107 = scmp.eq.s32.totalorder %s17, 1
    %p108 = por %p106, %p107
    %p110 = scmp.ne.s32.totalorder %s93, %s109
    %p111 = scmp.eq.s32.totalorder %s17, 0
    %p112 = por %p110, %p111
    %s113 = ssub.s32 %s11, %s18
    %p114 = scmp.eq.s32.totalorder %s113, 0
    %s116 = sadd.s32 %s115, 1
    %s117 = scalar_select %p114, %s115, %s116
    %p120 = pneg %p114
    %p121 = scmp.eq.s32.totalorder %s11, 1
    %p122 = por %p120, %p121
    %p123 = scmp.ne.s32.totalorder %s115, %s118
    %p124 = scmp.eq.s32.totalorder %s11, 0
    %p125 = por %p123, %p124
    %p126 = scmp.ne.s32.totalorder %s115, %s118
    %p127 = scmp.eq.s32.totalorder %s16, 1
    %p128 = por %p126, %p127
    %p129 = scmp.ne.s32.totalorder %s118, %s119
    %p130 = scmp.eq.s32.totalorder %s16, 0
    %p131 = por %p129, %p130
    %p132 = scmp.ne.s32.totalorder %s118, %s119
    %p133 = scmp.eq.s32.totalorder %s17, 1
    %p134 = por %p132, %p133
    %p136 = scmp.ne.s32.totalorder %s119, %s135
    %p137 = scmp.eq.s32.totalorder %s17, 0
    %p138 = por %p136, %p137
    %p139 = scmp.le.s32.totalorder 1, %s11
    %p140 = scmp.lt.s32.totalorder %s11, 3
    %p141 = pnand %p139, %p140
    %p142 = pneg %p141
    // Predicated region
    $region9: #{gat_conv_pallas.2} parent=5 // pred_check
      _
    $region10: #{gat_conv_pallas.2} parent=5 // pred_check_branch
      %144 = sbr.rel (%p141) target = $region12
    $region11: #{gat_conv_pallas.2} parent=5 // pred_region
      %s145 = ssub.s32 %s11, 1
      // Predicated region
      $region13: #{gat_conv_pallas.2} parent=11 // pred_check
        %p146 = pneg %p58
      $region14: #{gat_conv_pallas.2} parent=11 // pred_check_branch
        %148 = sbr.rel (%p146) target = $region16
      $region15: #{gat_conv_pallas.2} parent=11 // pred_region
        _
      $region16: #{gat_conv_pallas.2} parent=11 // pred_fallthru
        _
      // Predicated region
      $region17: #{gat_conv_pallas.2} parent=11 // pred_check
        %p149 = pneg %p79
      $region18: #{gat_conv_pallas.2} parent=11 // pred_check_branch
        %151 = sbr.rel (%p149) target = $region20
      $region19: #{gat_conv_pallas.2} parent=11 // pred_region
        _
      $region20: #{gat_conv_pallas.2} parent=11 // pred_fallthru
        _
    $region12: #{gat_conv_pallas.2} parent=5 // pred_fallthru
      _
    %p152 = scmp.lt.s32.totalorder %s11, 2
    // Predicated region
    $region21: #{gat_conv_pallas.2} parent=5 // pred_check
      %p153 = pneg %p152
    $region22: #{gat_conv_pallas.2} parent=5 // pred_check_branch
      %155 = sbr.rel (%p153) target = $region24
    $region23: #{gat_conv_pallas.2} parent=5 // pred_region
      // Predicated region
      $region25: #{gat_conv_pallas.2} parent=23 // pred_check
        %p156 = pneg %p31
      $region26: #{gat_conv_pallas.2} parent=23 // pred_check_branch
        %158 = sbr.rel (%p156) target = $region28
      $region27: #{gat_conv_pallas.2} parent=23 // pred_region
        %s159 = smul.u32 16, %s11
        %p160 = scmp.lt.s32.totalorder %s159, 31
        %s161 = scalar_select %p160, %s159, 31
        %s162 = smul.addr %s161, 4
        %s163 = scalar_lea.vmem %s0, %s162
        %s164 = smul.u32 16, %s11
      $region28: #{gat_conv_pallas.2} parent=23 // pred_fallthru
        _
    $region24: #{gat_conv_pallas.2} parent=5 // pred_fallthru
      _
    %p165 = scmp.le.s32.totalorder 1, %s11
    %p166 = scmp.lt.s32.totalorder %s11, 3
    %p167 = pnand %p165, %p166
    %p168 = pneg %p167
    // Predicated region
    $region29: #{gat_conv_pallas.2} parent=5 // pred_check
      _
    $region30: #{gat_conv_pallas.2} parent=5 // pred_check_branch
      %170 = sbr.rel (%p167) target = $region32
    $region31: #{gat_conv_pallas.2} parent=5 // pred_region
      %s171 = ssub.s32 %s11, 1
      %s172 = smul.u32 16, %s16
      %p173 = scmp.lt.s32.totalorder %s172, 31
      %s174 = scalar_select %p173, %s172, 31
      %s175 = smul.addr %s174, 4
      %s176 = scalar_lea.vmem %s0, %s175
      %p177 = pneg %p37
      %p178 = pneg %p34
      %p179 = pneg %p58
      %p180 = pneg %p55
      %p181 = pneg %p79
      %p182 = pneg %p76
      %p183 = pneg %p105
      %p184 = pneg %p102
      %s185 = smul.u32 16, %s16
      %p186 = scmp.lt.s32.totalorder %s185, 31
      %s187 = scalar_select %p186, %s185, 31
      %s188 = smul.addr %s187, 4
      %s189 = scalar_lea.vmem %s3, %s188
      %p190 = pneg %p131
      %p191 = pneg %p128
      %s192 = smul.u32 16, %s16
      %p193 = scmp.lt.s32.totalorder %s192, 31
      %s194 = scalar_select %p193, %s192, 31
      %s195 = smul.addr %s194, 8
      %s196 = scalar_lea.vmem %s4, %s195
      %s197 = smul.u32 16, %s16
      %p198 = scmp.lt.s32.totalorder %s197, 31
      %s199 = scalar_select %p198, %s197, 31
      %s200 = smul.addr %s199, 4
      %s201 = scalar_lea.vmem %s0, %s200
      %s202 = smul.u32 16, %s16
      %s203 = smul.u32 16, %s16
      %p204 = scmp.lt.s32.totalorder %s203, 31
      %s205 = scalar_select %p204, %s203, 31
      %s206 = smul.addr %s205, 4
      %s207 = scalar_lea.vmem %s3, %s206
      %s208 = smul.u32 16, %s16
      %s209 = smul.u32 16, %s16
      %p210 = scmp.lt.s32.totalorder %s209, 31
      %s211 = scalar_select %p210, %s209, 31
      %s212 = smul.addr %s211, 8
      %s213 = scalar_lea.vmem %s4, %s212
      %s214 = smul.u32 16, %s16
      %v216 = vld [vmem:[%s201] sm:$0xf]
      %v217 = vld [vmem:[%s201 + $0x4] sm:$0xf]
      %v218 = vld [vmem:[%s201 + $0x8] sm:$0xf]
      %v219 = vld [vmem:[%s201 + $0xc] sm:$0xf]
      %v220 = vld [vmem:[%s201 + $0x10] sm:$0xf]
      %v221 = vld [vmem:[%s201 + $0x14] sm:$0xf]
      %v222 = vld [vmem:[%s201 + $0x18] sm:$0xf]
      %v223 = vld [vmem:[%s201 + $0x1c] sm:$0xf]
      %v224 = vld [vmem:[%s201 + $0x20] sm:$0xf]
      %v225 = vld [vmem:[%s201 + $0x24] sm:$0xf]
      %v226 = vld [vmem:[%s201 + $0x28] sm:$0xf]
      %v227 = vld [vmem:[%s201 + $0x2c] sm:$0xf]
      %v228 = vld [vmem:[%s201 + $0x30] sm:$0xf]
      %v229 = vld [vmem:[%s201 + $0x34] sm:$0xf]
      %v230 = vld [vmem:[%s201 + $0x38] sm:$0xf]
      %v231 = vld [vmem:[%s201 + $0x3c] sm:$0xf]
      %v232 = vld [vmem:[%s1] sm:$0xf]
      %v233 = vld [vmem:[%s1 + $0x4] sm:$0xf]
      %v234 = vld [vmem:[%s1 + $0x8] sm:$0xf]
      %v235 = vld [vmem:[%s1 + $0xc] sm:$0xf]
      %v252 = vunpack.c.l.b16 %v216
      %v253 = vunpack.c.l.b16 %v217
      %v254 = vunpack.c.l.b16 %v218
      %v255 = vunpack.c.l.b16 %v219
      %v256 = vunpack.c.l.b16 %v220
      %v257 = vunpack.c.l.b16 %v221
      %v258 = vunpack.c.l.b16 %v222
      %v259 = vunpack.c.l.b16 %v223
      %v260 = vunpack.c.l.b16 %v224
      %v261 = vunpack.c.l.b16 %v225
      %v262 = vunpack.c.l.b16 %v226
      %v263 = vunpack.c.l.b16 %v227
      %v264 = vunpack.c.l.b16 %v228
      %v265 = vunpack.c.l.b16 %v229
      %v266 = vunpack.c.l.b16 %v230
      %v267 = vunpack.c.l.b16 %v231
      %v268 = vpack.c.b16 %v253, %v252
      %v269 = vpack.c.b16 %v255, %v254
      %v270 = vpack.c.b16 %v257, %v256
      %v271 = vpack.c.b16 %v259, %v258
      %v272 = vpack.c.b16 %v261, %v260
      %v273 = vpack.c.b16 %v263, %v262
      %v274 = vpack.c.b16 %v265, %v264
      %v275 = vpack.c.b16 %v267, %v266
      %v280 = vunpack.c.l.b16 %v232
      %v281 = vunpack.c.l.b16 %v233
      %v282 = vunpack.c.l.b16 %v234
      %v283 = vunpack.c.l.b16 %v235
      %v284 = vpack.c.b16 %v281, %v280
      %v285 = vpack.c.b16 %v283, %v282
      %vm288 = vcmask 261120
      %v290 = vsel %vm288, %v268, 0
      %v293 = vsel %vm288, %v269, 0
      %v296 = vsel %vm288, %v270, 0
      %v299 = vsel %vm288, %v271, 0
      %v302 = vsel %vm288, %v272, 0
      %v305 = vsel %vm288, %v273, 0
      %v308 = vsel %vm288, %v274, 0
      %v311 = vsel %vm288, %v275, 0
      %313 = vmatprep.subr.bf16.mxu0 0
      %314 = vmatpush1.bf16.msra.mxu0 0
      %315 = vmatprep.subr.bf16.mxu0 0
      %316 = vmatpush1.bf16.msra.mxu0 0
      %317 = vmatprep.subr.bf16.mxu0 0
      %318 = vmatpush1.bf16.msra.mxu0 0
      %319 = vmatprep.subr.bf16.mxu0 0
      %320 = vmatpush1.bf16.msra.mxu0 0
      %321 = vmatprep.subr.bf16.mxu0 0
      %322 = vmatpush1.bf16.msra.mxu0 0
      %323 = vmatprep.subr.bf16.mxu0 0
      %324 = vmatpush1.bf16.msra.mxu0 0
      %325 = vmatprep.subr.bf16.mxu0 0
      %326 = vmatpush1.bf16.msra.mxu0 %v285
      %327 = vmatprep.subr.bf16.mxu0 0
      %328 = vmatpush1.bf16.msra.mxu0 %v284
      %329 = vmatprep.subr.bf16.mxu0 0
      %330 = vmatpush2.bf16.msra.mxu0 0
      %331 = vmatprep.subr.bf16.mxu0 0
      %332 = vmatpush2.bf16.msra.mxu0 0
      %333 = vmatprep.subr.bf16.mxu0 0
      %334 = vmatpush2.bf16.msra.mxu0 0
      %335 = vmatprep.subr.bf16.mxu0 0
      %336 = vmatpush2.bf16.msra.mxu0 0
      %337 = vmatprep.subr.bf16.mxu0 0
      %338 = vmatpush2.bf16.msra.mxu0 0
      %339 = vmatprep.subr.bf16.mxu0 0
      %340 = vmatpush2.bf16.msra.mxu0 0
      %341 = vmatprep.subr.bf16.mxu0 0
      %342 = vmatpush2.bf16.msra.mxu0 0
      %343 = vmatprep.subr.bf16.mxu0 0
      %344 = vmatpush2.bf16.msra.mxu0 0
      %345 = vmatprep.mubr.bf16.mxu0 0
      %346 = vmatmul.mubr.bf16.gmra.mxu0 %v290
      %v347 = vpop.f32.mrf.mxu0
      %v348 = vadd.f32 0.0, %v347
      %v349 = vpop.f32.mrf.mxu0
      %v350 = vpop.f32.mrf.mxu0
      %v351 = vadd.f32 0.0, %v350
      %v352 = vpop.f32.mrf.mxu0
      %353 = vmatprep.mubr.bf16.mxu0 0
      %354 = vmatmul.mubr.bf16.gmra.mxu0 %v293
      %v355 = vpop.f32.mrf.mxu0
      %v356 = vadd.f32 0.0, %v355
      %v357 = vpop.f32.mrf.mxu0
      %v358 = vpop.f32.mrf.mxu0
      %v359 = vadd.f32 0.0, %v358
      %v360 = vpop.f32.mrf.mxu0
      %361 = vmatprep.mubr.bf16.mxu0 0
      %362 = vmatmul.mubr.bf16.gmra.mxu0 %v296
      %v363 = vpop.f32.mrf.mxu0
      %v364 = vadd.f32 0.0, %v363
      %v365 = vpop.f32.mrf.mxu0
      %v366 = vpop.f32.mrf.mxu0
      %v367 = vadd.f32 0.0, %v366
      %v368 = vpop.f32.mrf.mxu0
      %369 = vmatprep.mubr.bf16.mxu0 0
      %370 = vmatmul.mubr.bf16.gmra.mxu0 %v299
      %v371 = vpop.f32.mrf.mxu0
      %v372 = vadd.f32 0.0, %v371
      %v373 = vpop.f32.mrf.mxu0
      %v374 = vpop.f32.mrf.mxu0
      %v375 = vadd.f32 0.0, %v374
      %v376 = vpop.f32.mrf.mxu0
      %377 = vmatprep.mubr.bf16.mxu0 0
      %378 = vmatmul.mubr.bf16.gmra.mxu0 %v302
      %v379 = vpop.f32.mrf.mxu0
      %v380 = vadd.f32 0.0, %v379
      %v381 = vpop.f32.mrf.mxu0
      %v382 = vpop.f32.mrf.mxu0
      %v383 = vadd.f32 0.0, %v382
      %v384 = vpop.f32.mrf.mxu0
      %385 = vmatprep.mubr.bf16.mxu0 0
      %386 = vmatmul.mubr.bf16.gmra.mxu0 %v305
      %v387 = vpop.f32.mrf.mxu0
      %v388 = vadd.f32 0.0, %v387
      %v389 = vpop.f32.mrf.mxu0
      %v390 = vpop.f32.mrf.mxu0
      %v391 = vadd.f32 0.0, %v390
      %v392 = vpop.f32.mrf.mxu0
      %393 = vmatprep.mubr.bf16.mxu0 0
      %394 = vmatmul.mubr.bf16.gmra.mxu0 %v308
      %v395 = vpop.f32.mrf.mxu0
      %v396 = vadd.f32 0.0, %v395
      %v397 = vpop.f32.mrf.mxu0
      %v398 = vpop.f32.mrf.mxu0
      %v399 = vadd.f32 0.0, %v398
      %v400 = vpop.f32.mrf.mxu0
      %401 = vmatprep.mubr.bf16.mxu0 0
      %402 = vmatmul.mubr.bf16.gmra.mxu0 %v311
      %v403 = vpop.f32.mrf.mxu0
      %v404 = vadd.f32 0.0, %v403
      %v405 = vpop.f32.mrf.mxu0
      %v406 = vpop.f32.mrf.mxu0
      %v407 = vadd.f32 0.0, %v406
      %v408 = vpop.f32.mrf.mxu0
      %409 = vdwg.mxu0
      %v410 = vld [vmem:[%s2] sm:$0xff]
      %v411 = vld [vmem:[%s2 + $0x8] sm:$0xff]
      %v412 = vld [vmem:[%s2 + $0x10] sm:$0xff]
      %v413 = vld [vmem:[%s2 + $0x18] sm:$0xff]
      %v415 = vsel %vm288, %v348, 0
      %v418 = vsel %vm288, %v351, 0
      %v421 = vsel %vm288, %v356, 0
      %v424 = vsel %vm288, %v359, 0
      %v427 = vsel %vm288, %v364, 0
      %v430 = vsel %vm288, %v367, 0
      %v433 = vsel %vm288, %v372, 0
      %v436 = vsel %vm288, %v375, 0
      %v439 = vsel %vm288, %v380, 0
      %v442 = vsel %vm288, %v383, 0
      %v445 = vsel %vm288, %v388, 0
      %v448 = vsel %vm288, %v391, 0
      %v451 = vsel %vm288, %v396, 0
      %v454 = vsel %vm288, %v399, 0
      %v457 = vsel %vm288, %v404, 0
      %v460 = vsel %vm288, %v407, 0
      %462 = vmatprep.subr.mxu0 0.0
      %463 = vmatpush1.msra.mxu0 0.0
      %464 = vmatprep.subr.mxu0 0.0
      %465 = vmatpush1.msra.mxu0 0.0
      %466 = vmatprep.subr.mxu0 0.0
      %467 = vmatpush1.msra.mxu0 0.0
      %468 = vmatprep.subr.mxu0 0.0
      %469 = vmatpush1.msra.mxu0 0.0
      %470 = vmatprep.subr.mxu0 0.0
      %471 = vmatpush1.msra.mxu0 0.0
      %472 = vmatprep.subr.mxu0 0.0
      %473 = vmatpush1.msra.mxu0 0.0
      %474 = vmatprep.subr.mxu0 0.0
      %475 = vmatpush1.msra.mxu0 0.0
      %476 = vmatprep.subr.mxu0 0.0
      %477 = vmatpush1.msra.mxu0 0.0
      %478 = vmatprep.subr.mxu0 0.0
      %479 = vmatpush1.msra.mxu0 0.0
      %480 = vmatprep.subr.mxu0 0.0
      %481 = vmatpush1.msra.mxu0 0.0
      %482 = vmatprep.subr.mxu0 0.0
      %483 = vmatpush1.msra.mxu0 0.0
      %484 = vmatprep.subr.mxu0 0.0
      %485 = vmatpush1.msra.mxu0 0.0
      %486 = vmatprep.subr.mxu0 0.0
      %487 = vmatpush1.msra.mxu0 %v413
      %488 = vmatprep.subr.mxu0 0.0
      %489 = vmatpush1.msra.mxu0 %v412
      %490 = vmatprep.subr.mxu0 0.0
      %491 = vmatpush1.msra.mxu0 %v411
      %492 = vmatprep.subr.mxu0 0.0
      %493 = vmatpush1.msra.mxu0 %v410
      %494 = vmatprep.subr.mxu0 0.0
      %495 = vmatpush2.msra.mxu0 0.0
      %496 = vmatprep.subr.mxu0 0.0
      %497 = vmatpush2.msra.mxu0 0.0
      %498 = vmatprep.subr.mxu0 0.0
      %499 = vmatpush2.msra.mxu0 0.0
      %500 = vmatprep.subr.mxu0 0.0
      %501 = vmatpush2.msra.mxu0 0.0
      %502 = vmatprep.subr.mxu0 0.0
      %503 = vmatpush2.msra.mxu0 0.0
      %504 = vmatprep.subr.mxu0 0.0
      %505 = vmatpush2.msra.mxu0 0.0
      %506 = vmatprep.subr.mxu0 0.0
      %507 = vmatpush2.msra.mxu0 0.0
      %508 = vmatprep.subr.mxu0 0.0
      %509 = vmatpush2.msra.mxu0 0.0
      %510 = vmatprep.subr.mxu0 0.0
      %511 = vmatpush2.msra.mxu0 0.0
      %512 = vmatprep.subr.mxu0 0.0
      %513 = vmatpush2.msra.mxu0 0.0
      %514 = vmatprep.subr.mxu0 0.0
      %515 = vmatpush2.msra.mxu0 0.0
      %516 = vmatprep.subr.mxu0 0.0
      %517 = vmatpush2.msra.mxu0 0.0
      %518 = vmatprep.subr.mxu0 0.0
      %519 = vmatpush2.msra.mxu0 0.0
      %520 = vmatprep.subr.mxu0 0.0
      %521 = vmatpush2.msra.mxu0 0.0
      %522 = vmatprep.subr.mxu0 0.0
      %523 = vmatpush2.msra.mxu0 0.0
      %524 = vmatprep.subr.mxu0 0.0
      %525 = vmatpush2.msra.mxu0 0.0
      %526 = vmatprep.mubr.f32.mxu0 0.0
      %527 = vmatmul.mubr.f32.gmra.mxu0 %v415
      %v528 = vpop.f32.mrf.mxu0
      %v529 = vadd.f32 0.0, %v528
      %v530 = vpop.f32.mrf.mxu0
      %531 = vmatprep.mubr.f32.mxu0 0.0
      %532 = vmatmul.mubr.f32.gmra.mxu0 %v418
      %v533 = vpop.f32.mrf.mxu0
      %v534 = vadd.f32 0.0, %v533
      %v535 = vpop.f32.mrf.mxu0
      %536 = vmatprep.mubr.f32.mxu0 0.0
      %537 = vmatmul.mubr.f32.gmra.mxu0 %v421
      %v538 = vpop.f32.mrf.mxu0
      %v539 = vadd.f32 0.0, %v538
      %v540 = vpop.f32.mrf.mxu0
      %541 = vmatprep.mubr.f32.mxu0 0.0
      %542 = vmatmul.mubr.f32.gmra.mxu0 %v424
      %v543 = vpop.f32.mrf.mxu0
      %v544 = vadd.f32 0.0, %v543
      %v545 = vpop.f32.mrf.mxu0
      %546 = vmatprep.mubr.f32.mxu0 0.0
      %547 = vmatmul.mubr.f32.gmra.mxu0 %v427
      %v548 = vpop.f32.mrf.mxu0
      %v549 = vadd.f32 0.0, %v548
      %v550 = vpop.f32.mrf.mxu0
      %551 = vmatprep.mubr.f32.mxu0 0.0
      %552 = vmatmul.mubr.f32.gmra.mxu0 %v430
      %v553 = vpop.f32.mrf.mxu0
      %v554 = vadd.f32 0.0, %v553
      %v555 = vpop.f32.mrf.mxu0
      %556 = vmatprep.mubr.f32.mxu0 0.0
      %557 = vmatmul.mubr.f32.gmra.mxu0 %v433
      %v558 = vpop.f32.mrf.mxu0
      %v559 = vadd.f32 0.0, %v558
      %v560 = vpop.f32.mrf.mxu0
      %561 = vmatprep.mubr.f32.mxu0 0.0
      %562 = vmatmul.mubr.f32.gmra.mxu0 %v436
      %v563 = vpop.f32.mrf.mxu0
      %v564 = vadd.f32 0.0, %v563
      %v565 = vpop.f32.mrf.mxu0
      %566 = vmatprep.mubr.f32.mxu0 0.0
      %567 = vmatmul.mubr.f32.gmra.mxu0 %v439
      %v568 = vpop.f32.mrf.mxu0
      %v569 = vadd.f32 0.0, %v568
      %v570 = vpop.f32.mrf.mxu0
      %571 = vmatprep.mubr.f32.mxu0 0.0
      %572 = vmatmul.mubr.f32.gmra.mxu0 %v442
      %v573 = vpop.f32.mrf.mxu0
      %v574 = vadd.f32 0.0, %v573
      %v575 = vpop.f32.mrf.mxu0
      %576 = vmatprep.mubr.f32.mxu0 0.0
      %577 = vmatmul.mubr.f32.gmra.mxu0 %v445
      %v578 = vpop.f32.mrf.mxu0
      %v579 = vadd.f32 0.0, %v578
      %v580 = vpop.f32.mrf.mxu0
      %581 = vmatprep.mubr.f32.mxu0 0.0
      %582 = vmatmul.mubr.f32.gmra.mxu0 %v448
      %v583 = vpop.f32.mrf.mxu0
      %v584 = vadd.f32 0.0, %v583
      %v585 = vpop.f32.mrf.mxu0
      %586 = vmatprep.mubr.f32.mxu0 0.0
      %587 = vmatmul.mubr.f32.gmra.mxu0 %v451
      %v588 = vpop.f32.mrf.mxu0
      %v589 = vadd.f32 0.0, %v588
      %v590 = vpop.f32.mrf.mxu0
      %591 = vmatprep.mubr.f32.mxu0 0.0
      %592 = vmatmul.mubr.f32.gmra.mxu0 %v454
      %v593 = vpop.f32.mrf.mxu0
      %v594 = vadd.f32 0.0, %v593
      %v595 = vpop.f32.mrf.mxu0
      %596 = vmatprep.mubr.f32.mxu0 0.0
      %597 = vmatmul.mubr.f32.gmra.mxu0 %v457
      %v598 = vpop.f32.mrf.mxu0
      %v599 = vadd.f32 0.0, %v598
      %v600 = vpop.f32.mrf.mxu0
      %601 = vmatprep.mubr.f32.mxu0 0.0
      %602 = vmatmul.mubr.f32.gmra.mxu0 %v460
      %v603 = vpop.f32.mrf.mxu0
      %v604 = vadd.f32 0.0, %v603
      %v605 = vpop.f32.mrf.mxu0
      %606 = vdwg.mxu0
      %vm607 = vcmask 64512
      %608 = vst.msk [vmem:[%s213] sm:$0xff] %vm607, %v529
      %609 = vst.msk [vmem:[%s213 + $0x8] sm:$0xff] %vm607, %v534
      %610 = vst.msk [vmem:[%s213 + $0x10] sm:$0xff] %vm607, %v539
      %611 = vst.msk [vmem:[%s213 + $0x18] sm:$0xff] %vm607, %v544
      %612 = vst.msk [vmem:[%s213 + $0x20] sm:$0xff] %vm607, %v549
      %613 = vst.msk [vmem:[%s213 + $0x28] sm:$0xff] %vm607, %v554
      %614 = vst.msk [vmem:[%s213 + $0x30] sm:$0xff] %vm607, %v559
      %615 = vst.msk [vmem:[%s213 + $0x38] sm:$0xff] %vm607, %v564
      %616 = vst.msk [vmem:[%s213 + $0x40] sm:$0xff] %vm607, %v569
      %617 = vst.msk [vmem:[%s213 + $0x48] sm:$0xff] %vm607, %v574
      %618 = vst.msk [vmem:[%s213 + $0x50] sm:$0xff] %vm607, %v579
      %619 = vst.msk [vmem:[%s213 + $0x58] sm:$0xff] %vm607, %v584
      %620 = vst.msk [vmem:[%s213 + $0x60] sm:$0xff] %vm607, %v589
      %621 = vst.msk [vmem:[%s213 + $0x68] sm:$0xff] %vm607, %v594
      %622 = vst.msk [vmem:[%s213 + $0x70] sm:$0xff] %vm607, %v599
      %623 = vst.msk [vmem:[%s213 + $0x78] sm:$0xff] %vm607, %v604
      %v624 = vpack.c.bf16 %v351, %v348
      %v625 = vpack.c.bf16 %v359, %v356
      %v626 = vpack.c.bf16 %v367, %v364
      %v627 = vpack.c.bf16 %v375, %v372
      %v628 = vpack.c.bf16 %v383, %v380
      %v629 = vpack.c.bf16 %v391, %v388
      %v630 = vpack.c.bf16 %v399, %v396
      %v631 = vpack.c.bf16 %v407, %v404
      %v640 = vunpack.c.l.b16 %v624
      %v641 = vunpack.c.h.b16 %v624
      %v642 = vunpack.c.l.b16 %v625
      %v643 = vunpack.c.h.b16 %v625
      %v644 = vunpack.c.l.b16 %v626
      %v645 = vunpack.c.h.b16 %v626
      %v646 = vunpack.c.l.b16 %v627
      %v647 = vunpack.c.h.b16 %v627
      %v648 = vunpack.c.l.b16 %v628
      %v649 = vunpack.c.h.b16 %v628
      %v650 = vunpack.c.l.b16 %v629
      %v651 = vunpack.c.h.b16 %v629
      %v652 = vunpack.c.l.b16 %v630
      %v653 = vunpack.c.h.b16 %v630
      %v654 = vunpack.c.l.b16 %v631
      %v655 = vunpack.c.h.b16 %v631
      %v656 = vpack.c.b16 %v640, %v640
      %v657 = vpack.c.b16 %v641, %v641
      %v658 = vpack.c.b16 %v642, %v642
      %v659 = vpack.c.b16 %v643, %v643
      %v660 = vpack.c.b16 %v644, %v644
      %v661 = vpack.c.b16 %v645, %v645
      %v662 = vpack.c.b16 %v646, %v646
      %v663 = vpack.c.b16 %v647, %v647
      %v664 = vpack.c.b16 %v648, %v648
      %v665 = vpack.c.b16 %v649, %v649
      %v666 = vpack.c.b16 %v650, %v650
      %v667 = vpack.c.b16 %v651, %v651
      %v668 = vpack.c.b16 %v652, %v652
      %v669 = vpack.c.b16 %v653, %v653
      %v670 = vpack.c.b16 %v654, %v654
      %v671 = vpack.c.b16 %v655, %v655
      %vm688 = vcmask 257024
      %689 = vst.msk [vmem:[%s207] sm:$0xf] %vm688, %v656
      %690 = vst.msk [vmem:[%s207 + $0x4] sm:$0xf] %vm688, %v657
      %691 = vst.msk [vmem:[%s207 + $0x8] sm:$0xf] %vm688, %v658
      %692 = vst.msk [vmem:[%s207 + $0xc] sm:$0xf] %vm688, %v659
      %693 = vst.msk [vmem:[%s207 + $0x10] sm:$0xf] %vm688, %v660
      %694 = vst.msk [vmem:[%s207 + $0x14] sm:$0xf] %vm688, %v661
      %695 = vst.msk [vmem:[%s207 + $0x18] sm:$0xf] %vm688, %v662
      %696 = vst.msk [vmem:[%s207 + $0x1c] sm:$0xf] %vm688, %v663
      %697 = vst.msk [vmem:[%s207 + $0x20] sm:$0xf] %vm688, %v664
      %698 = vst.msk [vmem:[%s207 + $0x24] sm:$0xf] %vm688, %v665
      %699 = vst.msk [vmem:[%s207 + $0x28] sm:$0xf] %vm688, %v666
      %700 = vst.msk [vmem:[%s207 + $0x2c] sm:$0xf] %vm688, %v667
      %701 = vst.msk [vmem:[%s207 + $0x30] sm:$0xf] %vm688, %v668
      %702 = vst.msk [vmem:[%s207 + $0x34] sm:$0xf] %vm688, %v669
      %703 = vst.msk [vmem:[%s207 + $0x38] sm:$0xf] %vm688, %v670
      %704 = vst.msk [vmem:[%s207 + $0x3c] sm:$0xf] %vm688, %v671
      %s705 = smul.u32 16, %s16
      %p706 = scmp.lt.s32.totalorder %s705, 31
      %s707 = scalar_select %p706, %s705, 31
      %s708 = smul.addr %s707, 4
      %s709 = scalar_lea.vmem %s3, %s708
      %s710 = smul.u32 16, %s16
      %p711 = scmp.lt.s32.totalorder %s710, 31
      %s712 = scalar_select %p711, %s710, 31
      %s713 = smul.addr %s712, 8
      %s714 = scalar_lea.vmem %s4, %s713
      // Predicated region
      $region33: #{gat_conv_pallas.2} parent=31 // pred_check
        %p715 = pneg %p102
      $region34: #{gat_conv_pallas.2} parent=31 // pred_check_branch
        %717 = sbr.rel (%p715) target = $region36
      $region35: #{gat_conv_pallas.2} parent=31 // pred_region
        %s718 = smul.u32 16, %s16
      $region36: #{gat_conv_pallas.2} parent=31 // pred_fallthru
        _
      // Predicated region
      $region37: #{gat_conv_pallas.2} parent=31 // pred_check
        %p719 = pneg %p128
      $region38: #{gat_conv_pallas.2} parent=31 // pred_check_branch
        %721 = sbr.rel (%p719) target = $region40
      $region39: #{gat_conv_pallas.2} parent=31 // pred_region
        %s722 = smul.u32 16, %s16
      $region40: #{gat_conv_pallas.2} parent=31 // pred_fallthru
        _
    $region32: #{gat_conv_pallas.2} parent=5 // pred_fallthru
      _
    %p723 = scmp.le.s32.totalorder 2, %s11
    // Predicated region
    $region41: #{gat_conv_pallas.2} parent=5 // pred_check
      %p724 = pneg %p723
    $region42: #{gat_conv_pallas.2} parent=5 // pred_check_branch
      %726 = sbr.rel (%p724) target = $region44
    $region43: #{gat_conv_pallas.2} parent=5 // pred_region
      %s727 = ssub.s32 %s11, 2
      // Predicated region
      $region45: #{gat_conv_pallas.2} parent=43 // pred_check
        %p728 = pneg %p108
      $region46: #{gat_conv_pallas.2} parent=43 // pred_check_branch
        %730 = sbr.rel (%p728) target = $region48
      $region47: #{gat_conv_pallas.2} parent=43 // pred_region
        %s731 = smul.u32 16, %s17
        %p732 = scmp.lt.s32.totalorder %s731, 31
        %s733 = scalar_select %p732, %s731, 31
        %s734 = smul.addr %s733, 4
        %s735 = scalar_lea.vmem %s3, %s734
      $region48: #{gat_conv_pallas.2} parent=43 // pred_fallthru
        _
      // Predicated region
      $region49: #{gat_conv_pallas.2} parent=43 // pred_check
        %p736 = pneg %p134
      $region50: #{gat_conv_pallas.2} parent=43 // pred_check_branch
        %738 = sbr.rel (%p736) target = $region52
      $region51: #{gat_conv_pallas.2} parent=43 // pred_region
        %s739 = smul.u32 16, %s17
        %p740 = scmp.lt.s32.totalorder %s739, 31
        %s741 = scalar_select %p740, %s739, 31
        %s742 = smul.addr %s741, 8
        %s743 = scalar_lea.vmem %s4, %s742
      $region52: #{gat_conv_pallas.2} parent=43 // pred_fallthru
        _
    $region44: #{gat_conv_pallas.2} parent=5 // pred_fallthru
      _
  $region6: #{gat_conv_pallas.2} parent=0 // loop_footer
    %s15 = sadd.s32 1, %s11
  $region7: #{gat_conv_pallas.2} parent=0 // loop_footer_branch
    %10 = sbr.rel target = $region3
  $region8: #{gat_conv_pallas.2} parent=0 // loop_exit
    _

// kernel: gat_conv_pallas.3
$region0: #{gat_conv_pallas.3}
  #allocation0 [shape = 'u32[]', space=smem, size = 0x4, offset = 0x4, fixed_abs, tag = 'smem constant byte address 0x4 - core index']
  #allocation1 [shape = 'u32[144,128]{1,0:T(1,128)}', space=vmem, size = 0x12000, scoped, tag = 'internal scratch']
  #allocation2 [shape = 'f32[128,36]{1,0:T(8,128)}', space=vmem, size = 0x10000, scoped, tag = 'scratch operand']
  %s0 = inlined_call_operand.vmem [shape: f32[256,4], index: 0, kind: input, shape index: {}]
  %s1 = inlined_call_operand.vmem [shape: f32[256,4], index: 1, kind: input, shape index: {}]
  %s2 = inlined_call_operand.vmem [shape: f32[4,256], index: 2, kind: input, shape index: {}]
  %s3 = inlined_call_operand.vmem [shape: bf16[256,36], index: 3, kind: input, shape index: {}]
  %s4 = inlined_call_operand.vmem [shape: s8[256,256], index: 4, kind: input, shape index: {}]
  %s5 = inlined_call_operand.vmem [shape: f32[1,32], index: 5, kind: input, shape index: {}]
  %s6 = inlined_call_operand.vmem [shape: f32[256,32], index: 6, kind: output, shape index: {}]
  %s7 = sld [smem:[#allocation0]]
  $region103: #{gat_conv_pallas.3} parent=0
    _
  %s9 = ssub.s32 1, %s7
  %s10 = scalar_select 0, %s9, %s7
  $region1: #{gat_conv_pallas.3} parent=0
    #allocation3 [shape = 'u8[32768]{0}', space=vmem, size = 0x8000, scoped, tag = 'input window, operand 4']
    loop: start=0, step=1, limit=6
    $region2: #{gat_conv_pallas.3} parent=1 // loop_pre_header
      _
    $region3: #{gat_conv_pallas.3} parent=1 // loop_header
      %s12 = sphi 0, %s16
      %p13 = scmp.ge.s32.totalorder %s12, 6
      %s19 = sphi 0, %s31
      %s20 = sphi 0, %s27
      %s21 = sphi 0, %s19
      %s22 = sphi 0, %s20
      %s23 = sphi 0, %s21
      %s24 = sphi 0, %s22
      %s34 = sphi 0, %s36
      %s37 = sphi 0, %s34
      %s38 = sphi 0, %s37
      %s54 = sphi 0, %s38
      %s60 = sphi 0, %s62
      %s63 = sphi 0, %s60
      %s64 = sphi 0, %s63
      %s80 = sphi 0, %s64
      %s86 = sphi 0, %s88
      %s89 = sphi 0, %s86
      %s90 = sphi 0, %s89
      %s106 = sphi 0, %s90
      %s112 = sphi 0, %s114
      %s115 = sphi 0, %s112
      %s116 = sphi 0, %s115
      %s132 = sphi 0, %s116
      %s140 = sphi 0, %s142
      %s143 = sphi 0, %s140
      %s144 = sphi 0, %s143
      %s160 = sphi 0, %s144
      %s164 = sphi 0, %s164
      %s166 = sphi 0, %s164
      %s167 = sphi 0, %s166
      %s181 = sphi 0, %s167
      %s187 = sphi 0, %s189
      %s190 = sphi 0, %s187
      %s191 = sphi 0, %s190
      %s207 = sphi 0, %s191
    $region4: #{gat_conv_pallas.3} parent=1 // loop_header_branch
      %15 = sbr.rel (%p13) target = $region8
    $region5: #{gat_conv_pallas.3} parent=1 // loop_body
      %s17 = ssub.s32 %s12, 1
      %s18 = ssub.s32 %s12, 2
      %s25 = sadd.s32 1, %s20
      %p26 = scmp.ge.s32.totalorder %s25, 2
      %s27 = scalar_select %p26, 0, %s25
      %s28 = sadd.s32 1, %s19
      %s29 = scalar_select %p26, %s28, %s19
      %p30 = scmp.ge.s32.totalorder %s29, 2
      %s31 = scalar_select %p30, 0, %s29
      %s32 = ssub.s32 %s19, %s31
      %p33 = scmp.eq.s32.totalorder %s32, 0
      %s35 = sadd.s32 %s34, 1
      %s36 = scalar_select %p33, %s34, %s35
      %p39 = pneg %p33
      %p40 = scmp.eq.s32.totalorder %s12, 3
      %p41 = por %p39, %p40
      %p42 = scmp.ne.s32.totalorder %s34, %s37
      %p43 = scmp.eq.s32.totalorder %s12, 0
      %p44 = por %p42, %p43
      %p45 = scmp.ne.s32.totalorder %s34, %s37
      %p46 = scmp.eq.s32.totalorder %s17, 3
      %p47 = por %p45, %p46
      %p48 = scmp.ne.s32.totalorder %s37, %s38
      %p49 = scmp.eq.s32.totalorder %s17, 0
      %p50 = por %p48, %p49
      %p51 = scmp.ne.s32.totalorder %s37, %s38
      %p52 = scmp.eq.s32.totalorder %s18, 3
      %p53 = por %p51, %p52
      %p55 = scmp.ne.s32.totalorder %s38, %s54
      %p56 = scmp.eq.s32.totalorder %s18, 0
      %p57 = por %p55, %p56
      %s58 = ssub.s32 %s19, %s31
      %p59 = scmp.eq.s32.totalorder %s58, 0
      %s61 = sadd.s32 %s60, 1
      %s62 = scalar_select %p59, %s60, %s61
      %p65 = pneg %p59
      %p66 = scmp.eq.s32.totalorder %s12, 3
      %p67 = por %p65, %p66
      %p68 = scmp.ne.s32.totalorder %s60, %s63
      %p69 = scmp.eq.s32.totalorder %s12, 0
      %p70 = por %p68, %p69
      %p71 = scmp.ne.s32.totalorder %s60, %s63
      %p72 = scmp.eq.s32.totalorder %s17, 3
      %p73 = por %p71, %p72
      %p74 = scmp.ne.s32.totalorder %s63, %s64
      %p75 = scmp.eq.s32.totalorder %s17, 0
      %p76 = por %p74, %p75
      %p77 = scmp.ne.s32.totalorder %s63, %s64
      %p78 = scmp.eq.s32.totalorder %s18, 3
      %p79 = por %p77, %p78
      %p81 = scmp.ne.s32.totalorder %s64, %s80
      %p82 = scmp.eq.s32.totalorder %s18, 0
      %p83 = por %p81, %p82
      %s84 = ssub.s32 %s20, %s27
      %p85 = scmp.eq.s32.totalorder %s84, 0
      %s87 = sadd.s32 %s86, 1
      %s88 = scalar_select %p85, %s86, %s87
      %p91 = pneg %p85
      %p92 = scmp.eq.s32.totalorder %s12, 3
      %p93 = por %p91, %p92
      %p94 = scmp.ne.s32.totalorder %s86, %s89
      %p95 = scmp.eq.s32.totalorder %s12, 0
      %p96 = por %p94, %p95
      %p97 = scmp.ne.s32.totalorder %s86, %s89
      %p98 = scmp.eq.s32.totalorder %s17, 3
      %p99 = por %p97, %p98
      %p100 = scmp.ne.s32.totalorder %s89, %s90
      %p101 = scmp.eq.s32.totalorder %s17, 0
      %p102 = por %p100, %p101
      %p103 = scmp.ne.s32.totalorder %s89, %s90
      %p104 = scmp.eq.s32.totalorder %s18, 3
      %p105 = por %p103, %p104
      %p107 = scmp.ne.s32.totalorder %s90, %s106
      %p108 = scmp.eq.s32.totalorder %s18, 0
      %p109 = por %p107, %p108
      %s110 = ssub.s32 %s20, %s27
      %p111 = scmp.eq.s32.totalorder %s110, 0
      %s113 = sadd.s32 %s112, 1
      %s114 = scalar_select %p111, %s112, %s113
      %p117 = pneg %p111
      %p118 = scmp.eq.s32.totalorder %s12, 3
      %p119 = por %p117, %p118
      %p120 = scmp.ne.s32.totalorder %s112, %s115
      %p121 = scmp.eq.s32.totalorder %s12, 0
      %p122 = por %p120, %p121
      %p123 = scmp.ne.s32.totalorder %s112, %s115
      %p124 = scmp.eq.s32.totalorder %s17, 3
      %p125 = por %p123, %p124
      %p126 = scmp.ne.s32.totalorder %s115, %s116
      %p127 = scmp.eq.s32.totalorder %s17, 0
      %p128 = por %p126, %p127
      %p129 = scmp.ne.s32.totalorder %s115, %s116
      %p130 = scmp.eq.s32.totalorder %s18, 3
      %p131 = por %p129, %p130
      %p133 = scmp.ne.s32.totalorder %s116, %s132
      %p134 = scmp.eq.s32.totalorder %s18, 0
      %p135 = por %p133, %p134
      %s136 = ssub.s32 %s19, %s31
      %s137 = ssub.s32 %s20, %s27
      %s138 = sor.u32 %s136, %s137
      %p139 = scmp.eq.s32.totalorder %s138, 0
      %s141 = sadd.s32 %s140, 1
      %s142 = scalar_select %p139, %s140, %s141
      %p145 = pneg %p139
      %p146 = scmp.eq.s32.totalorder %s12, 3
      %p147 = por %p145, %p146
      %p148 = scmp.ne.s32.totalorder %s140, %s143
      %p149 = scmp.eq.s32.totalorder %s12, 0
      %p150 = por %p148, %p149
      %p151 = scmp.ne.s32.totalorder %s140, %s143
      %p152 = scmp.eq.s32.totalorder %s17, 3
      %p153 = por %p151, %p152
      %p154 = scmp.ne.s32.totalorder %s143, %s144
      %p155 = scmp.eq.s32.totalorder %s17, 0
      %p156 = por %p154, %p155
      %p157 = scmp.ne.s32.totalorder %s143, %s144
      %p158 = scmp.eq.s32.totalorder %s18, 3
      %p159 = por %p157, %p158
      %p161 = scmp.ne.s32.totalorder %s144, %s160
      %p162 = scmp.eq.s32.totalorder %s18, 0
      %p163 = por %p161, %p162
      %s165 = sadd.s32 %s164, 1
      %p168 = scmp.eq.s32.totalorder %s12, 3
      %p169 = scmp.ne.s32.totalorder %s164, %s166
      %p170 = scmp.eq.s32.totalorder %s12, 0
      %p171 = por %p169, %p170
      %p172 = scmp.ne.s32.totalorder %s164, %s166
      %p173 = scmp.eq.s32.totalorder %s17, 3
      %p174 = por %p172, %p173
      %p175 = scmp.ne.s32.totalorder %s166, %s167
      %p176 = scmp.eq.s32.totalorder %s17, 0
      %p177 = por %p175, %p176
      %p178 = scmp.ne.s32.totalorder %s166, %s167
      %p179 = scmp.eq.s32.totalorder %s18, 3
      %p180 = por %p178, %p179
      %p182 = scmp.ne.s32.totalorder %s167, %s181
      %p183 = scmp.eq.s32.totalorder %s18, 0
      %p184 = por %p182, %p183
      %s185 = ssub.s32 %s19, %s31
      %p186 = scmp.eq.s32.totalorder %s185, 0
      %s188 = sadd.s32 %s187, 1
      %s189 = scalar_select %p186, %s187, %s188
      %p192 = pneg %p186
      %p193 = scmp.eq.s32.totalorder %s12, 3
      %p194 = por %p192, %p193
      %p195 = scmp.ne.s32.totalorder %s187, %s190
      %p196 = scmp.eq.s32.totalorder %s12, 0
      %p197 = por %p195, %p196
      %p198 = scmp.ne.s32.totalorder %s187, %s190
      %p199 = scmp.eq.s32.totalorder %s17, 3
      %p200 = por %p198, %p199
      %p201 = scmp.ne.s32.totalorder %s190, %s191
      %p202 = scmp.eq.s32.totalorder %s17, 0
      %p203 = por %p201, %p202
      %p204 = scmp.ne.s32.totalorder %s190, %s191
      %p205 = scmp.eq.s32.totalorder %s18, 3
      %p206 = por %p204, %p205
      %p208 = scmp.ne.s32.totalorder %s191, %s207
      %p209 = scmp.eq.s32.totalorder %s18, 0
      %p210 = por %p208, %p209
      %p211 = scmp.le.s32.totalorder 1, %s12
      %p212 = scmp.lt.s32.totalorder %s12, 5
      %p213 = pnand %p211, %p212
      %p214 = pneg %p213
      // Predicated region
      $region9: #{gat_conv_pallas.3} parent=5 // pred_check
        _
      $region10: #{gat_conv_pallas.3} parent=5 // pred_check_branch
        %216 = sbr.rel (%p213) target = $region12
      $region11: #{gat_conv_pallas.3} parent=5 // pred_region
        %s217 = ssub.s32 %s12, 1
        // Predicated region
        $region13: #{gat_conv_pallas.3} parent=11 // pred_check
          %p218 = pneg %p177
        $region14: #{gat_conv_pallas.3} parent=11 // pred_check_branch
          %220 = sbr.rel (%p218) target = $region16
        $region15: #{gat_conv_pallas.3} parent=11 // pred_region
          _
        $region16: #{gat_conv_pallas.3} parent=11 // pred_fallthru
          _
      $region12: #{gat_conv_pallas.3} parent=5 // pred_fallthru
        _
      %p221 = scmp.lt.s32.totalorder %s12, 4
      // Predicated region
      $region17: #{gat_conv_pallas.3} parent=5 // pred_check
        %p222 = pneg %p221
      $region18: #{gat_conv_pallas.3} parent=5 // pred_check_branch
        %224 = sbr.rel (%p222) target = $region20
      $region19: #{gat_conv_pallas.3} parent=5 // pred_region
        // Predicated region
        $region21: #{gat_conv_pallas.3} parent=19 // pred_check
          %p225 = pneg %p44
        $region22: #{gat_conv_pallas.3} parent=19 // pred_check_branch
          %227 = sbr.rel (%p225) target = $region24
        $region23: #{gat_conv_pallas.3} parent=19 // pred_region
          %s228 = smul.u32 16, %s19
          %p229 = scmp.lt.s32.totalorder %s228, 31
          %s230 = scalar_select %p229, %s228, 31
          %s231 = smul.addr %s230, 8
          %s232 = scalar_lea.vmem %s0, %s231
          %s233 = smul.u32 16, %s19
        $region24: #{gat_conv_pallas.3} parent=19 // pred_fallthru
          _
        // Predicated region
        $region25: #{gat_conv_pallas.3} parent=19 // pred_check
          %p234 = pneg %p70
        $region26: #{gat_conv_pallas.3} parent=19 // pred_check_branch
          %236 = sbr.rel (%p234) target = $region28
        $region27: #{gat_conv_pallas.3} parent=19 // pred_region
          %s237 = smul.u32 16, %s19
          %p238 = scmp.lt.s32.totalorder %s237, 31
          %s239 = scalar_select %p238, %s237, 31
          %s240 = smul.addr %s239, 8
          %s241 = scalar_lea.vmem %s1, %s240
          %s242 = smul.u32 16, %s19
        $region28: #{gat_conv_pallas.3} parent=19 // pred_fallthru
          _
        // Predicated region
        $region29: #{gat_conv_pallas.3} parent=19 // pred_check
          %p243 = pneg %p96
        $region30: #{gat_conv_pallas.3} parent=19 // pred_check_branch
          %245 = sbr.rel (%p243) target = $region32
        $region31: #{gat_conv_pallas.3} parent=19 // pred_region
          %p246 = scmp.lt.s32.totalorder %s20, 1
          %s247 = scalar_select %p246, %s20, 1
          %s248 = smul.addr %s247, 4
          %s249 = scalar_lea.vmem %s2, %s248
        $region32: #{gat_conv_pallas.3} parent=19 // pred_fallthru
          _
        // Predicated region
        $region33: #{gat_conv_pallas.3} parent=19 // pred_check
          %p250 = pneg %p122
        $region34: #{gat_conv_pallas.3} parent=19 // pred_check_branch
          %252 = sbr.rel (%p250) target = $region36
        $region35: #{gat_conv_pallas.3} parent=19 // pred_region
          %s253 = smul.u32 16, %s20
          %p254 = scmp.lt.s32.totalorder %s253, 31
          %s255 = scalar_select %p254, %s253, 31
          %s256 = smul.addr %s255, 4
          %s257 = scalar_lea.vmem %s3, %s256
          %s258 = smul.u32 16, %s20
        $region36: #{gat_conv_pallas.3} parent=19 // pred_fallthru
          _
        // Predicated region
        $region37: #{gat_conv_pallas.3} parent=19 // pred_check
          %p259 = pneg %p150
        $region38: #{gat_conv_pallas.3} parent=19 // pred_check_branch
          %261 = sbr.rel (%p259) target = $region40
        $region39: #{gat_conv_pallas.3} parent=19 // pred_region
          %s262 = sand.u32 %s140, 1
          %s263 = sand.u32 %s140, 1
          %s264 = smul.addr %s263, 32
          %s265 = scalar_lea.vmem [#allocation3], %s264
          %s266 = smul.u32 4, %s19
          %s267 = smul.addr %s266, 2
          %s268 = sadd.s32 %s20, %s267
          %s269 = smul.addr %s268, 8
          %s270 = scalar_lea.vmem %s4, %s269
          // Predicated region
          $region41: #{gat_conv_pallas.3} parent=39 // pred_check
            _
          $region42: #{gat_conv_pallas.3} parent=39 // pred_check_branch
            %272 = sbr.rel (0) target = $region44
          $region43: #{gat_conv_pallas.3} parent=39 // pred_region
            // Predicated region
            $region45: #{gat_conv_pallas.3} parent=43 // pred_check
              _
            $region46: #{gat_conv_pallas.3} parent=43 // pred_check_branch
              %274 = sbr.rel (0) target = $region48
            $region47: #{gat_conv_pallas.3} parent=43 // pred_region
              // Predicated region
              $region60: #{gat_conv_pallas.3} parent=47 // pred_check
                _
              $region61: #{gat_conv_pallas.3} parent=47 // pred_check_branch
                %296 = sbr.rel (0) target = $region63
              $region62: #{gat_conv_pallas.3} parent=47 // pred_region
                loop: start=0, step=1, limit=1
                $region64: #{gat_conv_pallas.3} parent=62 // loop_pre_header
                  _
                $region65: #{gat_conv_pallas.3} parent=62 // loop_header
                  %s298 = sphi 0, %s302
                  %p299 = scmp.ge.s32.totalorder %s298, 1
                  %s303 = sphi %s270, %s270
                  %s304 = sphi %s265, %s265
                $region66: #{gat_conv_pallas.3} parent=62 // loop_header_branch
                  %301 = sbr.rel (%p299) target = $region70
                $region67: #{gat_conv_pallas.3} parent=62 // loop_body
                  %v305 = vld [vmem:[%s303] sm:$0xff]
                  %306 = vst [vmem:[%s304] sm:$0xff] %v305
                  %v307 = vld [vmem:[%s303 + $0x10] sm:$0xff]
                  %308 = vst [vmem:[%s304 + $0x8] sm:$0xff] %v307
                  %v309 = vld [vmem:[%s303 + $0x20] sm:$0xff]
                  %310 = vst [vmem:[%s304 + $0x10] sm:$0xff] %v309
                  %v311 = vld [vmem:[%s303 + $0x30] sm:$0xff]
                  %312 = vst [vmem:[%s304 + $0x18] sm:$0xff] %v311
                $region68: #{gat_conv_pallas.3} parent=62 // loop_footer
                  %s302 = sadd.s32 1, %s298
                $region69: #{gat_conv_pallas.3} parent=62 // loop_footer_branch
                  %297 = sbr.rel target = $region65
                $region70: #{gat_conv_pallas.3} parent=62 // loop_exit
                  _
              $region63: #{gat_conv_pallas.3} parent=47 // pred_fallthru
                _
              // Predicated region
              $region71: #{gat_conv_pallas.3} parent=47 // pred_check
                _
              $region72: #{gat_conv_pallas.3} parent=47 // pred_check_branch
                %314 = sbr.rel target = $region74
              $region73: #{gat_conv_pallas.3} parent=47 // pred_region
                _
              $region74: #{gat_conv_pallas.3} parent=47 // pred_fallthru
                _
            $region48: #{gat_conv_pallas.3} parent=43 // pred_fallthru
              _
            // Predicated region
            $region49: #{gat_conv_pallas.3} parent=43 // pred_check
              _
            $region50: #{gat_conv_pallas.3} parent=43 // pred_check_branch
              %276 = sbr.rel target = $region52
            $region51: #{gat_conv_pallas.3} parent=43 // pred_region
              %s278 = ssub.s32 256, 1
              loop: start=0, step=1, limit=1
              $region53: #{gat_conv_pallas.3} parent=51 // loop_pre_header
                _
              $region54: #{gat_conv_pallas.3} parent=51 // loop_header
                %s280 = sphi 0, %s284
                %p281 = scmp.ge.s32.totalorder %s280, 1
                %s285 = sphi %s270, %s270
                %s286 = sphi %s265, %s265
              $region55: #{gat_conv_pallas.3} parent=51 // loop_header_branch
                %283 = sbr.rel (%p281) target = $region59
              $region56: #{gat_conv_pallas.3} parent=51 // loop_body
                %v287 = vld [vmem:[%s285] sm:%s278]
                %288 = vst [vmem:[%s286] sm:%s278] %v287
                %v289 = vld [vmem:[%s285 + $0x10] sm:%s278]
                %290 = vst [vmem:[%s286 + $0x8] sm:%s278] %v289
                %v291 = vld [vmem:[%s285 + $0x20] sm:%s278]
                %292 = vst [vmem:[%s286 + $0x10] sm:%s278] %v291
                %v293 = vld [vmem:[%s285 + $0x30] sm:%s278]
                %294 = vst [vmem:[%s286 + $0x18] sm:%s278] %v293
              $region57: #{gat_conv_pallas.3} parent=51 // loop_footer
                %s284 = sadd.s32 1, %s280
              $region58: #{gat_conv_pallas.3} parent=51 // loop_footer_branch
                %279 = sbr.rel target = $region54
              $region59: #{gat_conv_pallas.3} parent=51 // loop_exit
                _
            $region52: #{gat_conv_pallas.3} parent=43 // pred_fallthru
              _
          $region44: #{gat_conv_pallas.3} parent=39 // pred_fallthru
            _
          %315 = vnop
        $region40: #{gat_conv_pallas.3} parent=19 // pred_fallthru
          _
      $region20: #{gat_conv_pallas.3} parent=5 // pred_fallthru
        _
      %p316 = scmp.le.s32.totalorder 1, %s12
      %p317 = scmp.lt.s32.totalorder %s12, 5
      %p318 = pnand %p316, %p317
      %p319 = pneg %p318
      // Predicated region
      $region75: #{gat_conv_pallas.3} parent=5 // pred_check
        _
      $region76: #{gat_conv_pallas.3} parent=5 // pred_check_branch
        %321 = sbr.rel (%p318) target = $region78
      $region77: #{gat_conv_pallas.3} parent=5 // pred_region
        %s322 = ssub.s32 %s12, 1
        %s323 = sand.u32 %s143, 1
        %s324 = sand.u32 %s143, 1
        %s325 = smul.addr %s324, 32
        %s326 = scalar_lea.vmem [#allocation3], %s325
        // Predicated region
        $region79: #{gat_conv_pallas.3} parent=77 // pred_check
          %p327 = pneg %p156
        $region80: #{gat_conv_pallas.3} parent=77 // pred_check_branch
          %329 = sbr.rel (%p327) target = $region82
        $region81: #{gat_conv_pallas.3} parent=77 // pred_region
          _
        $region82: #{gat_conv_pallas.3} parent=77 // pred_fallthru
          _
        %s330 = smul.u32 16, %s21
        %p331 = scmp.lt.s32.totalorder %s330, 31
        %s332 = scalar_select %p331, %s330, 31
        %s333 = smul.addr %s332, 8
        %s334 = scalar_lea.vmem %s0, %s333
        %p335 = pneg %p50
        %p336 = pneg %p47
        %s337 = smul.u32 16, %s21
        %p338 = scmp.lt.s32.totalorder %s337, 31
        %s339 = scalar_select %p338, %s337, 31
        %s340 = smul.addr %s339, 8
        %s341 = scalar_lea.vmem %s1, %s340
        %p342 = pneg %p76
        %p343 = pneg %p73
        %p344 = scmp.lt.s32.totalorder %s22, 1
        %s345 = scalar_select %p344, %s22, 1
        %s346 = smul.addr %s345, 4
        %s347 = scalar_lea.vmem %s2, %s346
        %p348 = pneg %p102
        %p349 = pneg %p99
        %s350 = smul.u32 16, %s22
        %p351 = scmp.lt.s32.totalorder %s350, 31
        %s352 = scalar_select %p351, %s350, 31
        %s353 = smul.addr %s352, 4
        %s354 = scalar_lea.vmem %s3, %s353
        %p355 = pneg %p128
        %p356 = pneg %p125
        %s357 = sand.u32 %s143, 1
        %s358 = sand.u32 %s143, 1
        %s359 = smul.addr %s358, 32
        %s360 = scalar_lea.vmem [#allocation3], %s359
        %p361 = pneg %p156
        %p362 = pneg %p153
        %p363 = pneg %p177
        %p364 = pneg %p174
        %p365 = pneg %p203
        %p366 = pneg %p200
        %s367 = smul.u32 16, %s21
        %p368 = scmp.lt.s32.totalorder %s367, 31
        %s369 = scalar_select %p368, %s367, 31
        %s370 = smul.addr %s369, 8
        %s371 = scalar_lea.vmem %s6, %s370
        %s372 = smul.u32 16, %s21
        %p373 = scmp.lt.s32.totalorder %s372, 31
        %s374 = scalar_select %p373, %s372, 31
        %s375 = smul.addr %s374, 8
        %s376 = scalar_lea.vmem %s0, %s375
        %s377 = smul.u32 16, %s21
        %s378 = smul.u32 16, %s21
        %p379 = scmp.lt.s32.totalorder %s378, 31
        %s380 = scalar_select %p379, %s378, 31
        %s381 = smul.addr %s380, 8
        %s382 = scalar_lea.vmem %s1, %s381
        %s383 = smul.u32 16, %s21
        %p384 = scmp.lt.s32.totalorder %s22, 1
        %s385 = scalar_select %p384, %s22, 1
        %s386 = smul.addr %s385, 4
        %s387 = scalar_lea.vmem %s2, %s386
        %s388 = smul.u32 16, %s22
        %p389 = scmp.lt.s32.totalorder %s388, 31
        %s390 = scalar_select %p389, %s388, 31
        %s391 = smul.addr %s390, 4
        %s392 = scalar_lea.vmem %s3, %s391
        %s393 = smul.u32 16, %s22
        %s394 = smul.u32 4, %s21
        %s395 = smul.u32 16, %s21
        %p396 = scmp.lt.s32.totalorder %s395, 31
        %s397 = scalar_select %p396, %s395, 31
        %s398 = smul.addr %s397, 8
        %s399 = scalar_lea.vmem %s6, %s398
        %s400 = smul.u32 16, %s21
        %p402 = scmp.eq.s32.totalorder %s22, 0
        // Predicated region
        $region83: #{gat_conv_pallas.3} parent=77 // pred_check
          %p403 = pneg %p402
        $region84: #{gat_conv_pallas.3} parent=77 // pred_check_branch
          %405 = sbr.rel (%p403) target = $region86
        $region85: #{gat_conv_pallas.3} parent=77 // pred_region
          %vm406 = vcmask 293888
          %407 = vst.msk [vmem:[#allocation2] sm:$0xff] %vm406, 0.0
          %408 = vst.msk [vmem:[#allocation2 + $0x8] sm:$0xff] %vm406, 0.0
          %409 = vst.msk [vmem:[#allocation2 + $0x10] sm:$0xff] %vm406, 0.0
          %410 = vst.msk [vmem:[#allocation2 + $0x18] sm:$0xff] %vm406, 0.0
          %411 = vst.msk [vmem:[#allocation2 + $0x20] sm:$0xff] %vm406, 0.0
          %412 = vst.msk [vmem:[#allocation2 + $0x28] sm:$0xff] %vm406, 0.0
          %413 = vst.msk [vmem:[#allocation2 + $0x30] sm:$0xff] %vm406, 0.0
          %414 = vst.msk [vmem:[#allocation2 + $0x38] sm:$0xff] %vm406, 0.0
          %415 = vst.msk [vmem:[#allocation2 + $0x40] sm:$0xff] %vm406, 0.0
          %416 = vst.msk [vmem:[#allocation2 + $0x48] sm:$0xff] %vm406, 0.0
          %417 = vst.msk [vmem:[#allocation2 + $0x50] sm:$0xff] %vm406, 0.0
          %418 = vst.msk [vmem:[#allocation2 + $0x58] sm:$0xff] %vm406, 0.0
          %419 = vst.msk [vmem:[#allocation2 + $0x60] sm:$0xff] %vm406, 0.0
          %420 = vst.msk [vmem:[#allocation2 + $0x68] sm:$0xff] %vm406, 0.0
          %421 = vst.msk [vmem:[#allocation2 + $0x70] sm:$0xff] %vm406, 0.0
          %422 = vst.msk [vmem:[#allocation2 + $0x78] sm:$0xff] %vm406, 0.0
        $region86: #{gat_conv_pallas.3} parent=77 // pred_fallthru
          _
        %v423 = vld [vmem:[%s376] sm:$0xff]
        %v424 = vld [vmem:[%s376 + $0x8] sm:$0xff]
        %v425 = vld [vmem:[%s376 + $0x10] sm:$0xff]
        %v426 = vld [vmem:[%s376 + $0x18] sm:$0xff]
        %v427 = vld [vmem:[%s376 + $0x20] sm:$0xff]
        %v428 = vld [vmem:[%s376 + $0x28] sm:$0xff]
        %v429 = vld [vmem:[%s376 + $0x30] sm:$0xff]
        %v430 = vld [vmem:[%s376 + $0x38] sm:$0xff]
        %v431 = vld [vmem:[%s376 + $0x40] sm:$0xff]
        %v432 = vld [vmem:[%s376 + $0x48] sm:$0xff]
        %v433 = vld [vmem:[%s376 + $0x50] sm:$0xff]
        %v434 = vld [vmem:[%s376 + $0x58] sm:$0xff]
        %v435 = vld [vmem:[%s376 + $0x60] sm:$0xff]
        %v436 = vld [vmem:[%s376 + $0x68] sm:$0xff]
        %v437 = vld [vmem:[%s376 + $0x70] sm:$0xff]
        %v438 = vld [vmem:[%s376 + $0x78] sm:$0xff]
        %v439 = vld [vmem:[%s382] sm:$0xff]
        %v440 = vld [vmem:[%s382 + $0x8] sm:$0xff]
        %v441 = vld [vmem:[%s382 + $0x10] sm:$0xff]
        %v442 = vld [vmem:[%s382 + $0x18] sm:$0xff]
        %v443 = vld [vmem:[%s382 + $0x20] sm:$0xff]
        %v444 = vld [vmem:[%s382 + $0x28] sm:$0xff]
        %v445 = vld [vmem:[%s382 + $0x30] sm:$0xff]
        %v446 = vld [vmem:[%s382 + $0x38] sm:$0xff]
        %v447 = vld [vmem:[%s382 + $0x40] sm:$0xff]
        %v448 = vld [vmem:[%s382 + $0x48] sm:$0xff]
        %v449 = vld [vmem:[%s382 + $0x50] sm:$0xff]
        %v450 = vld [vmem:[%s382 + $0x58] sm:$0xff]
        %v451 = vld [vmem:[%s382 + $0x60] sm:$0xff]
        %v452 = vld [vmem:[%s382 + $0x68] sm:$0xff]
        %v453 = vld [vmem:[%s382 + $0x70] sm:$0xff]
        %v454 = vld [vmem:[%s382 + $0x78] sm:$0xff]
        %v455 = vld [vmem:[%s387] sm:$0xf]
        %v456 = vld [vmem:[%s326] sm:$0xff]
        %v457 = vld [vmem:[%s326 + $0x8] sm:$0xff]
        %v458 = vld [vmem:[%s326 + $0x10] sm:$0xff]
        %v459 = vld [vmem:[%s326 + $0x18] sm:$0xff]
        %v460 = vunpack.c.0.s8 %v456
        %v461 = vunpack.c.1.s8 %v456
        %v462 = vunpack.c.2.s8 %v456
        %v463 = vunpack.c.3.s8 %v456
        %v464 = vunpack.c.0.s8 %v457
        %v465 = vunpack.c.1.s8 %v457
        %v466 = vunpack.c.2.s8 %v457
        %v467 = vunpack.c.3.s8 %v457
        %v468 = vunpack.c.0.s8 %v458
        %v469 = vunpack.c.1.s8 %v458
        %v470 = vunpack.c.2.s8 %v458
        %v471 = vunpack.c.3.s8 %v458
        %v472 = vunpack.c.0.s8 %v459
        %v473 = vunpack.c.1.s8 %v459
        %v474 = vunpack.c.2.s8 %v459
        %v475 = vunpack.c.3.s8 %v459
        %v476 = vcvt.s32.f32 %v460
        %v477 = vcvt.s32.f32 %v461
        %v478 = vcvt.s32.f32 %v462
        %v479 = vcvt.s32.f32 %v463
        %v480 = vcvt.s32.f32 %v464
        %v481 = vcvt.s32.f32 %v465
        %v482 = vcvt.s32.f32 %v466
        %v483 = vcvt.s32.f32 %v467
        %v484 = vcvt.s32.f32 %v468
        %v485 = vcvt.s32.f32 %v469
        %v486 = vcvt.s32.f32 %v470
        %v487 = vcvt.s32.f32 %v471
        %v488 = vcvt.s32.f32 %v472
        %v489 = vcvt.s32.f32 %v473
        %v490 = vcvt.s32.f32 %v474
        %v491 = vcvt.s32.f32 %v475
        %v492 = vld [vmem:[%s392] sm:$0xf]
        %v493 = vld [vmem:[%s392 + $0x4] sm:$0xf]
        %v494 = vld [vmem:[%s392 + $0x8] sm:$0xf]
        %v495 = vld [vmem:[%s392 + $0xc] sm:$0xf]
        %v496 = vld [vmem:[%s392 + $0x10] sm:$0xf]
        %v497 = vld [vmem:[%s392 + $0x14] sm:$0xf]
        %v498 = vld [vmem:[%s392 + $0x18] sm:$0xf]
        %v499 = vld [vmem:[%s392 + $0x1c] sm:$0xf]
        %v500 = vld [vmem:[%s392 + $0x20] sm:$0xf]
        %v501 = vld [vmem:[%s392 + $0x24] sm:$0xf]
        %v502 = vld [vmem:[%s392 + $0x28] sm:$0xf]
        %v503 = vld [vmem:[%s392 + $0x2c] sm:$0xf]
        %v504 = vld [vmem:[%s392 + $0x30] sm:$0xf]
        %v505 = vld [vmem:[%s392 + $0x34] sm:$0xf]
        %v506 = vld [vmem:[%s392 + $0x38] sm:$0xf]
        %v507 = vld [vmem:[%s392 + $0x3c] sm:$0xf]
        %509 = vset.pattern.permute.xlu0 0
        %510 = vperm.xlu0 %509, %v423
        %v511 = vpop.permute.xlu0 %510
        %514 = vset.pattern.permute.xlu0 0
        %515 = vperm.xlu0 %514, %v424
        %v516 = vpop.permute.xlu0 %515
        %519 = vset.pattern.permute.xlu0 0
        %520 = vperm.xlu0 %519, %v425
        %v521 = vpop.permute.xlu0 %520
        %524 = vset.pattern.permute.xlu0 0
        %525 = vperm.xlu0 %524, %v426
        %v526 = vpop.permute.xlu0 %525
        %529 = vset.pattern.permute.xlu0 0
        %530 = vperm.xlu0 %529, %v427
        %v531 = vpop.permute.xlu0 %530
        %534 = vset.pattern.permute.xlu0 0
        %535 = vperm.xlu0 %534, %v428
        %v536 = vpop.permute.xlu0 %535
        %539 = vset.pattern.permute.xlu0 0
        %540 = vperm.xlu0 %539, %v429
        %v541 = vpop.permute.xlu0 %540
        %544 = vset.pattern.permute.xlu0 0
        %545 = vperm.xlu0 %544, %v430
        %v546 = vpop.permute.xlu0 %545
        %549 = vset.pattern.permute.xlu0 0
        %550 = vperm.xlu0 %549, %v431
        %v551 = vpop.permute.xlu0 %550
        %554 = vset.pattern.permute.xlu0 0
        %555 = vperm.xlu0 %554, %v432
        %v556 = vpop.permute.xlu0 %555
        %559 = vset.pattern.permute.xlu0 0
        %560 = vperm.xlu0 %559, %v433
        %v561 = vpop.permute.xlu0 %560
        %564 = vset.pattern.permute.xlu0 0
        %565 = vperm.xlu0 %564, %v434
        %v566 = vpop.permute.xlu0 %565
        %569 = vset.pattern.permute.xlu0 0
        %570 = vperm.xlu0 %569, %v435
        %v571 = vpop.permute.xlu0 %570
        %574 = vset.pattern.permute.xlu0 0
        %575 = vperm.xlu0 %574, %v436
        %v576 = vpop.permute.xlu0 %575
        %579 = vset.pattern.permute.xlu0 0
        %580 = vperm.xlu0 %579, %v437
        %v581 = vpop.permute.xlu0 %580
        %584 = vset.pattern.permute.xlu0 0
        %585 = vperm.xlu0 %584, %v438
        %v586 = vpop.permute.xlu0 %585
        %v588 = vlaneseq
        %v589 = vshrl.u32 %v588, 7
        %v590 = vsub.s32 0, %v589
        %v591 = vrot.slane %v455, %v590
        %v592 = vadd.f32 %v511, %v591
        %v593 = vadd.f32 %v516, %v591
        %v594 = vadd.f32 %v521, %v591
        %v595 = vadd.f32 %v526, %v591
        %v596 = vadd.f32 %v531, %v591
        %v597 = vadd.f32 %v536, %v591
        %v598 = vadd.f32 %v541, %v591
        %v599 = vadd.f32 %v546, %v591
        %v600 = vadd.f32 %v551, %v591
        %v601 = vadd.f32 %v556, %v591
        %v602 = vadd.f32 %v561, %v591
        %v603 = vadd.f32 %v566, %v591
        %v604 = vadd.f32 %v571, %v591
        %v605 = vadd.f32 %v576, %v591
        %v606 = vadd.f32 %v581, %v591
        %v607 = vadd.f32 %v586, %v591
        %v608 = vmul.f32 %v592, 0.2
        %v609 = vmul.f32 %v593, 0.2
        %v610 = vmul.f32 %v594, 0.2
        %v611 = vmul.f32 %v595, 0.2
        %v612 = vmul.f32 %v596, 0.2
        %v613 = vmul.f32 %v597, 0.2
        %v614 = vmul.f32 %v598, 0.2
        %v615 = vmul.f32 %v599, 0.2
        %v616 = vmul.f32 %v600, 0.2
        %v617 = vmul.f32 %v601, 0.2
        %v618 = vmul.f32 %v602, 0.2
        %v619 = vmul.f32 %v603, 0.2
        %v620 = vmul.f32 %v604, 0.2
        %v621 = vmul.f32 %v605, 0.2
        %v622 = vmul.f32 %v606, 0.2
        %v623 = vmul.f32 %v607, 0.2
        %v624 = vmax.f32 %v592, %v608
        %v625 = vmax.f32 %v593, %v609
        %v626 = vmax.f32 %v594, %v610
        %v627 = vmax.f32 %v595, %v611
        %v628 = vmax.f32 %v596, %v612
        %v629 = vmax.f32 %v597, %v613
        %v630 = vmax.f32 %v598, %v614
        %v631 = vmax.f32 %v599, %v615
        %v632 = vmax.f32 %v600, %v616
        %v633 = vmax.f32 %v601, %v617
        %v634 = vmax.f32 %v602, %v618
        %v635 = vmax.f32 %v603, %v619
        %v636 = vmax.f32 %v604, %v620
        %v637 = vmax.f32 %v605, %v621
        %v638 = vmax.f32 %v606, %v622
        %v639 = vmax.f32 %v607, %v623
        %641 = vset.pattern.permute.xlu0 0
        %642 = vperm.xlu0 %641, %v439
        %v643 = vpop.permute.xlu0 %642
        %646 = vset.pattern.permute.xlu0 0
        %647 = vperm.xlu0 %646, %v440
        %v648 = vpop.permute.xlu0 %647
        %651 = vset.pattern.permute.xlu0 0
        %652 = vperm.xlu0 %651, %v441
        %v653 = vpop.permute.xlu0 %652
        %656 = vset.pattern.permute.xlu0 0
        %657 = vperm.xlu0 %656, %v442
        %v658 = vpop.permute.xlu0 %657
        %661 = vset.pattern.permute.xlu0 0
        %662 = vperm.xlu0 %661, %v443
        %v663 = vpop.permute.xlu0 %662
        %666 = vset.pattern.permute.xlu0 0
        %667 = vperm.xlu0 %666, %v444
        %v668 = vpop.permute.xlu0 %667
        %671 = vset.pattern.permute.xlu0 0
        %672 = vperm.xlu0 %671, %v445
        %v673 = vpop.permute.xlu0 %672
        %676 = vset.pattern.permute.xlu0 0
        %677 = vperm.xlu0 %676, %v446
        %v678 = vpop.permute.xlu0 %677
        %681 = vset.pattern.permute.xlu0 0
        %682 = vperm.xlu0 %681, %v447
        %v683 = vpop.permute.xlu0 %682
        %686 = vset.pattern.permute.xlu0 0
        %687 = vperm.xlu0 %686, %v448
        %v688 = vpop.permute.xlu0 %687
        %691 = vset.pattern.permute.xlu0 0
        %692 = vperm.xlu0 %691, %v449
        %v693 = vpop.permute.xlu0 %692
        %696 = vset.pattern.permute.xlu0 0
        %697 = vperm.xlu0 %696, %v450
        %v698 = vpop.permute.xlu0 %697
        %701 = vset.pattern.permute.xlu0 0
        %702 = vperm.xlu0 %701, %v451
        %v703 = vpop.permute.xlu0 %702
        %706 = vset.pattern.permute.xlu0 0
        %707 = vperm.xlu0 %706, %v452
        %v708 = vpop.permute.xlu0 %707
        %711 = vset.pattern.permute.xlu0 0
        %712 = vperm.xlu0 %711, %v453
        %v713 = vpop.permute.xlu0 %712
        %716 = vset.pattern.permute.xlu0 0
        %717 = vperm.xlu0 %716, %v454
        %v718 = vpop.permute.xlu0 %717
        %v720 = vsub.f32 %v624, %v643
        %v721 = vsub.f32 %v625, %v648
        %v722 = vsub.f32 %v626, %v653
        %v723 = vsub.f32 %v627, %v658
        %v724 = vsub.f32 %v628, %v663
        %v725 = vsub.f32 %v629, %v668
        %v726 = vsub.f32 %v630, %v673
        %v727 = vsub.f32 %v631, %v678
        %v728 = vsub.f32 %v632, %v683
        %v729 = vsub.f32 %v633, %v688
        %v730 = vsub.f32 %v634, %v693
        %v731 = vsub.f32 %v635, %v698
        %v732 = vsub.f32 %v636, %v703
        %v733 = vsub.f32 %v637, %v708
        %v734 = vsub.f32 %v638, %v713
        %v735 = vsub.f32 %v639, %v718
        %v736 = vmul.f32 %v720, 1.442695
        %v737 = vpow.pop %v736
        %v738 = vmul.f32 %v721, 1.442695
        %v739 = vpow.pop %v738
        %v740 = vmul.f32 %v722, 1.442695
        %v741 = vpow.pop %v740
        %v742 = vmul.f32 %v723, 1.442695
        %v743 = vpow.pop %v742
        %v744 = vmul.f32 %v724, 1.442695
        %v745 = vpow.pop %v744
        %v746 = vmul.f32 %v725, 1.442695
        %v747 = vpow.pop %v746
        %v748 = vmul.f32 %v726, 1.442695
        %v749 = vpow.pop %v748
        %v750 = vmul.f32 %v727, 1.442695
        %v751 = vpow.pop %v750
        %v752 = vmul.f32 %v728, 1.442695
        %v753 = vpow.pop %v752
        %v754 = vmul.f32 %v729, 1.442695
        %v755 = vpow.pop %v754
        %v756 = vmul.f32 %v730, 1.442695
        %v757 = vpow.pop %v756
        %v758 = vmul.f32 %v731, 1.442695
        %v759 = vpow.pop %v758
        %v760 = vmul.f32 %v732, 1.442695
        %v761 = vpow.pop %v760
        %v762 = vmul.f32 %v733, 1.442695
        %v763 = vpow.pop %v762
        %v764 = vmul.f32 %v734, 1.442695
        %v765 = vpow.pop %v764
        %v766 = vmul.f32 %v735, 1.442695
        %v767 = vpow.pop %v766
        %v768 = vmul.f32 %v737, %v476
        %v769 = vmul.f32 %v739, %v477
        %v770 = vmul.f32 %v741, %v478
        %v771 = vmul.f32 %v743, %v479
        %v772 = vmul.f32 %v745, %v480
        %v773 = vmul.f32 %v747, %v481
        %v774 = vmul.f32 %v749, %v482
        %v775 = vmul.f32 %v751, %v483
        %v776 = vmul.f32 %v753, %v484
        %v777 = vmul.f32 %v755, %v485
        %v778 = vmul.f32 %v757, %v486
        %v779 = vmul.f32 %v759, %v487
        %v780 = vmul.f32 %v761, %v488
        %v781 = vmul.f32 %v763, %v489
        %v782 = vmul.f32 %v765, %v490
        %v783 = vmul.f32 %v767, %v491
        %v784 = vld [vmem:[#allocation2] sm:$0xff]
        %v785 = vld [vmem:[#allocation2 + $0x8] sm:$0xff]
        %v786 = vld [vmem:[#allocation2 + $0x10] sm:$0xff]
        %v787 = vld [vmem:[#allocation2 + $0x18] sm:$0xff]
        %v788 = vld [vmem:[#allocation2 + $0x20] sm:$0xff]
        %v789 = vld [vmem:[#allocation2 + $0x28] sm:$0xff]
        %v790 = vld [vmem:[#allocation2 + $0x30] sm:$0xff]
        %v791 = vld [vmem:[#allocation2 + $0x38] sm:$0xff]
        %v792 = vld [vmem:[#allocation2 + $0x40] sm:$0xff]
        %v793 = vld [vmem:[#allocation2 + $0x48] sm:$0xff]
        %v794 = vld [vmem:[#allocation2 + $0x50] sm:$0xff]
        %v795 = vld [vmem:[#allocation2 + $0x58] sm:$0xff]
        %v796 = vld [vmem:[#allocation2 + $0x60] sm:$0xff]
        %v797 = vld [vmem:[#allocation2 + $0x68] sm:$0xff]
        %v798 = vld [vmem:[#allocation2 + $0x70] sm:$0xff]
        %v799 = vld [vmem:[#allocation2 + $0x78] sm:$0xff]
        %v800 = vpack.c.bf16 %v769, %v768
        %v801 = vpack.c.bf16 %v771, %v770
        %v802 = vpack.c.bf16 %v773, %v772
        %v803 = vpack.c.bf16 %v775, %v774
        %v804 = vpack.c.bf16 %v777, %v776
        %v805 = vpack.c.bf16 %v779, %v778
        %v806 = vpack.c.bf16 %v781, %v780
        %v807 = vpack.c.bf16 %v783, %v782
        %v824 = vunpack.c.l.b16 %v492
        %v825 = vunpack.c.l.b16 %v493
        %v826 = vunpack.c.l.b16 %v494
        %v827 = vunpack.c.l.b16 %v495
        %v828 = vunpack.c.l.b16 %v496
        %v829 = vunpack.c.l.b16 %v497
        %v830 = vunpack.c.l.b16 %v498
        %v831 = vunpack.c.l.b16 %v499
        %v832 = vunpack.c.l.b16 %v500
        %v833 = vunpack.c.l.b16 %v501
        %v834 = vunpack.c.l.b16 %v502
        %v835 = vunpack.c.l.b16 %v503
        %v836 = vunpack.c.l.b16 %v504
        %v837 = vunpack.c.l.b16 %v505
        %v838 = vunpack.c.l.b16 %v506
        %v839 = vunpack.c.l.b16 %v507
        %v840 = vpack.c.b16 %v825, %v824
        %v841 = vpack.c.b16 %v827, %v826
        %v842 = vpack.c.b16 %v829, %v828
        %v843 = vpack.c.b16 %v831, %v830
        %v844 = vpack.c.b16 %v833, %v832
        %v845 = vpack.c.b16 %v835, %v834
        %v846 = vpack.c.b16 %v837, %v836
        %v847 = vpack.c.b16 %v839, %v838
        %856 = vmatprep.subr.bf16.mxu0 0
        %857 = vmatpush1.bf16.msra.mxu0 %v847
        %858 = vmatprep.subr.bf16.mxu0 0
        %859 = vmatpush1.bf16.msra.mxu0 %v846
        %860 = vmatprep.subr.bf16.mxu0 0
        %861 = vmatpush1.bf16.msra.mxu0 %v845
        %862 = vmatprep.subr.bf16.mxu0 0
        %863 = vmatpush1.bf16.msra.mxu0 %v844
        %864 = vmatprep.subr.bf16.mxu0 0
        %865 = vmatpush1.bf16.msra.mxu0 %v843
        %866 = vmatprep.subr.bf16.mxu0 0
        %867 = vmatpush1.bf16.msra.mxu0 %v842
        %868 = vmatprep.subr.bf16.mxu0 0
        %869 = vmatpush1.bf16.msra.mxu0 %v841
        %870 = vmatprep.subr.bf16.mxu0 0
        %871 = vmatpush1.bf16.msra.mxu0 %v840
        %872 = vmatprep.subr.bf16.mxu0 0
        %873 = vmatpush2.bf16.msra.mxu0 0
        %874 = vmatprep.subr.bf16.mxu0 0
        %875 = vmatpush2.bf16.msra.mxu0 0
        %876 = vmatprep.subr.bf16.mxu0 0
        %877 = vmatpush2.bf16.msra.mxu0 0
        %878 = vmatprep.subr.bf16.mxu0 0
        %879 = vmatpush2.bf16.msra.mxu0 0
        %880 = vmatprep.subr.bf16.mxu0 0
        %881 = vmatpush2.bf16.msra.mxu0 0
        %882 = vmatprep.subr.bf16.mxu0 0
        %883 = vmatpush2.bf16.msra.mxu0 0
        %884 = vmatprep.subr.bf16.mxu0 0
        %885 = vmatpush2.bf16.msra.mxu0 0
        %886 = vmatprep.subr.bf16.mxu0 0
        %887 = vmatpush2.bf16.msra.mxu0 0
        %888 = vmatprep.mubr.bf16.mxu0 0
        %889 = vmatmul.mubr.bf16.gmra.mxu0 %v800
        %v890 = vpop.f32.mrf.mxu0
        %v891 = vadd.f32 0.0, %v890
        %v892 = vpop.f32.mrf.mxu0
        %v893 = vpop.f32.mrf.mxu0
        %v894 = vadd.f32 0.0, %v893
        %v895 = vpop.f32.mrf.mxu0
        %896 = vmatprep.mubr.bf16.mxu0 0
        %897 = vmatmul.mubr.bf16.gmra.mxu0 %v801
        %v898 = vpop.f32.mrf.mxu0
        %v899 = vadd.f32 0.0, %v898
        %v900 = vpop.f32.mrf.mxu0
        %v901 = vpop.f32.mrf.mxu0
        %v902 = vadd.f32 0.0, %v901
        %v903 = vpop.f32.mrf.mxu0
        %904 = vmatprep.mubr.bf16.mxu0 0
        %905 = vmatmul.mubr.bf16.gmra.mxu0 %v802
        %v906 = vpop.f32.mrf.mxu0
        %v907 = vadd.f32 0.0, %v906
        %v908 = vpop.f32.mrf.mxu0
        %v909 = vpop.f32.mrf.mxu0
        %v910 = vadd.f32 0.0, %v909
        %v911 = vpop.f32.mrf.mxu0
        %912 = vmatprep.mubr.bf16.mxu0 0
        %913 = vmatmul.mubr.bf16.gmra.mxu0 %v803
        %v914 = vpop.f32.mrf.mxu0
        %v915 = vadd.f32 0.0, %v914
        %v916 = vpop.f32.mrf.mxu0
        %v917 = vpop.f32.mrf.mxu0
        %v918 = vadd.f32 0.0, %v917
        %v919 = vpop.f32.mrf.mxu0
        %920 = vmatprep.mubr.bf16.mxu0 0
        %921 = vmatmul.mubr.bf16.gmra.mxu0 %v804
        %v922 = vpop.f32.mrf.mxu0
        %v923 = vadd.f32 0.0, %v922
        %v924 = vpop.f32.mrf.mxu0
        %v925 = vpop.f32.mrf.mxu0
        %v926 = vadd.f32 0.0, %v925
        %v927 = vpop.f32.mrf.mxu0
        %928 = vmatprep.mubr.bf16.mxu0 0
        %929 = vmatmul.mubr.bf16.gmra.mxu0 %v805
        %v930 = vpop.f32.mrf.mxu0
        %v931 = vadd.f32 0.0, %v930
        %v932 = vpop.f32.mrf.mxu0
        %v933 = vpop.f32.mrf.mxu0
        %v934 = vadd.f32 0.0, %v933
        %v935 = vpop.f32.mrf.mxu0
        %936 = vmatprep.mubr.bf16.mxu0 0
        %937 = vmatmul.mubr.bf16.gmra.mxu0 %v806
        %v938 = vpop.f32.mrf.mxu0
        %v939 = vadd.f32 0.0, %v938
        %v940 = vpop.f32.mrf.mxu0
        %v941 = vpop.f32.mrf.mxu0
        %v942 = vadd.f32 0.0, %v941
        %v943 = vpop.f32.mrf.mxu0
        %944 = vmatprep.mubr.bf16.mxu0 0
        %945 = vmatmul.mubr.bf16.gmra.mxu0 %v807
        %v946 = vpop.f32.mrf.mxu0
        %v947 = vadd.f32 0.0, %v946
        %v948 = vpop.f32.mrf.mxu0
        %v949 = vpop.f32.mrf.mxu0
        %v950 = vadd.f32 0.0, %v949
        %v951 = vpop.f32.mrf.mxu0
        %952 = vdwg.mxu0
        %v953 = vadd.f32 %v784, %v891
        %v954 = vadd.f32 %v785, %v894
        %v955 = vadd.f32 %v786, %v899
        %v956 = vadd.f32 %v787, %v902
        %v957 = vadd.f32 %v788, %v907
        %v958 = vadd.f32 %v789, %v910
        %v959 = vadd.f32 %v790, %v915
        %v960 = vadd.f32 %v791, %v918
        %v961 = vadd.f32 %v792, %v923
        %v962 = vadd.f32 %v793, %v926
        %v963 = vadd.f32 %v794, %v931
        %v964 = vadd.f32 %v795, %v934
        %v965 = vadd.f32 %v796, %v939
        %v966 = vadd.f32 %v797, %v942
        %v967 = vadd.f32 %v798, %v947
        %v968 = vadd.f32 %v799, %v950
        %vm969 = vcmask 72704
        %970 = vst.msk [vmem:[#allocation2] sm:$0xff] %vm969, %v953
        %971 = vst.msk [vmem:[#allocation2 + $0x8] sm:$0xff] %vm969, %v954
        %972 = vst.msk [vmem:[#allocation2 + $0x10] sm:$0xff] %vm969, %v955
        %973 = vst.msk [vmem:[#allocation2 + $0x18] sm:$0xff] %vm969, %v956
        %974 = vst.msk [vmem:[#allocation2 + $0x20] sm:$0xff] %vm969, %v957
        %975 = vst.msk [vmem:[#allocation2 + $0x28] sm:$0xff] %vm969, %v958
        %976 = vst.msk [vmem:[#allocation2 + $0x30] sm:$0xff] %vm969, %v959
        %977 = vst.msk [vmem:[#allocation2 + $0x38] sm:$0xff] %vm969, %v960
        %978 = vst.msk [vmem:[#allocation2 + $0x40] sm:$0xff] %vm969, %v961
        %979 = vst.msk [vmem:[#allocation2 + $0x48] sm:$0xff] %vm969, %v962
        %980 = vst.msk [vmem:[#allocation2 + $0x50] sm:$0xff] %vm969, %v963
        %981 = vst.msk [vmem:[#allocation2 + $0x58] sm:$0xff] %vm969, %v964
        %982 = vst.msk [vmem:[#allocation2 + $0x60] sm:$0xff] %vm969, %v965
        %983 = vst.msk [vmem:[#allocation2 + $0x68] sm:$0xff] %vm969, %v966
        %984 = vst.msk [vmem:[#allocation2 + $0x70] sm:$0xff] %vm969, %v967
        %985 = vst.msk [vmem:[#allocation2 + $0x78] sm:$0xff] %vm969, %v968
        %986 = vset.pattern.permute.xlu0 1
        %987 = vperm.xlu0 %986, %v423
        %v988 = vpop.permute.xlu0 %987
        %990 = vset.pattern.permute.xlu0 1
        %991 = vperm.xlu0 %990, %v424
        %v992 = vpop.permute.xlu0 %991
        %994 = vset.pattern.permute.xlu0 1
        %995 = vperm.xlu0 %994, %v425
        %v996 = vpop.permute.xlu0 %995
        %998 = vset.pattern.permute.xlu0 1
        %999 = vperm.xlu0 %998, %v426
        %v1000 = vpop.permute.xlu0 %999
        %1002 = vset.pattern.permute.xlu0 1
        %1003 = vperm.xlu0 %1002, %v427
        %v1004 = vpop.permute.xlu0 %1003
        %1006 = vset.pattern.permute.xlu0 1
        %1007 = vperm.xlu0 %1006, %v428
        %v1008 = vpop.permute.xlu0 %1007
        %1010 = vset.pattern.permute.xlu0 1
        %1011 = vperm.xlu0 %1010, %v429
        %v1012 = vpop.permute.xlu0 %1011
        %1014 = vset.pattern.permute.xlu0 1
        %1015 = vperm.xlu0 %1014, %v430
        %v1016 = vpop.permute.xlu0 %1015
        %1018 = vset.pattern.permute.xlu0 1
        %1019 = vperm.xlu0 %1018, %v431
        %v1020 = vpop.permute.xlu0 %1019
        %1022 = vset.pattern.permute.xlu0 1
        %1023 = vperm.xlu0 %1022, %v432
        %v1024 = vpop.permute.xlu0 %1023
        %1026 = vset.pattern.permute.xlu0 1
        %1027 = vperm.xlu0 %1026, %v433
        %v1028 = vpop.permute.xlu0 %1027
        %1030 = vset.pattern.permute.xlu0 1
        %1031 = vperm.xlu0 %1030, %v434
        %v1032 = vpop.permute.xlu0 %1031
        %1034 = vset.pattern.permute.xlu0 1
        %1035 = vperm.xlu0 %1034, %v435
        %v1036 = vpop.permute.xlu0 %1035
        %1038 = vset.pattern.permute.xlu0 1
        %1039 = vperm.xlu0 %1038, %v436
        %v1040 = vpop.permute.xlu0 %1039
        %1042 = vset.pattern.permute.xlu0 1
        %1043 = vperm.xlu0 %1042, %v437
        %v1044 = vpop.permute.xlu0 %1043
        %1046 = vset.pattern.permute.xlu0 1
        %1047 = vperm.xlu0 %1046, %v438
        %v1048 = vpop.permute.xlu0 %1047
        %v1050 = vlaneseq
        %v1051 = vshrl.u32 %v1050, 7
        %v1052 = vsub.s32 1, %v1051
        %v1053 = vrot.slane %v455, %v1052
        %v1054 = vadd.f32 %v988, %v1053
        %v1055 = vadd.f32 %v992, %v1053
        %v1056 = vadd.f32 %v996, %v1053
        %v1057 = vadd.f32 %v1000, %v1053
        %v1058 = vadd.f32 %v1004, %v1053
        %v1059 = vadd.f32 %v1008, %v1053
        %v1060 = vadd.f32 %v1012, %v1053
        %v1061 = vadd.f32 %v1016, %v1053
        %v1062 = vadd.f32 %v1020, %v1053
        %v1063 = vadd.f32 %v1024, %v1053
        %v1064 = vadd.f32 %v1028, %v1053
        %v1065 = vadd.f32 %v1032, %v1053
        %v1066 = vadd.f32 %v1036, %v1053
        %v1067 = vadd.f32 %v1040, %v1053
        %v1068 = vadd.f32 %v1044, %v1053
        %v1069 = vadd.f32 %v1048, %v1053
        %v1070 = vmul.f32 %v1054, 0.2
        %v1071 = vmul.f32 %v1055, 0.2
        %v1072 = vmul.f32 %v1056, 0.2
        %v1073 = vmul.f32 %v1057, 0.2
        %v1074 = vmul.f32 %v1058, 0.2
        %v1075 = vmul.f32 %v1059, 0.2
        %v1076 = vmul.f32 %v1060, 0.2
        %v1077 = vmul.f32 %v1061, 0.2
        %v1078 = vmul.f32 %v1062, 0.2
        %v1079 = vmul.f32 %v1063, 0.2
        %v1080 = vmul.f32 %v1064, 0.2
        %v1081 = vmul.f32 %v1065, 0.2
        %v1082 = vmul.f32 %v1066, 0.2
        %v1083 = vmul.f32 %v1067, 0.2
        %v1084 = vmul.f32 %v1068, 0.2
        %v1085 = vmul.f32 %v1069, 0.2
        %v1086 = vmax.f32 %v1054, %v1070
        %v1087 = vmax.f32 %v1055, %v1071
        %v1088 = vmax.f32 %v1056, %v1072
        %v1089 = vmax.f32 %v1057, %v1073
        %v1090 = vmax.f32 %v1058, %v1074
        %v1091 = vmax.f32 %v1059, %v1075
        %v1092 = vmax.f32 %v1060, %v1076
        %v1093 = vmax.f32 %v1061, %v1077
        %v1094 = vmax.f32 %v1062, %v1078
        %v1095 = vmax.f32 %v1063, %v1079
        %v1096 = vmax.f32 %v1064, %v1080
        %v1097 = vmax.f32 %v1065, %v1081
        %v1098 = vmax.f32 %v1066, %v1082
        %v1099 = vmax.f32 %v1067, %v1083
        %v1100 = vmax.f32 %v1068, %v1084
        %v1101 = vmax.f32 %v1069, %v1085
        %1102 = vset.pattern.permute.xlu0 1
        %1103 = vperm.xlu0 %1102, %v439
        %v1104 = vpop.permute.xlu0 %1103
        %1106 = vset.pattern.permute.xlu0 1
        %1107 = vperm.xlu0 %1106, %v440
        %v1108 = vpop.permute.xlu0 %1107
        %1110 = vset.pattern.permute.xlu0 1
        %1111 = vperm.xlu0 %1110, %v441
        %v1112 = vpop.permute.xlu0 %1111
        %1114 = vset.pattern.permute.xlu0 1
        %1115 = vperm.xlu0 %1114, %v442
        %v1116 = vpop.permute.xlu0 %1115
        %1118 = vset.pattern.permute.xlu0 1
        %1119 = vperm.xlu0 %1118, %v443
        %v1120 = vpop.permute.xlu0 %1119
        %1122 = vset.pattern.permute.xlu0 1
        %1123 = vperm.xlu0 %1122, %v444
        %v1124 = vpop.permute.xlu0 %1123
        %1126 = vset.pattern.permute.xlu0 1
        %1127 = vperm.xlu0 %1126, %v445
        %v1128 = vpop.permute.xlu0 %1127
        %1130 = vset.pattern.permute.xlu0 1
        %1131 = vperm.xlu0 %1130, %v446
        %v1132 = vpop.permute.xlu0 %1131
        %1134 = vset.pattern.permute.xlu0 1
        %1135 = vperm.xlu0 %1134, %v447
        %v1136 = vpop.permute.xlu0 %1135
        %1138 = vset.pattern.permute.xlu0 1
        %1139 = vperm.xlu0 %1138, %v448
        %v1140 = vpop.permute.xlu0 %1139
        %1142 = vset.pattern.permute.xlu0 1
        %1143 = vperm.xlu0 %1142, %v449
        %v1144 = vpop.permute.xlu0 %1143
        %1146 = vset.pattern.permute.xlu0 1
        %1147 = vperm.xlu0 %1146, %v450
        %v1148 = vpop.permute.xlu0 %1147
        %1150 = vset.pattern.permute.xlu0 1
        %1151 = vperm.xlu0 %1150, %v451
        %v1152 = vpop.permute.xlu0 %1151
        %1154 = vset.pattern.permute.xlu0 1
        %1155 = vperm.xlu0 %1154, %v452
        %v1156 = vpop.permute.xlu0 %1155
        %1158 = vset.pattern.permute.xlu0 1
        %1159 = vperm.xlu0 %1158, %v453
        %v1160 = vpop.permute.xlu0 %1159
        %1162 = vset.pattern.permute.xlu0 1
        %1163 = vperm.xlu0 %1162, %v454
        %v1164 = vpop.permute.xlu0 %1163
        %v1166 = vsub.f32 %v1086, %v1104
        %v1167 = vsub.f32 %v1087, %v1108
        %v1168 = vsub.f32 %v1088, %v1112
        %v1169 = vsub.f32 %v1089, %v1116
        %v1170 = vsub.f32 %v1090, %v1120
        %v1171 = vsub.f32 %v1091, %v1124
        %v1172 = vsub.f32 %v1092, %v1128
        %v1173 = vsub.f32 %v1093, %v1132
        %v1174 = vsub.f32 %v1094, %v1136
        %v1175 = vsub.f32 %v1095, %v1140
        %v1176 = vsub.f32 %v1096, %v1144
        %v1177 = vsub.f32 %v1097, %v1148
        %v1178 = vsub.f32 %v1098, %v1152
        %v1179 = vsub.f32 %v1099, %v1156
        %v1180 = vsub.f32 %v1100, %v1160
        %v1181 = vsub.f32 %v1101, %v1164
        %v1182 = vmul.f32 %v1166, 1.442695
        %v1183 = vpow.pop %v1182
        %v1184 = vmul.f32 %v1167, 1.442695
        %v1185 = vpow.pop %v1184
        %v1186 = vmul.f32 %v1168, 1.442695
        %v1187 = vpow.pop %v1186
        %v1188 = vmul.f32 %v1169, 1.442695
        %v1189 = vpow.pop %v1188
        %v1190 = vmul.f32 %v1170, 1.442695
        %v1191 = vpow.pop %v1190
        %v1192 = vmul.f32 %v1171, 1.442695
        %v1193 = vpow.pop %v1192
        %v1194 = vmul.f32 %v1172, 1.442695
        %v1195 = vpow.pop %v1194
        %v1196 = vmul.f32 %v1173, 1.442695
        %v1197 = vpow.pop %v1196
        %v1198 = vmul.f32 %v1174, 1.442695
        %v1199 = vpow.pop %v1198
        %v1200 = vmul.f32 %v1175, 1.442695
        %v1201 = vpow.pop %v1200
        %v1202 = vmul.f32 %v1176, 1.442695
        %v1203 = vpow.pop %v1202
        %v1204 = vmul.f32 %v1177, 1.442695
        %v1205 = vpow.pop %v1204
        %v1206 = vmul.f32 %v1178, 1.442695
        %v1207 = vpow.pop %v1206
        %v1208 = vmul.f32 %v1179, 1.442695
        %v1209 = vpow.pop %v1208
        %v1210 = vmul.f32 %v1180, 1.442695
        %v1211 = vpow.pop %v1210
        %v1212 = vmul.f32 %v1181, 1.442695
        %v1213 = vpow.pop %v1212
        %v1214 = vmul.f32 %v1183, %v476
        %v1215 = vmul.f32 %v1185, %v477
        %v1216 = vmul.f32 %v1187, %v478
        %v1217 = vmul.f32 %v1189, %v479
        %v1218 = vmul.f32 %v1191, %v480
        %v1219 = vmul.f32 %v1193, %v481
        %v1220 = vmul.f32 %v1195, %v482
        %v1221 = vmul.f32 %v1197, %v483
        %v1222 = vmul.f32 %v1199, %v484
        %v1223 = vmul.f32 %v1201, %v485
        %v1224 = vmul.f32 %v1203, %v486
        %v1225 = vmul.f32 %v1205, %v487
        %v1226 = vmul.f32 %v1207, %v488
        %v1227 = vmul.f32 %v1209, %v489
        %v1228 = vmul.f32 %v1211, %v490
        %v1229 = vmul.f32 %v1213, %v491
        %v1230 = vld [vmem:[#allocation2] sm:$0xff]
        %v1231 = vld [vmem:[#allocation2 + $0x8] sm:$0xff]
        %v1232 = vld [vmem:[#allocation2 + $0x10] sm:$0xff]
        %v1233 = vld [vmem:[#allocation2 + $0x18] sm:$0xff]
        %v1234 = vld [vmem:[#allocation2 + $0x20] sm:$0xff]
        %v1235 = vld [vmem:[#allocation2 + $0x28] sm:$0xff]
        %v1236 = vld [vmem:[#allocation2 + $0x30] sm:$0xff]
        %v1237 = vld [vmem:[#allocation2 + $0x38] sm:$0xff]
        %v1238 = vld [vmem:[#allocation2 + $0x40] sm:$0xff]
        %v1239 = vld [vmem:[#allocation2 + $0x48] sm:$0xff]
        %v1240 = vld [vmem:[#allocation2 + $0x50] sm:$0xff]
        %v1241 = vld [vmem:[#allocation2 + $0x58] sm:$0xff]
        %v1242 = vld [vmem:[#allocation2 + $0x60] sm:$0xff]
        %v1243 = vld [vmem:[#allocation2 + $0x68] sm:$0xff]
        %v1244 = vld [vmem:[#allocation2 + $0x70] sm:$0xff]
        %v1245 = vld [vmem:[#allocation2 + $0x78] sm:$0xff]
        %v1246 = vpack.c.bf16 %v1215, %v1214
        %v1247 = vpack.c.bf16 %v1217, %v1216
        %v1248 = vpack.c.bf16 %v1219, %v1218
        %v1249 = vpack.c.bf16 %v1221, %v1220
        %v1250 = vpack.c.bf16 %v1223, %v1222
        %v1251 = vpack.c.bf16 %v1225, %v1224
        %v1252 = vpack.c.bf16 %v1227, %v1226
        %v1253 = vpack.c.bf16 %v1229, %v1228
        %1254 = vrot.lane.b32.xlu0 %v840, 119
        %v1255 = vpop.permute.xlu0 %1254
        %1256 = vrot.lane.b32.xlu0 %v841, 119
        %v1257 = vpop.permute.xlu0 %1256
        %1258 = vrot.lane.b32.xlu0 %v842, 119
        %v1259 = vpop.permute.xlu0 %1258
        %1260 = vrot.lane.b32.xlu0 %v843, 119
        %v1261 = vpop.permute.xlu0 %1260
        %1262 = vrot.lane.b32.xlu0 %v844, 119
        %v1263 = vpop.permute.xlu0 %1262
        %1264 = vrot.lane.b32.xlu0 %v845, 119
        %v1265 = vpop.permute.xlu0 %1264
        %1266 = vrot.lane.b32.xlu0 %v846, 119
        %v1267 = vpop.permute.xlu0 %1266
        %1268 = vrot.lane.b32.xlu0 %v847, 119
        %v1269 = vpop.permute.xlu0 %1268
        %1278 = vmatprep.subr.bf16.mxu0 0
        %1279 = vmatpush1.bf16.msra.mxu0 %v1269
        %1280 = vmatprep.subr.bf16.mxu0 0
        %1281 = vmatpush1.bf16.msra.mxu0 %v1267
        %1282 = vmatprep.subr.bf16.mxu0 0
        %1283 = vmatpush1.bf16.msra.mxu0 %v1265
        %1284 = vmatprep.subr.bf16.mxu0 0
        %1285 = vmatpush1.bf16.msra.mxu0 %v1263
        %1286 = vmatprep.subr.bf16.mxu0 0
        %1287 = vmatpush1.bf16.msra.mxu0 %v1261
        %1288 = vmatprep.subr.bf16.mxu0 0
        %1289 = vmatpush1.bf16.msra.mxu0 %v1259
        %1290 = vmatprep.subr.bf16.mxu0 0
        %1291 = vmatpush1.bf16.msra.mxu0 %v1257
        %1292 = vmatprep.subr.bf16.mxu0 0
        %1293 = vmatpush1.bf16.msra.mxu0 %v1255
        %1294 = vmatprep.subr.bf16.mxu0 0
        %1295 = vmatpush2.bf16.msra.mxu0 0
        %1296 = vmatprep.subr.bf16.mxu0 0
        %1297 = vmatpush2.bf16.msra.mxu0 0
        %1298 = vmatprep.subr.bf16.mxu0 0
        %1299 = vmatpush2.bf16.msra.mxu0 0
        %1300 = vmatprep.subr.bf16.mxu0 0
        %1301 = vmatpush2.bf16.msra.mxu0 0
        %1302 = vmatprep.subr.bf16.mxu0 0
        %1303 = vmatpush2.bf16.msra.mxu0 0
        %1304 = vmatprep.subr.bf16.mxu0 0
        %1305 = vmatpush2.bf16.msra.mxu0 0
        %1306 = vmatprep.subr.bf16.mxu0 0
        %1307 = vmatpush2.bf16.msra.mxu0 0
        %1308 = vmatprep.subr.bf16.mxu0 0
        %1309 = vmatpush2.bf16.msra.mxu0 0
        %1310 = vmatprep.mubr.bf16.mxu0 0
        %1311 = vmatmul.mubr.bf16.gmra.mxu0 %v1246
        %v1312 = vpop.f32.mrf.mxu0
        %v1313 = vadd.f32 0.0, %v1312
        %v1314 = vpop.f32.mrf.mxu0
        %v1315 = vpop.f32.mrf.mxu0
        %v1316 = vadd.f32 0.0, %v1315
        %v1317 = vpop.f32.mrf.mxu0
        %1318 = vmatprep.mubr.bf16.mxu0 0
        %1319 = vmatmul.mubr.bf16.gmra.mxu0 %v1247
        %v1320 = vpop.f32.mrf.mxu0
        %v1321 = vadd.f32 0.0, %v1320
        %v1322 = vpop.f32.mrf.mxu0
        %v1323 = vpop.f32.mrf.mxu0
        %v1324 = vadd.f32 0.0, %v1323
        %v1325 = vpop.f32.mrf.mxu0
        %1326 = vmatprep.mubr.bf16.mxu0 0
        %1327 = vmatmul.mubr.bf16.gmra.mxu0 %v1248
        %v1328 = vpop.f32.mrf.mxu0
        %v1329 = vadd.f32 0.0, %v1328
        %v1330 = vpop.f32.mrf.mxu0
        %v1331 = vpop.f32.mrf.mxu0
        %v1332 = vadd.f32 0.0, %v1331
        %v1333 = vpop.f32.mrf.mxu0
        %1334 = vmatprep.mubr.bf16.mxu0 0
        %1335 = vmatmul.mubr.bf16.gmra.mxu0 %v1249
        %v1336 = vpop.f32.mrf.mxu0
        %v1337 = vadd.f32 0.0, %v1336
        %v1338 = vpop.f32.mrf.mxu0
        %v1339 = vpop.f32.mrf.mxu0
        %v1340 = vadd.f32 0.0, %v1339
        %v1341 = vpop.f32.mrf.mxu0
        %1342 = vmatprep.mubr.bf16.mxu0 0
        %1343 = vmatmul.mubr.bf16.gmra.mxu0 %v1250
        %v1344 = vpop.f32.mrf.mxu0
        %v1345 = vadd.f32 0.0, %v1344
        %v1346 = vpop.f32.mrf.mxu0
        %v1347 = vpop.f32.mrf.mxu0
        %v1348 = vadd.f32 0.0, %v1347
        %v1349 = vpop.f32.mrf.mxu0
        %1350 = vmatprep.mubr.bf16.mxu0 0
        %1351 = vmatmul.mubr.bf16.gmra.mxu0 %v1251
        %v1352 = vpop.f32.mrf.mxu0
        %v1353 = vadd.f32 0.0, %v1352
        %v1354 = vpop.f32.mrf.mxu0
        %v1355 = vpop.f32.mrf.mxu0
        %v1356 = vadd.f32 0.0, %v1355
        %v1357 = vpop.f32.mrf.mxu0
        %1358 = vmatprep.mubr.bf16.mxu0 0
        %1359 = vmatmul.mubr.bf16.gmra.mxu0 %v1252
        %v1360 = vpop.f32.mrf.mxu0
        %v1361 = vadd.f32 0.0, %v1360
        %v1362 = vpop.f32.mrf.mxu0
        %v1363 = vpop.f32.mrf.mxu0
        %v1364 = vadd.f32 0.0, %v1363
        %v1365 = vpop.f32.mrf.mxu0
        %1366 = vmatprep.mubr.bf16.mxu0 0
        %1367 = vmatmul.mubr.bf16.gmra.mxu0 %v1253
        %v1368 = vpop.f32.mrf.mxu0
        %v1369 = vadd.f32 0.0, %v1368
        %v1370 = vpop.f32.mrf.mxu0
        %v1371 = vpop.f32.mrf.mxu0
        %v1372 = vadd.f32 0.0, %v1371
        %v1373 = vpop.f32.mrf.mxu0
        %1374 = vdwg.mxu0
        %1391 = vrot.lane.b32.xlu0 %v1313, 9
        %v1392 = vpop.permute.xlu0 %1391
        %1393 = vrot.lane.b32.xlu0 %v1316, 9
        %v1394 = vpop.permute.xlu0 %1393
        %1395 = vrot.lane.b32.xlu0 %v1321, 9
        %v1396 = vpop.permute.xlu0 %1395
        %1397 = vrot.lane.b32.xlu0 %v1324, 9
        %v1398 = vpop.permute.xlu0 %1397
        %1399 = vrot.lane.b32.xlu0 %v1329, 9
        %v1400 = vpop.permute.xlu0 %1399
        %1401 = vrot.lane.b32.xlu0 %v1332, 9
        %v1402 = vpop.permute.xlu0 %1401
        %1403 = vrot.lane.b32.xlu0 %v1337, 9
        %v1404 = vpop.permute.xlu0 %1403
        %1405 = vrot.lane.b32.xlu0 %v1340, 9
        %v1406 = vpop.permute.xlu0 %1405
        %1407 = vrot.lane.b32.xlu0 %v1345, 9
        %v1408 = vpop.permute.xlu0 %1407
        %1409 = vrot.lane.b32.xlu0 %v1348, 9
        %v1410 = vpop.permute.xlu0 %1409
        %1411 = vrot.lane.b32.xlu0 %v1353, 9
        %v1412 = vpop.permute.xlu0 %1411
        %1413 = vrot.lane.b32.xlu0 %v1356, 9
        %v1414 = vpop.permute.xlu0 %1413
        %1415 = vrot.lane.b32.xlu0 %v1361, 9
        %v1416 = vpop.permute.xlu0 %1415
        %1417 = vrot.lane.b32.xlu0 %v1364, 9
        %v1418 = vpop.permute.xlu0 %1417
        %1419 = vrot.lane.b32.xlu0 %v1369, 9
        %v1420 = vpop.permute.xlu0 %1419
        %1421 = vrot.lane.b32.xlu0 %v1372, 9
        %v1422 = vpop.permute.xlu0 %1421
        %v1439 = vadd.f32 %v1230, %v1392
        %v1440 = vadd.f32 %v1231, %v1394
        %v1441 = vadd.f32 %v1232, %v1396
        %v1442 = vadd.f32 %v1233, %v1398
        %v1443 = vadd.f32 %v1234, %v1400
        %v1444 = vadd.f32 %v1235, %v1402
        %v1445 = vadd.f32 %v1236, %v1404
        %v1446 = vadd.f32 %v1237, %v1406
        %v1447 = vadd.f32 %v1238, %v1408
        %v1448 = vadd.f32 %v1239, %v1410
        %v1449 = vadd.f32 %v1240, %v1412
        %v1450 = vadd.f32 %v1241, %v1414
        %v1451 = vadd.f32 %v1242, %v1416
        %v1452 = vadd.f32 %v1243, %v1418
        %v1453 = vadd.f32 %v1244, %v1420
        %v1454 = vadd.f32 %v1245, %v1422
        %vm1455 = vcmask 146504
        %1456 = vst.msk [vmem:[#allocation2] sm:$0xff] %vm1455, %v1439
        %1457 = vst.msk [vmem:[#allocation2 + $0x8] sm:$0xff] %vm1455, %v1440
        %1458 = vst.msk [vmem:[#allocation2 + $0x10] sm:$0xff] %vm1455, %v1441
        %1459 = vst.msk [vmem:[#allocation2 + $0x18] sm:$0xff] %vm1455, %v1442
        %1460 = vst.msk [vmem:[#allocation2 + $0x20] sm:$0xff] %vm1455, %v1443
        %1461 = vst.msk [vmem:[#allocation2 + $0x28] sm:$0xff] %vm1455, %v1444
        %1462 = vst.msk [vmem:[#allocation2 + $0x30] sm:$0xff] %vm1455, %v1445
        %1463 = vst.msk [vmem:[#allocation2 + $0x38] sm:$0xff] %vm1455, %v1446
        %1464 = vst.msk [vmem:[#allocation2 + $0x40] sm:$0xff] %vm1455, %v1447
        %1465 = vst.msk [vmem:[#allocation2 + $0x48] sm:$0xff] %vm1455, %v1448
        %1466 = vst.msk [vmem:[#allocation2 + $0x50] sm:$0xff] %vm1455, %v1449
        %1467 = vst.msk [vmem:[#allocation2 + $0x58] sm:$0xff] %vm1455, %v1450
        %1468 = vst.msk [vmem:[#allocation2 + $0x60] sm:$0xff] %vm1455, %v1451
        %1469 = vst.msk [vmem:[#allocation2 + $0x68] sm:$0xff] %vm1455, %v1452
        %1470 = vst.msk [vmem:[#allocation2 + $0x70] sm:$0xff] %vm1455, %v1453
        %1471 = vst.msk [vmem:[#allocation2 + $0x78] sm:$0xff] %vm1455, %v1454
        %1472 = vset.pattern.permute.xlu0 2
        %1473 = vperm.xlu0 %1472, %v423
        %v1474 = vpop.permute.xlu0 %1473
        %1476 = vset.pattern.permute.xlu0 2
        %1477 = vperm.xlu0 %1476, %v424
        %v1478 = vpop.permute.xlu0 %1477
        %1480 = vset.pattern.permute.xlu0 2
        %1481 = vperm.xlu0 %1480, %v425
        %v1482 = vpop.permute.xlu0 %1481
        %1484 = vset.pattern.permute.xlu0 2
        %1485 = vperm.xlu0 %1484, %v426
        %v1486 = vpop.permute.xlu0 %1485
        %1488 = vset.pattern.permute.xlu0 2
        %1489 = vperm.xlu0 %1488, %v427
        %v1490 = vpop.permute.xlu0 %1489
        %1492 = vset.pattern.permute.xlu0 2
        %1493 = vperm.xlu0 %1492, %v428
        %v1494 = vpop.permute.xlu0 %1493
        %1496 = vset.pattern.permute.xlu0 2
        %1497 = vperm.xlu0 %1496, %v429
        %v1498 = vpop.permute.xlu0 %1497
        %1500 = vset.pattern.permute.xlu0 2
        %1501 = vperm.xlu0 %1500, %v430
        %v1502 = vpop.permute.xlu0 %1501
        %1504 = vset.pattern.permute.xlu0 2
        %1505 = vperm.xlu0 %1504, %v431
        %v1506 = vpop.permute.xlu0 %1505
        %1508 = vset.pattern.permute.xlu0 2
        %1509 = vperm.xlu0 %1508, %v432
        %v1510 = vpop.permute.xlu0 %1509
        %1512 = vset.pattern.permute.xlu0 2
        %1513 = vperm.xlu0 %1512, %v433
        %v1514 = vpop.permute.xlu0 %1513
        %1516 = vset.pattern.permute.xlu0 2
        %1517 = vperm.xlu0 %1516, %v434
        %v1518 = vpop.permute.xlu0 %1517
        %1520 = vset.pattern.permute.xlu0 2
        %1521 = vperm.xlu0 %1520, %v435
        %v1522 = vpop.permute.xlu0 %1521
        %1524 = vset.pattern.permute.xlu0 2
        %1525 = vperm.xlu0 %1524, %v436
        %v1526 = vpop.permute.xlu0 %1525
        %1528 = vset.pattern.permute.xlu0 2
        %1529 = vperm.xlu0 %1528, %v437
        %v1530 = vpop.permute.xlu0 %1529
        %1532 = vset.pattern.permute.xlu0 2
        %1533 = vperm.xlu0 %1532, %v438
        %v1534 = vpop.permute.xlu0 %1533
        %v1536 = vlaneseq
        %v1537 = vshrl.u32 %v1536, 7
        %v1538 = vsub.s32 2, %v1537
        %v1539 = vrot.slane %v455, %v1538
        %v1540 = vadd.f32 %v1474, %v1539
        %v1541 = vadd.f32 %v1478, %v1539
        %v1542 = vadd.f32 %v1482, %v1539
        %v1543 = vadd.f32 %v1486, %v1539
        %v1544 = vadd.f32 %v1490, %v1539
        %v1545 = vadd.f32 %v1494, %v1539
        %v1546 = vadd.f32 %v1498, %v1539
        %v1547 = vadd.f32 %v1502, %v1539
        %v1548 = vadd.f32 %v1506, %v1539
        %v1549 = vadd.f32 %v1510, %v1539
        %v1550 = vadd.f32 %v1514, %v1539
        %v1551 = vadd.f32 %v1518, %v1539
        %v1552 = vadd.f32 %v1522, %v1539
        %v1553 = vadd.f32 %v1526, %v1539
        %v1554 = vadd.f32 %v1530, %v1539
        %v1555 = vadd.f32 %v1534, %v1539
        %v1556 = vmul.f32 %v1540, 0.2
        %v1557 = vmul.f32 %v1541, 0.2
        %v1558 = vmul.f32 %v1542, 0.2
        %v1559 = vmul.f32 %v1543, 0.2
        %v1560 = vmul.f32 %v1544, 0.2
        %v1561 = vmul.f32 %v1545, 0.2
        %v1562 = vmul.f32 %v1546, 0.2
        %v1563 = vmul.f32 %v1547, 0.2
        %v1564 = vmul.f32 %v1548, 0.2
        %v1565 = vmul.f32 %v1549, 0.2
        %v1566 = vmul.f32 %v1550, 0.2
        %v1567 = vmul.f32 %v1551, 0.2
        %v1568 = vmul.f32 %v1552, 0.2
        %v1569 = vmul.f32 %v1553, 0.2
        %v1570 = vmul.f32 %v1554, 0.2
        %v1571 = vmul.f32 %v1555, 0.2
        %v1572 = vmax.f32 %v1540, %v1556
        %v1573 = vmax.f32 %v1541, %v1557
        %v1574 = vmax.f32 %v1542, %v1558
        %v1575 = vmax.f32 %v1543, %v1559
        %v1576 = vmax.f32 %v1544, %v1560
        %v1577 = vmax.f32 %v1545, %v1561
        %v1578 = vmax.f32 %v1546, %v1562
        %v1579 = vmax.f32 %v1547, %v1563
        %v1580 = vmax.f32 %v1548, %v1564
        %v1581 = vmax.f32 %v1549, %v1565
        %v1582 = vmax.f32 %v1550, %v1566
        %v1583 = vmax.f32 %v1551, %v1567
        %v1584 = vmax.f32 %v1552, %v1568
        %v1585 = vmax.f32 %v1553, %v1569
        %v1586 = vmax.f32 %v1554, %v1570
        %v1587 = vmax.f32 %v1555, %v1571
        %1588 = vset.pattern.permute.xlu0 2
        %1589 = vperm.xlu0 %1588, %v439
        %v1590 = vpop.permute.xlu0 %1589
        %1592 = vset.pattern.permute.xlu0 2
        %1593 = vperm.xlu0 %1592, %v440
        %v1594 = vpop.permute.xlu0 %1593
        %1596 = vset.pattern.permute.xlu0 2
        %1597 = vperm.xlu0 %1596, %v441
        %v1598 = vpop.permute.xlu0 %1597
        %1600 = vset.pattern.permute.xlu0 2
        %1601 = vperm.xlu0 %1600, %v442
        %v1602 = vpop.permute.xlu0 %1601
        %1604 = vset.pattern.permute.xlu0 2
        %1605 = vperm.xlu0 %1604, %v443
        %v1606 = vpop.permute.xlu0 %1605
        %1608 = vset.pattern.permute.xlu0 2
        %1609 = vperm.xlu0 %1608, %v444
        %v1610 = vpop.permute.xlu0 %1609
        %1612 = vset.pattern.permute.xlu0 2
        %1613 = vperm.xlu0 %1612, %v445
        %v1614 = vpop.permute.xlu0 %1613
        %1616 = vset.pattern.permute.xlu0 2
        %1617 = vperm.xlu0 %1616, %v446
        %v1618 = vpop.permute.xlu0 %1617
        %1620 = vset.pattern.permute.xlu0 2
        %1621 = vperm.xlu0 %1620, %v447
        %v1622 = vpop.permute.xlu0 %1621
        %1624 = vset.pattern.permute.xlu0 2
        %1625 = vperm.xlu0 %1624, %v448
        %v1626 = vpop.permute.xlu0 %1625
        %1628 = vset.pattern.permute.xlu0 2
        %1629 = vperm.xlu0 %1628, %v449
        %v1630 = vpop.permute.xlu0 %1629
        %1632 = vset.pattern.permute.xlu0 2
        %1633 = vperm.xlu0 %1632, %v450
        %v1634 = vpop.permute.xlu0 %1633
        %1636 = vset.pattern.permute.xlu0 2
        %1637 = vperm.xlu0 %1636, %v451
        %v1638 = vpop.permute.xlu0 %1637
        %1640 = vset.pattern.permute.xlu0 2
        %1641 = vperm.xlu0 %1640, %v452
        %v1642 = vpop.permute.xlu0 %1641
        %1644 = vset.pattern.permute.xlu0 2
        %1645 = vperm.xlu0 %1644, %v453
        %v1646 = vpop.permute.xlu0 %1645
        %1648 = vset.pattern.permute.xlu0 2
        %1649 = vperm.xlu0 %1648, %v454
        %v1650 = vpop.permute.xlu0 %1649
        %v1652 = vsub.f32 %v1572, %v1590
        %v1653 = vsub.f32 %v1573, %v1594
        %v1654 = vsub.f32 %v1574, %v1598
        %v1655 = vsub.f32 %v1575, %v1602
        %v1656 = vsub.f32 %v1576, %v1606
        %v1657 = vsub.f32 %v1577, %v1610
        %v1658 = vsub.f32 %v1578, %v1614
        %v1659 = vsub.f32 %v1579, %v1618
        %v1660 = vsub.f32 %v1580, %v1622
        %v1661 = vsub.f32 %v1581, %v1626
        %v1662 = vsub.f32 %v1582, %v1630
        %v1663 = vsub.f32 %v1583, %v1634
        %v1664 = vsub.f32 %v1584, %v1638
        %v1665 = vsub.f32 %v1585, %v1642
        %v1666 = vsub.f32 %v1586, %v1646
        %v1667 = vsub.f32 %v1587, %v1650
        %v1668 = vmul.f32 %v1652, 1.442695
        %v1669 = vpow.pop %v1668
        %v1670 = vmul.f32 %v1653, 1.442695
        %v1671 = vpow.pop %v1670
        %v1672 = vmul.f32 %v1654, 1.442695
        %v1673 = vpow.pop %v1672
        %v1674 = vmul.f32 %v1655, 1.442695
        %v1675 = vpow.pop %v1674
        %v1676 = vmul.f32 %v1656, 1.442695
        %v1677 = vpow.pop %v1676
        %v1678 = vmul.f32 %v1657, 1.442695
        %v1679 = vpow.pop %v1678
        %v1680 = vmul.f32 %v1658, 1.442695
        %v1681 = vpow.pop %v1680
        %v1682 = vmul.f32 %v1659, 1.442695
        %v1683 = vpow.pop %v1682
        %v1684 = vmul.f32 %v1660, 1.442695
        %v1685 = vpow.pop %v1684
        %v1686 = vmul.f32 %v1661, 1.442695
        %v1687 = vpow.pop %v1686
        %v1688 = vmul.f32 %v1662, 1.442695
        %v1689 = vpow.pop %v1688
        %v1690 = vmul.f32 %v1663, 1.442695
        %v1691 = vpow.pop %v1690
        %v1692 = vmul.f32 %v1664, 1.442695
        %v1693 = vpow.pop %v1692
        %v1694 = vmul.f32 %v1665, 1.442695
        %v1695 = vpow.pop %v1694
        %v1696 = vmul.f32 %v1666, 1.442695
        %v1697 = vpow.pop %v1696
        %v1698 = vmul.f32 %v1667, 1.442695
        %v1699 = vpow.pop %v1698
        %v1700 = vmul.f32 %v1669, %v476
        %v1701 = vmul.f32 %v1671, %v477
        %v1702 = vmul.f32 %v1673, %v478
        %v1703 = vmul.f32 %v1675, %v479
        %v1704 = vmul.f32 %v1677, %v480
        %v1705 = vmul.f32 %v1679, %v481
        %v1706 = vmul.f32 %v1681, %v482
        %v1707 = vmul.f32 %v1683, %v483
        %v1708 = vmul.f32 %v1685, %v484
        %v1709 = vmul.f32 %v1687, %v485
        %v1710 = vmul.f32 %v1689, %v486
        %v1711 = vmul.f32 %v1691, %v487
        %v1712 = vmul.f32 %v1693, %v488
        %v1713 = vmul.f32 %v1695, %v489
        %v1714 = vmul.f32 %v1697, %v490
        %v1715 = vmul.f32 %v1699, %v491
        %v1716 = vld [vmem:[#allocation2] sm:$0xff]
        %v1717 = vld [vmem:[#allocation2 + $0x8] sm:$0xff]
        %v1718 = vld [vmem:[#allocation2 + $0x10] sm:$0xff]
        %v1719 = vld [vmem:[#allocation2 + $0x18] sm:$0xff]
        %v1720 = vld [vmem:[#allocation2 + $0x20] sm:$0xff]
        %v1721 = vld [vmem:[#allocation2 + $0x28] sm:$0xff]
        %v1722 = vld [vmem:[#allocation2 + $0x30] sm:$0xff]
        %v1723 = vld [vmem:[#allocation2 + $0x38] sm:$0xff]
        %v1724 = vld [vmem:[#allocation2 + $0x40] sm:$0xff]
        %v1725 = vld [vmem:[#allocation2 + $0x48] sm:$0xff]
        %v1726 = vld [vmem:[#allocation2 + $0x50] sm:$0xff]
        %v1727 = vld [vmem:[#allocation2 + $0x58] sm:$0xff]
        %v1728 = vld [vmem:[#allocation2 + $0x60] sm:$0xff]
        %v1729 = vld [vmem:[#allocation2 + $0x68] sm:$0xff]
        %v1730 = vld [vmem:[#allocation2 + $0x70] sm:$0xff]
        %v1731 = vld [vmem:[#allocation2 + $0x78] sm:$0xff]
        %v1732 = vpack.c.bf16 %v1701, %v1700
        %v1733 = vpack.c.bf16 %v1703, %v1702
        %v1734 = vpack.c.bf16 %v1705, %v1704
        %v1735 = vpack.c.bf16 %v1707, %v1706
        %v1736 = vpack.c.bf16 %v1709, %v1708
        %v1737 = vpack.c.bf16 %v1711, %v1710
        %v1738 = vpack.c.bf16 %v1713, %v1712
        %v1739 = vpack.c.bf16 %v1715, %v1714
        %1740 = vrot.lane.b32.xlu0 %v840, 110
        %v1741 = vpop.permute.xlu0 %1740
        %1742 = vrot.lane.b32.xlu0 %v841, 110
        %v1743 = vpop.permute.xlu0 %1742
        %1744 = vrot.lane.b32.xlu0 %v842, 110
        %v1745 = vpop.permute.xlu0 %1744
        %1746 = vrot.lane.b32.xlu0 %v843, 110
        %v1747 = vpop.permute.xlu0 %1746
        %1748 = vrot.lane.b32.xlu0 %v844, 110
        %v1749 = vpop.permute.xlu0 %1748
        %1750 = vrot.lane.b32.xlu0 %v845, 110
        %v1751 = vpop.permute.xlu0 %1750
        %1752 = vrot.lane.b32.xlu0 %v846, 110
        %v1753 = vpop.permute.xlu0 %1752
        %1754 = vrot.lane.b32.xlu0 %v847, 110
        %v1755 = vpop.permute.xlu0 %1754
        %1764 = vmatprep.subr.bf16.mxu0 0
        %1765 = vmatpush1.bf16.msra.mxu0 %v1755
        %1766 = vmatprep.subr.bf16.mxu0 0
        %1767 = vmatpush1.bf16.msra.mxu0 %v1753
        %1768 = vmatprep.subr.bf16.mxu0 0
        %1769 = vmatpush1.bf16.msra.mxu0 %v1751
        %1770 = vmatprep.subr.bf16.mxu0 0
        %1771 = vmatpush1.bf16.msra.mxu0 %v1749
        %1772 = vmatprep.subr.bf16.mxu0 0
        %1773 = vmatpush1.bf16.msra.mxu0 %v1747
        %1774 = vmatprep.subr.bf16.mxu0 0
        %1775 = vmatpush1.bf16.msra.mxu0 %v1745
        %1776 = vmatprep.subr.bf16.mxu0 0
        %1777 = vmatpush1.bf16.msra.mxu0 %v1743
        %1778 = vmatprep.subr.bf16.mxu0 0
        %1779 = vmatpush1.bf16.msra.mxu0 %v1741
        %1780 = vmatprep.subr.bf16.mxu0 0
        %1781 = vmatpush2.bf16.msra.mxu0 0
        %1782 = vmatprep.subr.bf16.mxu0 0
        %1783 = vmatpush2.bf16.msra.mxu0 0
        %1784 = vmatprep.subr.bf16.mxu0 0
        %1785 = vmatpush2.bf16.msra.mxu0 0
        %1786 = vmatprep.subr.bf16.mxu0 0
        %1787 = vmatpush2.bf16.msra.mxu0 0
        %1788 = vmatprep.subr.bf16.mxu0 0
        %1789 = vmatpush2.bf16.msra.mxu0 0
        %1790 = vmatprep.subr.bf16.mxu0 0
        %1791 = vmatpush2.bf16.msra.mxu0 0
        %1792 = vmatprep.subr.bf16.mxu0 0
        %1793 = vmatpush2.bf16.msra.mxu0 0
        %1794 = vmatprep.subr.bf16.mxu0 0
        %1795 = vmatpush2.bf16.msra.mxu0 0
        %1796 = vmatprep.mubr.bf16.mxu0 0
        %1797 = vmatmul.mubr.bf16.gmra.mxu0 %v1732
        %v1798 = vpop.f32.mrf.mxu0
        %v1799 = vadd.f32 0.0, %v1798
        %v1800 = vpop.f32.mrf.mxu0
        %v1801 = vpop.f32.mrf.mxu0
        %v1802 = vadd.f32 0.0, %v1801
        %v1803 = vpop.f32.mrf.mxu0
        %1804 = vmatprep.mubr.bf16.mxu0 0
        %1805 = vmatmul.mubr.bf16.gmra.mxu0 %v1733
        %v1806 = vpop.f32.mrf.mxu0
        %v1807 = vadd.f32 0.0, %v1806
        %v1808 = vpop.f32.mrf.mxu0
        %v1809 = vpop.f32.mrf.mxu0
        %v1810 = vadd.f32 0.0, %v1809
        %v1811 = vpop.f32.mrf.mxu0
        %1812 = vmatprep.mubr.bf16.mxu0 0
        %1813 = vmatmul.mubr.bf16.gmra.mxu0 %v1734
        %v1814 = vpop.f32.mrf.mxu0
        %v1815 = vadd.f32 0.0, %v1814
        %v1816 = vpop.f32.mrf.mxu0
        %v1817 = vpop.f32.mrf.mxu0
        %v1818 = vadd.f32 0.0, %v1817
        %v1819 = vpop.f32.mrf.mxu0
        %1820 = vmatprep.mubr.bf16.mxu0 0
        %1821 = vmatmul.mubr.bf16.gmra.mxu0 %v1735
        %v1822 = vpop.f32.mrf.mxu0
        %v1823 = vadd.f32 0.0, %v1822
        %v1824 = vpop.f32.mrf.mxu0
        %v1825 = vpop.f32.mrf.mxu0
        %v1826 = vadd.f32 0.0, %v1825
        %v1827 = vpop.f32.mrf.mxu0
        %1828 = vmatprep.mubr.bf16.mxu0 0
        %1829 = vmatmul.mubr.bf16.gmra.mxu0 %v1736
        %v1830 = vpop.f32.mrf.mxu0
        %v1831 = vadd.f32 0.0, %v1830
        %v1832 = vpop.f32.mrf.mxu0
        %v1833 = vpop.f32.mrf.mxu0
        %v1834 = vadd.f32 0.0, %v1833
        %v1835 = vpop.f32.mrf.mxu0
        %1836 = vmatprep.mubr.bf16.mxu0 0
        %1837 = vmatmul.mubr.bf16.gmra.mxu0 %v1737
        %v1838 = vpop.f32.mrf.mxu0
        %v1839 = vadd.f32 0.0, %v1838
        %v1840 = vpop.f32.mrf.mxu0
        %v1841 = vpop.f32.mrf.mxu0
        %v1842 = vadd.f32 0.0, %v1841
        %v1843 = vpop.f32.mrf.mxu0
        %1844 = vmatprep.mubr.bf16.mxu0 0
        %1845 = vmatmul.mubr.bf16.gmra.mxu0 %v1738
        %v1846 = vpop.f32.mrf.mxu0
        %v1847 = vadd.f32 0.0, %v1846
        %v1848 = vpop.f32.mrf.mxu0
        %v1849 = vpop.f32.mrf.mxu0
        %v1850 = vadd.f32 0.0, %v1849
        %v1851 = vpop.f32.mrf.mxu0
        %1852 = vmatprep.mubr.bf16.mxu0 0
        %1853 = vmatmul.mubr.bf16.gmra.mxu0 %v1739
        %v1854 = vpop.f32.mrf.mxu0
        %v1855 = vadd.f32 0.0, %v1854
        %v1856 = vpop.f32.mrf.mxu0
        %v1857 = vpop.f32.mrf.mxu0
        %v1858 = vadd.f32 0.0, %v1857
        %v1859 = vpop.f32.mrf.mxu0
        %1860 = vdwg.mxu0
        %1877 = vrot.lane.b32.xlu0 %v1799, 18
        %v1878 = vpop.permute.xlu0 %1877
        %1879 = vrot.lane.b32.xlu0 %v1802, 18
        %v1880 = vpop.permute.xlu0 %1879
        %1881 = vrot.lane.b32.xlu0 %v1807, 18
        %v1882 = vpop.permute.xlu0 %1881
        %1883 = vrot.lane.b32.xlu0 %v1810, 18
        %v1884 = vpop.permute.xlu0 %1883
        %1885 = vrot.lane.b32.xlu0 %v1815, 18
        %v1886 = vpop.permute.xlu0 %1885
        %1887 = vrot.lane.b32.xlu0 %v1818, 18
        %v1888 = vpop.permute.xlu0 %1887
        %1889 = vrot.lane.b32.xlu0 %v1823, 18
        %v1890 = vpop.permute.xlu0 %1889
        %1891 = vrot.lane.b32.xlu0 %v1826, 18
        %v1892 = vpop.permute.xlu0 %1891
        %1893 = vrot.lane.b32.xlu0 %v1831, 18
        %v1894 = vpop.permute.xlu0 %1893
        %1895 = vrot.lane.b32.xlu0 %v1834, 18
        %v1896 = vpop.permute.xlu0 %1895
        %1897 = vrot.lane.b32.xlu0 %v1839, 18
        %v1898 = vpop.permute.xlu0 %1897
        %1899 = vrot.lane.b32.xlu0 %v1842, 18
        %v1900 = vpop.permute.xlu0 %1899
        %1901 = vrot.lane.b32.xlu0 %v1847, 18
        %v1902 = vpop.permute.xlu0 %1901
        %1903 = vrot.lane.b32.xlu0 %v1850, 18
        %v1904 = vpop.permute.xlu0 %1903
        %1905 = vrot.lane.b32.xlu0 %v1855, 18
        %v1906 = vpop.permute.xlu0 %1905
        %1907 = vrot.lane.b32.xlu0 %v1858, 18
        %v1908 = vpop.permute.xlu0 %1907
        %v1925 = vadd.f32 %v1716, %v1878
        %v1926 = vadd.f32 %v1717, %v1880
        %v1927 = vadd.f32 %v1718, %v1882
        %v1928 = vadd.f32 %v1719, %v1884
        %v1929 = vadd.f32 %v1720, %v1886
        %v1930 = vadd.f32 %v1721, %v1888
        %v1931 = vadd.f32 %v1722, %v1890
        %v1932 = vadd.f32 %v1723, %v1892
        %v1933 = vadd.f32 %v1724, %v1894
        %v1934 = vadd.f32 %v1725, %v1896
        %v1935 = vadd.f32 %v1726, %v1898
        %v1936 = vadd.f32 %v1727, %v1900
        %v1937 = vadd.f32 %v1728, %v1902
        %v1938 = vadd.f32 %v1729, %v1904
        %v1939 = vadd.f32 %v1730, %v1906
        %v1940 = vadd.f32 %v1731, %v1908
        %vm1941 = vcmask 220304
        %1942 = vst.msk [vmem:[#allocation2] sm:$0xff] %vm1941, %v1925
        %1943 = vst.msk [vmem:[#allocation2 + $0x8] sm:$0xff] %vm1941, %v1926
        %1944 = vst.msk [vmem:[#allocation2 + $0x10] sm:$0xff] %vm1941, %v1927
        %1945 = vst.msk [vmem:[#allocation2 + $0x18] sm:$0xff] %vm1941, %v1928
        %1946 = vst.msk [vmem:[#allocation2 + $0x20] sm:$0xff] %vm1941, %v1929
        %1947 = vst.msk [vmem:[#allocation2 + $0x28] sm:$0xff] %vm1941, %v1930
        %1948 = vst.msk [vmem:[#allocation2 + $0x30] sm:$0xff] %vm1941, %v1931
        %1949 = vst.msk [vmem:[#allocation2 + $0x38] sm:$0xff] %vm1941, %v1932
        %1950 = vst.msk [vmem:[#allocation2 + $0x40] sm:$0xff] %vm1941, %v1933
        %1951 = vst.msk [vmem:[#allocation2 + $0x48] sm:$0xff] %vm1941, %v1934
        %1952 = vst.msk [vmem:[#allocation2 + $0x50] sm:$0xff] %vm1941, %v1935
        %1953 = vst.msk [vmem:[#allocation2 + $0x58] sm:$0xff] %vm1941, %v1936
        %1954 = vst.msk [vmem:[#allocation2 + $0x60] sm:$0xff] %vm1941, %v1937
        %1955 = vst.msk [vmem:[#allocation2 + $0x68] sm:$0xff] %vm1941, %v1938
        %1956 = vst.msk [vmem:[#allocation2 + $0x70] sm:$0xff] %vm1941, %v1939
        %1957 = vst.msk [vmem:[#allocation2 + $0x78] sm:$0xff] %vm1941, %v1940
        %1958 = vset.pattern.permute.xlu0 3
        %1959 = vperm.xlu0 %1958, %v423
        %v1960 = vpop.permute.xlu0 %1959
        %1962 = vset.pattern.permute.xlu0 3
        %1963 = vperm.xlu0 %1962, %v424
        %v1964 = vpop.permute.xlu0 %1963
        %1966 = vset.pattern.permute.xlu0 3
        %1967 = vperm.xlu0 %1966, %v425
        %v1968 = vpop.permute.xlu0 %1967
        %1970 = vset.pattern.permute.xlu0 3
        %1971 = vperm.xlu0 %1970, %v426
        %v1972 = vpop.permute.xlu0 %1971
        %1974 = vset.pattern.permute.xlu0 3
        %1975 = vperm.xlu0 %1974, %v427
        %v1976 = vpop.permute.xlu0 %1975
        %1978 = vset.pattern.permute.xlu0 3
        %1979 = vperm.xlu0 %1978, %v428
        %v1980 = vpop.permute.xlu0 %1979
        %1982 = vset.pattern.permute.xlu0 3
        %1983 = vperm.xlu0 %1982, %v429
        %v1984 = vpop.permute.xlu0 %1983
        %1986 = vset.pattern.permute.xlu0 3
        %1987 = vperm.xlu0 %1986, %v430
        %v1988 = vpop.permute.xlu0 %1987
        %1990 = vset.pattern.permute.xlu0 3
        %1991 = vperm.xlu0 %1990, %v431
        %v1992 = vpop.permute.xlu0 %1991
        %1994 = vset.pattern.permute.xlu0 3
        %1995 = vperm.xlu0 %1994, %v432
        %v1996 = vpop.permute.xlu0 %1995
        %1998 = vset.pattern.permute.xlu0 3
        %1999 = vperm.xlu0 %1998, %v433
        %v2000 = vpop.permute.xlu0 %1999
        %2002 = vset.pattern.permute.xlu0 3
        %2003 = vperm.xlu0 %2002, %v434
        %v2004 = vpop.permute.xlu0 %2003
        %2006 = vset.pattern.permute.xlu0 3
        %2007 = vperm.xlu0 %2006, %v435
        %v2008 = vpop.permute.xlu0 %2007
        %2010 = vset.pattern.permute.xlu0 3
        %2011 = vperm.xlu0 %2010, %v436
        %v2012 = vpop.permute.xlu0 %2011
        %2014 = vset.pattern.permute.xlu0 3
        %2015 = vperm.xlu0 %2014, %v437
        %v2016 = vpop.permute.xlu0 %2015
        %2018 = vset.pattern.permute.xlu0 3
        %2019 = vperm.xlu0 %2018, %v438
        %v2020 = vpop.permute.xlu0 %2019
        %v2022 = vlaneseq
        %v2023 = vshrl.u32 %v2022, 7
        %v2024 = vsub.s32 3, %v2023
        %v2025 = vrot.slane %v455, %v2024
        %v2026 = vadd.f32 %v1960, %v2025
        %v2027 = vadd.f32 %v1964, %v2025
        %v2028 = vadd.f32 %v1968, %v2025
        %v2029 = vadd.f32 %v1972, %v2025
        %v2030 = vadd.f32 %v1976, %v2025
        %v2031 = vadd.f32 %v1980, %v2025
        %v2032 = vadd.f32 %v1984, %v2025
        %v2033 = vadd.f32 %v1988, %v2025
        %v2034 = vadd.f32 %v1992, %v2025
        %v2035 = vadd.f32 %v1996, %v2025
        %v2036 = vadd.f32 %v2000, %v2025
        %v2037 = vadd.f32 %v2004, %v2025
        %v2038 = vadd.f32 %v2008, %v2025
        %v2039 = vadd.f32 %v2012, %v2025
        %v2040 = vadd.f32 %v2016, %v2025
        %v2041 = vadd.f32 %v2020, %v2025
        %v2042 = vmul.f32 %v2026, 0.2
        %v2043 = vmul.f32 %v2027, 0.2
        %v2044 = vmul.f32 %v2028, 0.2
        %v2045 = vmul.f32 %v2029, 0.2
        %v2046 = vmul.f32 %v2030, 0.2
        %v2047 = vmul.f32 %v2031, 0.2
        %v2048 = vmul.f32 %v2032, 0.2
        %v2049 = vmul.f32 %v2033, 0.2
        %v2050 = vmul.f32 %v2034, 0.2
        %v2051 = vmul.f32 %v2035, 0.2
        %v2052 = vmul.f32 %v2036, 0.2
        %v2053 = vmul.f32 %v2037, 0.2
        %v2054 = vmul.f32 %v2038, 0.2
        %v2055 = vmul.f32 %v2039, 0.2
        %v2056 = vmul.f32 %v2040, 0.2
        %v2057 = vmul.f32 %v2041, 0.2
        %v2058 = vmax.f32 %v2026, %v2042
        %v2059 = vmax.f32 %v2027, %v2043
        %v2060 = vmax.f32 %v2028, %v2044
        %v2061 = vmax.f32 %v2029, %v2045
        %v2062 = vmax.f32 %v2030, %v2046
        %v2063 = vmax.f32 %v2031, %v2047
        %v2064 = vmax.f32 %v2032, %v2048
        %v2065 = vmax.f32 %v2033, %v2049
        %v2066 = vmax.f32 %v2034, %v2050
        %v2067 = vmax.f32 %v2035, %v2051
        %v2068 = vmax.f32 %v2036, %v2052
        %v2069 = vmax.f32 %v2037, %v2053
        %v2070 = vmax.f32 %v2038, %v2054
        %v2071 = vmax.f32 %v2039, %v2055
        %v2072 = vmax.f32 %v2040, %v2056
        %v2073 = vmax.f32 %v2041, %v2057
        %2074 = vset.pattern.permute.xlu0 3
        %2075 = vperm.xlu0 %2074, %v439
        %v2076 = vpop.permute.xlu0 %2075
        %2078 = vset.pattern.permute.xlu0 3
        %2079 = vperm.xlu0 %2078, %v440
        %v2080 = vpop.permute.xlu0 %2079
        %2082 = vset.pattern.permute.xlu0 3
        %2083 = vperm.xlu0 %2082, %v441
        %v2084 = vpop.permute.xlu0 %2083
        %2086 = vset.pattern.permute.xlu0 3
        %2087 = vperm.xlu0 %2086, %v442
        %v2088 = vpop.permute.xlu0 %2087
        %2090 = vset.pattern.permute.xlu0 3
        %2091 = vperm.xlu0 %2090, %v443
        %v2092 = vpop.permute.xlu0 %2091
        %2094 = vset.pattern.permute.xlu0 3
        %2095 = vperm.xlu0 %2094, %v444
        %v2096 = vpop.permute.xlu0 %2095
        %2098 = vset.pattern.permute.xlu0 3
        %2099 = vperm.xlu0 %2098, %v445
        %v2100 = vpop.permute.xlu0 %2099
        %2102 = vset.pattern.permute.xlu0 3
        %2103 = vperm.xlu0 %2102, %v446
        %v2104 = vpop.permute.xlu0 %2103
        %2106 = vset.pattern.permute.xlu0 3
        %2107 = vperm.xlu0 %2106, %v447
        %v2108 = vpop.permute.xlu0 %2107
        %2110 = vset.pattern.permute.xlu0 3
        %2111 = vperm.xlu0 %2110, %v448
        %v2112 = vpop.permute.xlu0 %2111
        %2114 = vset.pattern.permute.xlu0 3
        %2115 = vperm.xlu0 %2114, %v449
        %v2116 = vpop.permute.xlu0 %2115
        %2118 = vset.pattern.permute.xlu0 3
        %2119 = vperm.xlu0 %2118, %v450
        %v2120 = vpop.permute.xlu0 %2119
        %2122 = vset.pattern.permute.xlu0 3
        %2123 = vperm.xlu0 %2122, %v451
        %v2124 = vpop.permute.xlu0 %2123
        %2126 = vset.pattern.permute.xlu0 3
        %2127 = vperm.xlu0 %2126, %v452
        %v2128 = vpop.permute.xlu0 %2127
        %2130 = vset.pattern.permute.xlu0 3
        %2131 = vperm.xlu0 %2130, %v453
        %v2132 = vpop.permute.xlu0 %2131
        %2134 = vset.pattern.permute.xlu0 3
        %2135 = vperm.xlu0 %2134, %v454
        %v2136 = vpop.permute.xlu0 %2135
        %v2138 = vsub.f32 %v2058, %v2076
        %v2139 = vsub.f32 %v2059, %v2080
        %v2140 = vsub.f32 %v2060, %v2084
        %v2141 = vsub.f32 %v2061, %v2088
        %v2142 = vsub.f32 %v2062, %v2092
        %v2143 = vsub.f32 %v2063, %v2096
        %v2144 = vsub.f32 %v2064, %v2100
        %v2145 = vsub.f32 %v2065, %v2104
        %v2146 = vsub.f32 %v2066, %v2108
        %v2147 = vsub.f32 %v2067, %v2112
        %v2148 = vsub.f32 %v2068, %v2116
        %v2149 = vsub.f32 %v2069, %v2120
        %v2150 = vsub.f32 %v2070, %v2124
        %v2151 = vsub.f32 %v2071, %v2128
        %v2152 = vsub.f32 %v2072, %v2132
        %v2153 = vsub.f32 %v2073, %v2136
        %v2154 = vmul.f32 %v2138, 1.442695
        %v2155 = vpow.pop %v2154
        %v2156 = vmul.f32 %v2139, 1.442695
        %v2157 = vpow.pop %v2156
        %v2158 = vmul.f32 %v2140, 1.442695
        %v2159 = vpow.pop %v2158
        %v2160 = vmul.f32 %v2141, 1.442695
        %v2161 = vpow.pop %v2160
        %v2162 = vmul.f32 %v2142, 1.442695
        %v2163 = vpow.pop %v2162
        %v2164 = vmul.f32 %v2143, 1.442695
        %v2165 = vpow.pop %v2164
        %v2166 = vmul.f32 %v2144, 1.442695
        %v2167 = vpow.pop %v2166
        %v2168 = vmul.f32 %v2145, 1.442695
        %v2169 = vpow.pop %v2168
        %v2170 = vmul.f32 %v2146, 1.442695
        %v2171 = vpow.pop %v2170
        %v2172 = vmul.f32 %v2147, 1.442695
        %v2173 = vpow.pop %v2172
        %v2174 = vmul.f32 %v2148, 1.442695
        %v2175 = vpow.pop %v2174
        %v2176 = vmul.f32 %v2149, 1.442695
        %v2177 = vpow.pop %v2176
        %v2178 = vmul.f32 %v2150, 1.442695
        %v2179 = vpow.pop %v2178
        %v2180 = vmul.f32 %v2151, 1.442695
        %v2181 = vpow.pop %v2180
        %v2182 = vmul.f32 %v2152, 1.442695
        %v2183 = vpow.pop %v2182
        %v2184 = vmul.f32 %v2153, 1.442695
        %v2185 = vpow.pop %v2184
        %v2186 = vmul.f32 %v2155, %v476
        %v2187 = vmul.f32 %v2157, %v477
        %v2188 = vmul.f32 %v2159, %v478
        %v2189 = vmul.f32 %v2161, %v479
        %v2190 = vmul.f32 %v2163, %v480
        %v2191 = vmul.f32 %v2165, %v481
        %v2192 = vmul.f32 %v2167, %v482
        %v2193 = vmul.f32 %v2169, %v483
        %v2194 = vmul.f32 %v2171, %v484
        %v2195 = vmul.f32 %v2173, %v485
        %v2196 = vmul.f32 %v2175, %v486
        %v2197 = vmul.f32 %v2177, %v487
        %v2198 = vmul.f32 %v2179, %v488
        %v2199 = vmul.f32 %v2181, %v489
        %v2200 = vmul.f32 %v2183, %v490
        %v2201 = vmul.f32 %v2185, %v491
        %v2202 = vld [vmem:[#allocation2] sm:$0xff]
        %v2203 = vld [vmem:[#allocation2 + $0x8] sm:$0xff]
        %v2204 = vld [vmem:[#allocation2 + $0x10] sm:$0xff]
        %v2205 = vld [vmem:[#allocation2 + $0x18] sm:$0xff]
        %v2206 = vld [vmem:[#allocation2 + $0x20] sm:$0xff]
        %v2207 = vld [vmem:[#allocation2 + $0x28] sm:$0xff]
        %v2208 = vld [vmem:[#allocation2 + $0x30] sm:$0xff]
        %v2209 = vld [vmem:[#allocation2 + $0x38] sm:$0xff]
        %v2210 = vld [vmem:[#allocation2 + $0x40] sm:$0xff]
        %v2211 = vld [vmem:[#allocation2 + $0x48] sm:$0xff]
        %v2212 = vld [vmem:[#allocation2 + $0x50] sm:$0xff]
        %v2213 = vld [vmem:[#allocation2 + $0x58] sm:$0xff]
        %v2214 = vld [vmem:[#allocation2 + $0x60] sm:$0xff]
        %v2215 = vld [vmem:[#allocation2 + $0x68] sm:$0xff]
        %v2216 = vld [vmem:[#allocation2 + $0x70] sm:$0xff]
        %v2217 = vld [vmem:[#allocation2 + $0x78] sm:$0xff]
        %v2218 = vpack.c.bf16 %v2187, %v2186
        %v2219 = vpack.c.bf16 %v2189, %v2188
        %v2220 = vpack.c.bf16 %v2191, %v2190
        %v2221 = vpack.c.bf16 %v2193, %v2192
        %v2222 = vpack.c.bf16 %v2195, %v2194
        %v2223 = vpack.c.bf16 %v2197, %v2196
        %v2224 = vpack.c.bf16 %v2199, %v2198
        %v2225 = vpack.c.bf16 %v2201, %v2200
        %2226 = vrot.lane.b32.xlu0 %v840, 101
        %v2227 = vpop.permute.xlu0 %2226
        %2228 = vrot.lane.b32.xlu0 %v841, 101
        %v2229 = vpop.permute.xlu0 %2228
        %2230 = vrot.lane.b32.xlu0 %v842, 101
        %v2231 = vpop.permute.xlu0 %2230
        %2232 = vrot.lane.b32.xlu0 %v843, 101
        %v2233 = vpop.permute.xlu0 %2232
        %2234 = vrot.lane.b32.xlu0 %v844, 101
        %v2235 = vpop.permute.xlu0 %2234
        %2236 = vrot.lane.b32.xlu0 %v845, 101
        %v2237 = vpop.permute.xlu0 %2236
        %2238 = vrot.lane.b32.xlu0 %v846, 101
        %v2239 = vpop.permute.xlu0 %2238
        %2240 = vrot.lane.b32.xlu0 %v847, 101
        %v2241 = vpop.permute.xlu0 %2240
        %2250 = vmatprep.subr.bf16.mxu0 0
        %2251 = vmatpush1.bf16.msra.mxu0 %v2241
        %2252 = vmatprep.subr.bf16.mxu0 0
        %2253 = vmatpush1.bf16.msra.mxu0 %v2239
        %2254 = vmatprep.subr.bf16.mxu0 0
        %2255 = vmatpush1.bf16.msra.mxu0 %v2237
        %2256 = vmatprep.subr.bf16.mxu0 0
        %2257 = vmatpush1.bf16.msra.mxu0 %v2235
        %2258 = vmatprep.subr.bf16.mxu0 0
        %2259 = vmatpush1.bf16.msra.mxu0 %v2233
        %2260 = vmatprep.subr.bf16.mxu0 0
        %2261 = vmatpush1.bf16.msra.mxu0 %v2231
        %2262 = vmatprep.subr.bf16.mxu0 0
        %2263 = vmatpush1.bf16.msra.mxu0 %v2229
        %2264 = vmatprep.subr.bf16.mxu0 0
        %2265 = vmatpush1.bf16.msra.mxu0 %v2227
        %2266 = vmatprep.subr.bf16.mxu0 0
        %2267 = vmatpush2.bf16.msra.mxu0 0
        %2268 = vmatprep.subr.bf16.mxu0 0
        %2269 = vmatpush2.bf16.msra.mxu0 0
        %2270 = vmatprep.subr.bf16.mxu0 0
        %2271 = vmatpush2.bf16.msra.mxu0 0
        %2272 = vmatprep.subr.bf16.mxu0 0
        %2273 = vmatpush2.bf16.msra.mxu0 0
        %2274 = vmatprep.subr.bf16.mxu0 0
        %2275 = vmatpush2.bf16.msra.mxu0 0
        %2276 = vmatprep.subr.bf16.mxu0 0
        %2277 = vmatpush2.bf16.msra.mxu0 0
        %2278 = vmatprep.subr.bf16.mxu0 0
        %2279 = vmatpush2.bf16.msra.mxu0 0
        %2280 = vmatprep.subr.bf16.mxu0 0
        %2281 = vmatpush2.bf16.msra.mxu0 0
        %2282 = vmatprep.mubr.bf16.mxu0 0
        %2283 = vmatmul.mubr.bf16.gmra.mxu0 %v2218
        %v2284 = vpop.f32.mrf.mxu0
        %v2285 = vadd.f32 0.0, %v2284
        %v2286 = vpop.f32.mrf.mxu0
        %v2287 = vpop.f32.mrf.mxu0
        %v2288 = vadd.f32 0.0, %v2287
        %v2289 = vpop.f32.mrf.mxu0
        %2290 = vmatprep.mubr.bf16.mxu0 0
        %2291 = vmatmul.mubr.bf16.gmra.mxu0 %v2219
        %v2292 = vpop.f32.mrf.mxu0
        %v2293 = vadd.f32 0.0, %v2292
        %v2294 = vpop.f32.mrf.mxu0
        %v2295 = vpop.f32.mrf.mxu0
        %v2296 = vadd.f32 0.0, %v2295
        %v2297 = vpop.f32.mrf.mxu0
        %2298 = vmatprep.mubr.bf16.mxu0 0
        %2299 = vmatmul.mubr.bf16.gmra.mxu0 %v2220
        %v2300 = vpop.f32.mrf.mxu0
        %v2301 = vadd.f32 0.0, %v2300
        %v2302 = vpop.f32.mrf.mxu0
        %v2303 = vpop.f32.mrf.mxu0
        %v2304 = vadd.f32 0.0, %v2303
        %v2305 = vpop.f32.mrf.mxu0
        %2306 = vmatprep.mubr.bf16.mxu0 0
        %2307 = vmatmul.mubr.bf16.gmra.mxu0 %v2221
        %v2308 = vpop.f32.mrf.mxu0
        %v2309 = vadd.f32 0.0, %v2308
        %v2310 = vpop.f32.mrf.mxu0
        %v2311 = vpop.f32.mrf.mxu0
        %v2312 = vadd.f32 0.0, %v2311
        %v2313 = vpop.f32.mrf.mxu0
        %2314 = vmatprep.mubr.bf16.mxu0 0
        %2315 = vmatmul.mubr.bf16.gmra.mxu0 %v2222
        %v2316 = vpop.f32.mrf.mxu0
        %v2317 = vadd.f32 0.0, %v2316
        %v2318 = vpop.f32.mrf.mxu0
        %v2319 = vpop.f32.mrf.mxu0
        %v2320 = vadd.f32 0.0, %v2319
        %v2321 = vpop.f32.mrf.mxu0
        %2322 = vmatprep.mubr.bf16.mxu0 0
        %2323 = vmatmul.mubr.bf16.gmra.mxu0 %v2223
        %v2324 = vpop.f32.mrf.mxu0
        %v2325 = vadd.f32 0.0, %v2324
        %v2326 = vpop.f32.mrf.mxu0
        %v2327 = vpop.f32.mrf.mxu0
        %v2328 = vadd.f32 0.0, %v2327
        %v2329 = vpop.f32.mrf.mxu0
        %2330 = vmatprep.mubr.bf16.mxu0 0
        %2331 = vmatmul.mubr.bf16.gmra.mxu0 %v2224
        %v2332 = vpop.f32.mrf.mxu0
        %v2333 = vadd.f32 0.0, %v2332
        %v2334 = vpop.f32.mrf.mxu0
        %v2335 = vpop.f32.mrf.mxu0
        %v2336 = vadd.f32 0.0, %v2335
        %v2337 = vpop.f32.mrf.mxu0
        %2338 = vmatprep.mubr.bf16.mxu0 0
        %2339 = vmatmul.mubr.bf16.gmra.mxu0 %v2225
        %v2340 = vpop.f32.mrf.mxu0
        %v2341 = vadd.f32 0.0, %v2340
        %v2342 = vpop.f32.mrf.mxu0
        %v2343 = vpop.f32.mrf.mxu0
        %v2344 = vadd.f32 0.0, %v2343
        %v2345 = vpop.f32.mrf.mxu0
        %2346 = vdwg.mxu0
        %2363 = vrot.lane.b32.xlu0 %v2285, 27
        %v2364 = vpop.permute.xlu0 %2363
        %2365 = vrot.lane.b32.xlu0 %v2288, 27
        %v2366 = vpop.permute.xlu0 %2365
        %2367 = vrot.lane.b32.xlu0 %v2293, 27
        %v2368 = vpop.permute.xlu0 %2367
        %2369 = vrot.lane.b32.xlu0 %v2296, 27
        %v2370 = vpop.permute.xlu0 %2369
        %2371 = vrot.lane.b32.xlu0 %v2301, 27
        %v2372 = vpop.permute.xlu0 %2371
        %2373 = vrot.lane.b32.xlu0 %v2304, 27
        %v2374 = vpop.permute.xlu0 %2373
        %2375 = vrot.lane.b32.xlu0 %v2309, 27
        %v2376 = vpop.permute.xlu0 %2375
        %2377 = vrot.lane.b32.xlu0 %v2312, 27
        %v2378 = vpop.permute.xlu0 %2377
        %2379 = vrot.lane.b32.xlu0 %v2317, 27
        %v2380 = vpop.permute.xlu0 %2379
        %2381 = vrot.lane.b32.xlu0 %v2320, 27
        %v2382 = vpop.permute.xlu0 %2381
        %2383 = vrot.lane.b32.xlu0 %v2325, 27
        %v2384 = vpop.permute.xlu0 %2383
        %2385 = vrot.lane.b32.xlu0 %v2328, 27
        %v2386 = vpop.permute.xlu0 %2385
        %2387 = vrot.lane.b32.xlu0 %v2333, 27
        %v2388 = vpop.permute.xlu0 %2387
        %2389 = vrot.lane.b32.xlu0 %v2336, 27
        %v2390 = vpop.permute.xlu0 %2389
        %2391 = vrot.lane.b32.xlu0 %v2341, 27
        %v2392 = vpop.permute.xlu0 %2391
        %2393 = vrot.lane.b32.xlu0 %v2344, 27
        %v2394 = vpop.permute.xlu0 %2393
        %v2411 = vadd.f32 %v2202, %v2364
        %v2412 = vadd.f32 %v2203, %v2366
        %v2413 = vadd.f32 %v2204, %v2368
        %v2414 = vadd.f32 %v2205, %v2370
        %v2415 = vadd.f32 %v2206, %v2372
        %v2416 = vadd.f32 %v2207, %v2374
        %v2417 = vadd.f32 %v2208, %v2376
        %v2418 = vadd.f32 %v2209, %v2378
        %v2419 = vadd.f32 %v2210, %v2380
        %v2420 = vadd.f32 %v2211, %v2382
        %v2421 = vadd.f32 %v2212, %v2384
        %v2422 = vadd.f32 %v2213, %v2386
        %v2423 = vadd.f32 %v2214, %v2388
        %v2424 = vadd.f32 %v2215, %v2390
        %v2425 = vadd.f32 %v2216, %v2392
        %v2426 = vadd.f32 %v2217, %v2394
        %vm2427 = vcmask 294104
        %2428 = vst.msk [vmem:[#allocation2] sm:$0xff] %vm2427, %v2411
        %2429 = vst.msk [vmem:[#allocation2 + $0x8] sm:$0xff] %vm2427, %v2412
        %2430 = vst.msk [vmem:[#allocation2 + $0x10] sm:$0xff] %vm2427, %v2413
        %2431 = vst.msk [vmem:[#allocation2 + $0x18] sm:$0xff] %vm2427, %v2414
        %2432 = vst.msk [vmem:[#allocation2 + $0x20] sm:$0xff] %vm2427, %v2415
        %2433 = vst.msk [vmem:[#allocation2 + $0x28] sm:$0xff] %vm2427, %v2416
        %2434 = vst.msk [vmem:[#allocation2 + $0x30] sm:$0xff] %vm2427, %v2417
        %2435 = vst.msk [vmem:[#allocation2 + $0x38] sm:$0xff] %vm2427, %v2418
        %2436 = vst.msk [vmem:[#allocation2 + $0x40] sm:$0xff] %vm2427, %v2419
        %2437 = vst.msk [vmem:[#allocation2 + $0x48] sm:$0xff] %vm2427, %v2420
        %2438 = vst.msk [vmem:[#allocation2 + $0x50] sm:$0xff] %vm2427, %v2421
        %2439 = vst.msk [vmem:[#allocation2 + $0x58] sm:$0xff] %vm2427, %v2422
        %2440 = vst.msk [vmem:[#allocation2 + $0x60] sm:$0xff] %vm2427, %v2423
        %2441 = vst.msk [vmem:[#allocation2 + $0x68] sm:$0xff] %vm2427, %v2424
        %2442 = vst.msk [vmem:[#allocation2 + $0x70] sm:$0xff] %vm2427, %v2425
        %2443 = vst.msk [vmem:[#allocation2 + $0x78] sm:$0xff] %vm2427, %v2426
        %p2444 = scmp.eq.s32.totalorder %s22, 1
        // Predicated region
        $region87: #{gat_conv_pallas.3} parent=77 // pred_check
          %p2445 = pneg %p2444
        $region88: #{gat_conv_pallas.3} parent=77 // pred_check_branch
          %2447 = sbr.rel (%p2445) target = $region90
        $region89: #{gat_conv_pallas.3} parent=77 // pred_region
          %v2448 = vld [vmem:[#allocation2] sm:$0xff]
          %v2449 = vld [vmem:[#allocation2 + $0x8] sm:$0xff]
          %v2450 = vld [vmem:[#allocation2 + $0x10] sm:$0xff]
          %v2451 = vld [vmem:[#allocation2 + $0x18] sm:$0xff]
          %v2452 = vld [vmem:[#allocation2 + $0x20] sm:$0xff]
          %v2453 = vld [vmem:[#allocation2 + $0x28] sm:$0xff]
          %v2454 = vld [vmem:[#allocation2 + $0x30] sm:$0xff]
          %v2455 = vld [vmem:[#allocation2 + $0x38] sm:$0xff]
          %v2456 = vld [vmem:[#allocation2 + $0x40] sm:$0xff]
          %v2457 = vld [vmem:[#allocation2 + $0x48] sm:$0xff]
          %v2458 = vld [vmem:[#allocation2 + $0x50] sm:$0xff]
          %v2459 = vld [vmem:[#allocation2 + $0x58] sm:$0xff]
          %v2460 = vld [vmem:[#allocation2 + $0x60] sm:$0xff]
          %v2461 = vld [vmem:[#allocation2 + $0x68] sm:$0xff]
          %v2462 = vld [vmem:[#allocation2 + $0x70] sm:$0xff]
          %v2463 = vld [vmem:[#allocation2 + $0x78] sm:$0xff]
          %v2464 = vrcp.pop %v2448
          %v2465 = vrcp.pop %v2449
          %v2466 = vrcp.pop %v2450
          %v2467 = vrcp.pop %v2451
          %v2468 = vrcp.pop %v2452
          %v2469 = vrcp.pop %v2453
          %v2470 = vrcp.pop %v2454
          %v2471 = vrcp.pop %v2455
          %v2472 = vrcp.pop %v2456
          %v2473 = vrcp.pop %v2457
          %v2474 = vrcp.pop %v2458
          %v2475 = vrcp.pop %v2459
          %v2476 = vrcp.pop %v2460
          %v2477 = vrcp.pop %v2461
          %v2478 = vrcp.pop %v2462
          %v2479 = vrcp.pop %v2463
          %2481 = vset.pattern.permute.xlu0 8
          %2482 = vperm.xlu0 %2481, %v2464
          %v2483 = vpop.permute.xlu0 %2482
          %2486 = vset.pattern.permute.xlu0 8
          %2487 = vperm.xlu0 %2486, %v2465
          %v2488 = vpop.permute.xlu0 %2487
          %2491 = vset.pattern.permute.xlu0 8
          %2492 = vperm.xlu0 %2491, %v2466
          %v2493 = vpop.permute.xlu0 %2492
          %2496 = vset.pattern.permute.xlu0 8
          %2497 = vperm.xlu0 %2496, %v2467
          %v2498 = vpop.permute.xlu0 %2497
          %2501 = vset.pattern.permute.xlu0 8
          %2502 = vperm.xlu0 %2501, %v2468
          %v2503 = vpop.permute.xlu0 %2502
          %2506 = vset.pattern.permute.xlu0 8
          %2507 = vperm.xlu0 %2506, %v2469
          %v2508 = vpop.permute.xlu0 %2507
          %2511 = vset.pattern.permute.xlu0 8
          %2512 = vperm.xlu0 %2511, %v2470
          %v2513 = vpop.permute.xlu0 %2512
          %2516 = vset.pattern.permute.xlu0 8
          %2517 = vperm.xlu0 %2516, %v2471
          %v2518 = vpop.permute.xlu0 %2517
          %2521 = vset.pattern.permute.xlu0 8
          %2522 = vperm.xlu0 %2521, %v2472
          %v2523 = vpop.permute.xlu0 %2522
          %2526 = vset.pattern.permute.xlu0 8
          %2527 = vperm.xlu0 %2526, %v2473
          %v2528 = vpop.permute.xlu0 %2527
          %2531 = vset.pattern.permute.xlu0 8
          %2532 = vperm.xlu0 %2531, %v2474
          %v2533 = vpop.permute.xlu0 %2532
          %2536 = vset.pattern.permute.xlu0 8
          %2537 = vperm.xlu0 %2536, %v2475
          %v2538 = vpop.permute.xlu0 %2537
          %2541 = vset.pattern.permute.xlu0 8
          %2542 = vperm.xlu0 %2541, %v2476
          %v2543 = vpop.permute.xlu0 %2542
          %2546 = vset.pattern.permute.xlu0 8
          %2547 = vperm.xlu0 %2546, %v2477
          %v2548 = vpop.permute.xlu0 %2547
          %2551 = vset.pattern.permute.xlu0 8
          %2552 = vperm.xlu0 %2551, %v2478
          %v2553 = vpop.permute.xlu0 %2552
          %2556 = vset.pattern.permute.xlu0 8
          %2557 = vperm.xlu0 %2556, %v2479
          %v2558 = vpop.permute.xlu0 %2557
          %v2560 = vmul.f32 %v2448, %v2483
          %v2561 = vmul.f32 %v2449, %v2488
          %v2562 = vmul.f32 %v2450, %v2493
          %v2563 = vmul.f32 %v2451, %v2498
          %v2564 = vmul.f32 %v2452, %v2503
          %v2565 = vmul.f32 %v2453, %v2508
          %v2566 = vmul.f32 %v2454, %v2513
          %v2567 = vmul.f32 %v2455, %v2518
          %v2568 = vmul.f32 %v2456, %v2523
          %v2569 = vmul.f32 %v2457, %v2528
          %v2570 = vmul.f32 %v2458, %v2533
          %v2571 = vmul.f32 %v2459, %v2538
          %v2572 = vmul.f32 %v2460, %v2543
          %v2573 = vmul.f32 %v2461, %v2548
          %v2574 = vmul.f32 %v2462, %v2553
          %v2575 = vmul.f32 %v2463, %v2558
          %v2576 = vld [vmem:[%s5] sm:$0x1]
          %v2578 = vlaneseq
          %v2579 = vshrl.u32 %v2578, 7
          %v2580 = vsub.s32 0, %v2579
          %v2581 = vrot.slane %v2576, %v2580
          %v2583 = vadd.f32 %v2560, %v2581
          %v2584 = vadd.f32 %v2561, %v2581
          %v2585 = vadd.f32 %v2562, %v2581
          %v2586 = vadd.f32 %v2563, %v2581
          %v2587 = vadd.f32 %v2564, %v2581
          %v2588 = vadd.f32 %v2565, %v2581
          %v2589 = vadd.f32 %v2566, %v2581
          %v2590 = vadd.f32 %v2567, %v2581
          %v2591 = vadd.f32 %v2568, %v2581
          %v2592 = vadd.f32 %v2569, %v2581
          %v2593 = vadd.f32 %v2570, %v2581
          %v2594 = vadd.f32 %v2571, %v2581
          %v2595 = vadd.f32 %v2572, %v2581
          %v2596 = vadd.f32 %v2573, %v2581
          %v2597 = vadd.f32 %v2574, %v2581
          %v2598 = vadd.f32 %v2575, %v2581
          %vm2599 = vcmask 64512
          %2600 = vst.msk [vmem:[%s399] sm:$0xff] %vm2599, %v2583
          %2601 = vst.msk [vmem:[%s399 + $0x8] sm:$0xff] %vm2599, %v2584
          %2602 = vst.msk [vmem:[%s399 + $0x10] sm:$0xff] %vm2599, %v2585
          %2603 = vst.msk [vmem:[%s399 + $0x18] sm:$0xff] %vm2599, %v2586
          %2604 = vst.msk [vmem:[%s399 + $0x20] sm:$0xff] %vm2599, %v2587
          %2605 = vst.msk [vmem:[%s399 + $0x28] sm:$0xff] %vm2599, %v2588
          %2606 = vst.msk [vmem:[%s399 + $0x30] sm:$0xff] %vm2599, %v2589
          %2607 = vst.msk [vmem:[%s399 + $0x38] sm:$0xff] %vm2599, %v2590
          %2608 = vst.msk [vmem:[%s399 + $0x40] sm:$0xff] %vm2599, %v2591
          %2609 = vst.msk [vmem:[%s399 + $0x48] sm:$0xff] %vm2599, %v2592
          %2610 = vst.msk [vmem:[%s399 + $0x50] sm:$0xff] %vm2599, %v2593
          %2611 = vst.msk [vmem:[%s399 + $0x58] sm:$0xff] %vm2599, %v2594
          %2612 = vst.msk [vmem:[%s399 + $0x60] sm:$0xff] %vm2599, %v2595
          %2613 = vst.msk [vmem:[%s399 + $0x68] sm:$0xff] %vm2599, %v2596
          %2614 = vst.msk [vmem:[%s399 + $0x70] sm:$0xff] %vm2599, %v2597
          %2615 = vst.msk [vmem:[%s399 + $0x78] sm:$0xff] %vm2599, %v2598
          %v2616 = vld [vmem:[#allocation2] sm:$0xff]
          %v2617 = vld [vmem:[#allocation2 + $0x8] sm:$0xff]
          %v2618 = vld [vmem:[#allocation2 + $0x10] sm:$0xff]
          %v2619 = vld [vmem:[#allocation2 + $0x18] sm:$0xff]
          %v2620 = vld [vmem:[#allocation2 + $0x20] sm:$0xff]
          %v2621 = vld [vmem:[#allocation2 + $0x28] sm:$0xff]
          %v2622 = vld [vmem:[#allocation2 + $0x30] sm:$0xff]
          %v2623 = vld [vmem:[#allocation2 + $0x38] sm:$0xff]
          %v2624 = vld [vmem:[#allocation2 + $0x40] sm:$0xff]
          %v2625 = vld [vmem:[#allocation2 + $0x48] sm:$0xff]
          %v2626 = vld [vmem:[#allocation2 + $0x50] sm:$0xff]
          %v2627 = vld [vmem:[#allocation2 + $0x58] sm:$0xff]
          %v2628 = vld [vmem:[#allocation2 + $0x60] sm:$0xff]
          %v2629 = vld [vmem:[#allocation2 + $0x68] sm:$0xff]
          %v2630 = vld [vmem:[#allocation2 + $0x70] sm:$0xff]
          %v2631 = vld [vmem:[#allocation2 + $0x78] sm:$0xff]
          %v2632 = vrcp.pop %v2616
          %v2633 = vrcp.pop %v2617
          %v2634 = vrcp.pop %v2618
          %v2635 = vrcp.pop %v2619
          %v2636 = vrcp.pop %v2620
          %v2637 = vrcp.pop %v2621
          %v2638 = vrcp.pop %v2622
          %v2639 = vrcp.pop %v2623
          %v2640 = vrcp.pop %v2624
          %v2641 = vrcp.pop %v2625
          %v2642 = vrcp.pop %v2626
          %v2643 = vrcp.pop %v2627
          %v2644 = vrcp.pop %v2628
          %v2645 = vrcp.pop %v2629
          %v2646 = vrcp.pop %v2630
          %v2647 = vrcp.pop %v2631
          %2649 = vset.pattern.permute.xlu0 17
          %2650 = vperm.xlu0 %2649, %v2632
          %v2651 = vpop.permute.xlu0 %2650
          %2654 = vset.pattern.permute.xlu0 17
          %2655 = vperm.xlu0 %2654, %v2633
          %v2656 = vpop.permute.xlu0 %2655
          %2659 = vset.pattern.permute.xlu0 17
          %2660 = vperm.xlu0 %2659, %v2634
          %v2661 = vpop.permute.xlu0 %2660
          %2664 = vset.pattern.permute.xlu0 17
          %2665 = vperm.xlu0 %2664, %v2635
          %v2666 = vpop.permute.xlu0 %2665
          %2669 = vset.pattern.permute.xlu0 17
          %2670 = vperm.xlu0 %2669, %v2636
          %v2671 = vpop.permute.xlu0 %2670
          %2674 = vset.pattern.permute.xlu0 17
          %2675 = vperm.xlu0 %2674, %v2637
          %v2676 = vpop.permute.xlu0 %2675
          %2679 = vset.pattern.permute.xlu0 17
          %2680 = vperm.xlu0 %2679, %v2638
          %v2681 = vpop.permute.xlu0 %2680
          %2684 = vset.pattern.permute.xlu0 17
          %2685 = vperm.xlu0 %2684, %v2639
          %v2686 = vpop.permute.xlu0 %2685
          %2689 = vset.pattern.permute.xlu0 17
          %2690 = vperm.xlu0 %2689, %v2640
          %v2691 = vpop.permute.xlu0 %2690
          %2694 = vset.pattern.permute.xlu0 17
          %2695 = vperm.xlu0 %2694, %v2641
          %v2696 = vpop.permute.xlu0 %2695
          %2699 = vset.pattern.permute.xlu0 17
          %2700 = vperm.xlu0 %2699, %v2642
          %v2701 = vpop.permute.xlu0 %2700
          %2704 = vset.pattern.permute.xlu0 17
          %2705 = vperm.xlu0 %2704, %v2643
          %v2706 = vpop.permute.xlu0 %2705
          %2709 = vset.pattern.permute.xlu0 17
          %2710 = vperm.xlu0 %2709, %v2644
          %v2711 = vpop.permute.xlu0 %2710
          %2714 = vset.pattern.permute.xlu0 17
          %2715 = vperm.xlu0 %2714, %v2645
          %v2716 = vpop.permute.xlu0 %2715
          %2719 = vset.pattern.permute.xlu0 17
          %2720 = vperm.xlu0 %2719, %v2646
          %v2721 = vpop.permute.xlu0 %2720
          %2724 = vset.pattern.permute.xlu0 17
          %2725 = vperm.xlu0 %2724, %v2647
          %v2726 = vpop.permute.xlu0 %2725
          %v2728 = vmul.f32 %v2616, %v2651
          %v2729 = vmul.f32 %v2617, %v2656
          %v2730 = vmul.f32 %v2618, %v2661
          %v2731 = vmul.f32 %v2619, %v2666
          %v2732 = vmul.f32 %v2620, %v2671
          %v2733 = vmul.f32 %v2621, %v2676
          %v2734 = vmul.f32 %v2622, %v2681
          %v2735 = vmul.f32 %v2623, %v2686
          %v2736 = vmul.f32 %v2624, %v2691
          %v2737 = vmul.f32 %v2625, %v2696
          %v2738 = vmul.f32 %v2626, %v2701
          %v2739 = vmul.f32 %v2627, %v2706
          %v2740 = vmul.f32 %v2628, %v2711
          %v2741 = vmul.f32 %v2629, %v2716
          %v2742 = vmul.f32 %v2630, %v2721
          %v2743 = vmul.f32 %v2631, %v2726
          %v2744 = vld [vmem:[%s5] sm:$0x1]
          %v2746 = vlaneseq
          %v2747 = vshrl.u32 %v2746, 7
          %v2748 = vsub.s32 0, %v2747
          %v2749 = vrot.slane %v2744, %v2748
          %2750 = vrot.lane.b32.xlu0 %v2749, 1
          %v2751 = vpop.permute.xlu0 %2750
          %v2753 = vadd.f32 %v2728, %v2751
          %v2754 = vadd.f32 %v2729, %v2751
          %v2755 = vadd.f32 %v2730, %v2751
          %v2756 = vadd.f32 %v2731, %v2751
          %v2757 = vadd.f32 %v2732, %v2751
          %v2758 = vadd.f32 %v2733, %v2751
          %v2759 = vadd.f32 %v2734, %v2751
          %v2760 = vadd.f32 %v2735, %v2751
          %v2761 = vadd.f32 %v2736, %v2751
          %v2762 = vadd.f32 %v2737, %v2751
          %v2763 = vadd.f32 %v2738, %v2751
          %v2764 = vadd.f32 %v2739, %v2751
          %v2765 = vadd.f32 %v2740, %v2751
          %v2766 = vadd.f32 %v2741, %v2751
          %v2767 = vadd.f32 %v2742, %v2751
          %v2768 = vadd.f32 %v2743, %v2751
          %2785 = vrot.lane.b32.xlu0 %v2753, 127
          %v2786 = vpop.permute.xlu0 %2785
          %2787 = vrot.lane.b32.xlu0 %v2754, 127
          %v2788 = vpop.permute.xlu0 %2787
          %2789 = vrot.lane.b32.xlu0 %v2755, 127
          %v2790 = vpop.permute.xlu0 %2789
          %2791 = vrot.lane.b32.xlu0 %v2756, 127
          %v2792 = vpop.permute.xlu0 %2791
          %2793 = vrot.lane.b32.xlu0 %v2757, 127
          %v2794 = vpop.permute.xlu0 %2793
          %2795 = vrot.lane.b32.xlu0 %v2758, 127
          %v2796 = vpop.permute.xlu0 %2795
          %2797 = vrot.lane.b32.xlu0 %v2759, 127
          %v2798 = vpop.permute.xlu0 %2797
          %2799 = vrot.lane.b32.xlu0 %v2760, 127
          %v2800 = vpop.permute.xlu0 %2799
          %2801 = vrot.lane.b32.xlu0 %v2761, 127
          %v2802 = vpop.permute.xlu0 %2801
          %2803 = vrot.lane.b32.xlu0 %v2762, 127
          %v2804 = vpop.permute.xlu0 %2803
          %2805 = vrot.lane.b32.xlu0 %v2763, 127
          %v2806 = vpop.permute.xlu0 %2805
          %2807 = vrot.lane.b32.xlu0 %v2764, 127
          %v2808 = vpop.permute.xlu0 %2807
          %2809 = vrot.lane.b32.xlu0 %v2765, 127
          %v2810 = vpop.permute.xlu0 %2809
          %2811 = vrot.lane.b32.xlu0 %v2766, 127
          %v2812 = vpop.permute.xlu0 %2811
          %2813 = vrot.lane.b32.xlu0 %v2767, 127
          %v2814 = vpop.permute.xlu0 %2813
          %2815 = vrot.lane.b32.xlu0 %v2768, 127
          %v2816 = vpop.permute.xlu0 %2815
          %vm2833 = vcmask 130112
          %2834 = vst.msk [vmem:[%s399] sm:$0xff] %vm2833, %v2786
          %2835 = vst.msk [vmem:[%s399 + $0x8] sm:$0xff] %vm2833, %v2788
          %2836 = vst.msk [vmem:[%s399 + $0x10] sm:$0xff] %vm2833, %v2790
          %2837 = vst.msk [vmem:[%s399 + $0x18] sm:$0xff] %vm2833, %v2792
          %2838 = vst.msk [vmem:[%s399 + $0x20] sm:$0xff] %vm2833, %v2794
          %2839 = vst.msk [vmem:[%s399 + $0x28] sm:$0xff] %vm2833, %v2796
          %2840 = vst.msk [vmem:[%s399 + $0x30] sm:$0xff] %vm2833, %v2798
          %2841 = vst.msk [vmem:[%s399 + $0x38] sm:$0xff] %vm2833, %v2800
          %2842 = vst.msk [vmem:[%s399 + $0x40] sm:$0xff] %vm2833, %v2802
          %2843 = vst.msk [vmem:[%s399 + $0x48] sm:$0xff] %vm2833, %v2804
          %2844 = vst.msk [vmem:[%s399 + $0x50] sm:$0xff] %vm2833, %v2806
          %2845 = vst.msk [vmem:[%s399 + $0x58] sm:$0xff] %vm2833, %v2808
          %2846 = vst.msk [vmem:[%s399 + $0x60] sm:$0xff] %vm2833, %v2810
          %2847 = vst.msk [vmem:[%s399 + $0x68] sm:$0xff] %vm2833, %v2812
          %2848 = vst.msk [vmem:[%s399 + $0x70] sm:$0xff] %vm2833, %v2814
          %2849 = vst.msk [vmem:[%s399 + $0x78] sm:$0xff] %vm2833, %v2816
          %v2850 = vld [vmem:[#allocation2] sm:$0xff]
          %v2851 = vld [vmem:[#allocation2 + $0x8] sm:$0xff]
          %v2852 = vld [vmem:[#allocation2 + $0x10] sm:$0xff]
          %v2853 = vld [vmem:[#allocation2 + $0x18] sm:$0xff]
          %v2854 = vld [vmem:[#allocation2 + $0x20] sm:$0xff]
          %v2855 = vld [vmem:[#allocation2 + $0x28] sm:$0xff]
          %v2856 = vld [vmem:[#allocation2 + $0x30] sm:$0xff]
          %v2857 = vld [vmem:[#allocation2 + $0x38] sm:$0xff]
          %v2858 = vld [vmem:[#allocation2 + $0x40] sm:$0xff]
          %v2859 = vld [vmem:[#allocation2 + $0x48] sm:$0xff]
          %v2860 = vld [vmem:[#allocation2 + $0x50] sm:$0xff]
          %v2861 = vld [vmem:[#allocation2 + $0x58] sm:$0xff]
          %v2862 = vld [vmem:[#allocation2 + $0x60] sm:$0xff]
          %v2863 = vld [vmem:[#allocation2 + $0x68] sm:$0xff]
          %v2864 = vld [vmem:[#allocation2 + $0x70] sm:$0xff]
          %v2865 = vld [vmem:[#allocation2 + $0x78] sm:$0xff]
          %v2866 = vrcp.pop %v2850
          %v2867 = vrcp.pop %v2851
          %v2868 = vrcp.pop %v2852
          %v2869 = vrcp.pop %v2853
          %v2870 = vrcp.pop %v2854
          %v2871 = vrcp.pop %v2855
          %v2872 = vrcp.pop %v2856
          %v2873 = vrcp.pop %v2857
          %v2874 = vrcp.pop %v2858
          %v2875 = vrcp.pop %v2859
          %v2876 = vrcp.pop %v2860
          %v2877 = vrcp.pop %v2861
          %v2878 = vrcp.pop %v2862
          %v2879 = vrcp.pop %v2863
          %v2880 = vrcp.pop %v2864
          %v2881 = vrcp.pop %v2865
          %2883 = vset.pattern.permute.xlu0 26
          %2884 = vperm.xlu0 %2883, %v2866
          %v2885 = vpop.permute.xlu0 %2884
          %2888 = vset.pattern.permute.xlu0 26
          %2889 = vperm.xlu0 %2888, %v2867
          %v2890 = vpop.permute.xlu0 %2889
          %2893 = vset.pattern.permute.xlu0 26
          %2894 = vperm.xlu0 %2893, %v2868
          %v2895 = vpop.permute.xlu0 %2894
          %2898 = vset.pattern.permute.xlu0 26
          %2899 = vperm.xlu0 %2898, %v2869
          %v2900 = vpop.permute.xlu0 %2899
          %2903 = vset.pattern.permute.xlu0 26
          %2904 = vperm.xlu0 %2903, %v2870
          %v2905 = vpop.permute.xlu0 %2904
          %2908 = vset.pattern.permute.xlu0 26
          %2909 = vperm.xlu0 %2908, %v2871
          %v2910 = vpop.permute.xlu0 %2909
          %2913 = vset.pattern.permute.xlu0 26
          %2914 = vperm.xlu0 %2913, %v2872
          %v2915 = vpop.permute.xlu0 %2914
          %2918 = vset.pattern.permute.xlu0 26
          %2919 = vperm.xlu0 %2918, %v2873
          %v2920 = vpop.permute.xlu0 %2919
          %2923 = vset.pattern.permute.xlu0 26
          %2924 = vperm.xlu0 %2923, %v2874
          %v2925 = vpop.permute.xlu0 %2924
          %2928 = vset.pattern.permute.xlu0 26
          %2929 = vperm.xlu0 %2928, %v2875
          %v2930 = vpop.permute.xlu0 %2929
          %2933 = vset.pattern.permute.xlu0 26
          %2934 = vperm.xlu0 %2933, %v2876
          %v2935 = vpop.permute.xlu0 %2934
          %2938 = vset.pattern.permute.xlu0 26
          %2939 = vperm.xlu0 %2938, %v2877
          %v2940 = vpop.permute.xlu0 %2939
          %2943 = vset.pattern.permute.xlu0 26
          %2944 = vperm.xlu0 %2943, %v2878
          %v2945 = vpop.permute.xlu0 %2944
          %2948 = vset.pattern.permute.xlu0 26
          %2949 = vperm.xlu0 %2948, %v2879
          %v2950 = vpop.permute.xlu0 %2949
          %2953 = vset.pattern.permute.xlu0 26
          %2954 = vperm.xlu0 %2953, %v2880
          %v2955 = vpop.permute.xlu0 %2954
          %2958 = vset.pattern.permute.xlu0 26
          %2959 = vperm.xlu0 %2958, %v2881
          %v2960 = vpop.permute.xlu0 %2959
          %v2962 = vmul.f32 %v2850, %v2885
          %v2963 = vmul.f32 %v2851, %v2890
          %v2964 = vmul.f32 %v2852, %v2895
          %v2965 = vmul.f32 %v2853, %v2900
          %v2966 = vmul.f32 %v2854, %v2905
          %v2967 = vmul.f32 %v2855, %v2910
          %v2968 = vmul.f32 %v2856, %v2915
          %v2969 = vmul.f32 %v2857, %v2920
          %v2970 = vmul.f32 %v2858, %v2925
          %v2971 = vmul.f32 %v2859, %v2930
          %v2972 = vmul.f32 %v2860, %v2935
          %v2973 = vmul.f32 %v2861, %v2940
          %v2974 = vmul.f32 %v2862, %v2945
          %v2975 = vmul.f32 %v2863, %v2950
          %v2976 = vmul.f32 %v2864, %v2955
          %v2977 = vmul.f32 %v2865, %v2960
          %v2978 = vld [vmem:[%s5] sm:$0x1]
          %v2980 = vlaneseq
          %v2981 = vshrl.u32 %v2980, 7
          %v2982 = vsub.s32 0, %v2981
          %v2983 = vrot.slane %v2978, %v2982
          %2984 = vrot.lane.b32.xlu0 %v2983, 2
          %v2985 = vpop.permute.xlu0 %2984
          %v2987 = vadd.f32 %v2962, %v2985
          %v2988 = vadd.f32 %v2963, %v2985
          %v2989 = vadd.f32 %v2964, %v2985
          %v2990 = vadd.f32 %v2965, %v2985
          %v2991 = vadd.f32 %v2966, %v2985
          %v2992 = vadd.f32 %v2967, %v2985
          %v2993 = vadd.f32 %v2968, %v2985
          %v2994 = vadd.f32 %v2969, %v2985
          %v2995 = vadd.f32 %v2970, %v2985
          %v2996 = vadd.f32 %v2971, %v2985
          %v2997 = vadd.f32 %v2972, %v2985
          %v2998 = vadd.f32 %v2973, %v2985
          %v2999 = vadd.f32 %v2974, %v2985
          %v3000 = vadd.f32 %v2975, %v2985
          %v3001 = vadd.f32 %v2976, %v2985
          %v3002 = vadd.f32 %v2977, %v2985
          %3019 = vrot.lane.b32.xlu0 %v2987, 126
          %v3020 = vpop.permute.xlu0 %3019
          %3021 = vrot.lane.b32.xlu0 %v2988, 126
          %v3022 = vpop.permute.xlu0 %3021
          %3023 = vrot.lane.b32.xlu0 %v2989, 126
          %v3024 = vpop.permute.xlu0 %3023
          %3025 = vrot.lane.b32.xlu0 %v2990, 126
          %v3026 = vpop.permute.xlu0 %3025
          %3027 = vrot.lane.b32.xlu0 %v2991, 126
          %v3028 = vpop.permute.xlu0 %3027
          %3029 = vrot.lane.b32.xlu0 %v2992, 126
          %v3030 = vpop.permute.xlu0 %3029
          %3031 = vrot.lane.b32.xlu0 %v2993, 126
          %v3032 = vpop.permute.xlu0 %3031
          %3033 = vrot.lane.b32.xlu0 %v2994, 126
          %v3034 = vpop.permute.xlu0 %3033
          %3035 = vrot.lane.b32.xlu0 %v2995, 126
          %v3036 = vpop.permute.xlu0 %3035
          %3037 = vrot.lane.b32.xlu0 %v2996, 126
          %v3038 = vpop.permute.xlu0 %3037
          %3039 = vrot.lane.b32.xlu0 %v2997, 126
          %v3040 = vpop.permute.xlu0 %3039
          %3041 = vrot.lane.b32.xlu0 %v2998, 126
          %v3042 = vpop.permute.xlu0 %3041
          %3043 = vrot.lane.b32.xlu0 %v2999, 126
          %v3044 = vpop.permute.xlu0 %3043
          %3045 = vrot.lane.b32.xlu0 %v3000, 126
          %v3046 = vpop.permute.xlu0 %3045
          %3047 = vrot.lane.b32.xlu0 %v3001, 126
          %v3048 = vpop.permute.xlu0 %3047
          %3049 = vrot.lane.b32.xlu0 %v3002, 126
          %v3050 = vpop.permute.xlu0 %3049
          %vm3067 = vcmask 195712
          %3068 = vst.msk [vmem:[%s399] sm:$0xff] %vm3067, %v3020
          %3069 = vst.msk [vmem:[%s399 + $0x8] sm:$0xff] %vm3067, %v3022
          %3070 = vst.msk [vmem:[%s399 + $0x10] sm:$0xff] %vm3067, %v3024
          %3071 = vst.msk [vmem:[%s399 + $0x18] sm:$0xff] %vm3067, %v3026
          %3072 = vst.msk [vmem:[%s399 + $0x20] sm:$0xff] %vm3067, %v3028
          %3073 = vst.msk [vmem:[%s399 + $0x28] sm:$0xff] %vm3067, %v3030
          %3074 = vst.msk [vmem:[%s399 + $0x30] sm:$0xff] %vm3067, %v3032
          %3075 = vst.msk [vmem:[%s399 + $0x38] sm:$0xff] %vm3067, %v3034
          %3076 = vst.msk [vmem:[%s399 + $0x40] sm:$0xff] %vm3067, %v3036
          %3077 = vst.msk [vmem:[%s399 + $0x48] sm:$0xff] %vm3067, %v3038
          %3078 = vst.msk [vmem:[%s399 + $0x50] sm:$0xff] %vm3067, %v3040
          %3079 = vst.msk [vmem:[%s399 + $0x58] sm:$0xff] %vm3067, %v3042
          %3080 = vst.msk [vmem:[%s399 + $0x60] sm:$0xff] %vm3067, %v3044
          %3081 = vst.msk [vmem:[%s399 + $0x68] sm:$0xff] %vm3067, %v3046
          %3082 = vst.msk [vmem:[%s399 + $0x70] sm:$0xff] %vm3067, %v3048
          %3083 = vst.msk [vmem:[%s399 + $0x78] sm:$0xff] %vm3067, %v3050
          %v3084 = vld [vmem:[#allocation2] sm:$0xff]
          %v3085 = vld [vmem:[#allocation2 + $0x8] sm:$0xff]
          %v3086 = vld [vmem:[#allocation2 + $0x10] sm:$0xff]
          %v3087 = vld [vmem:[#allocation2 + $0x18] sm:$0xff]
          %v3088 = vld [vmem:[#allocation2 + $0x20] sm:$0xff]
          %v3089 = vld [vmem:[#allocation2 + $0x28] sm:$0xff]
          %v3090 = vld [vmem:[#allocation2 + $0x30] sm:$0xff]
          %v3091 = vld [vmem:[#allocation2 + $0x38] sm:$0xff]
          %v3092 = vld [vmem:[#allocation2 + $0x40] sm:$0xff]
          %v3093 = vld [vmem:[#allocation2 + $0x48] sm:$0xff]
          %v3094 = vld [vmem:[#allocation2 + $0x50] sm:$0xff]
          %v3095 = vld [vmem:[#allocation2 + $0x58] sm:$0xff]
          %v3096 = vld [vmem:[#allocation2 + $0x60] sm:$0xff]
          %v3097 = vld [vmem:[#allocation2 + $0x68] sm:$0xff]
          %v3098 = vld [vmem:[#allocation2 + $0x70] sm:$0xff]
          %v3099 = vld [vmem:[#allocation2 + $0x78] sm:$0xff]
          %v3100 = vrcp.pop %v3084
          %v3101 = vrcp.pop %v3085
          %v3102 = vrcp.pop %v3086
          %v3103 = vrcp.pop %v3087
          %v3104 = vrcp.pop %v3088
          %v3105 = vrcp.pop %v3089
          %v3106 = vrcp.pop %v3090
          %v3107 = vrcp.pop %v3091
          %v3108 = vrcp.pop %v3092
          %v3109 = vrcp.pop %v3093
          %v3110 = vrcp.pop %v3094
          %v3111 = vrcp.pop %v3095
          %v3112 = vrcp.pop %v3096
          %v3113 = vrcp.pop %v3097
          %v3114 = vrcp.pop %v3098
          %v3115 = vrcp.pop %v3099
          %3117 = vset.pattern.permute.xlu0 35
          %3118 = vperm.xlu0 %3117, %v3100
          %v3119 = vpop.permute.xlu0 %3118
          %3122 = vset.pattern.permute.xlu0 35
          %3123 = vperm.xlu0 %3122, %v3101
          %v3124 = vpop.permute.xlu0 %3123
          %3127 = vset.pattern.permute.xlu0 35
          %3128 = vperm.xlu0 %3127, %v3102
          %v3129 = vpop.permute.xlu0 %3128
          %3132 = vset.pattern.permute.xlu0 35
          %3133 = vperm.xlu0 %3132, %v3103
          %v3134 = vpop.permute.xlu0 %3133
          %3137 = vset.pattern.permute.xlu0 35
          %3138 = vperm.xlu0 %3137, %v3104
          %v3139 = vpop.permute.xlu0 %3138
          %3142 = vset.pattern.permute.xlu0 35
          %3143 = vperm.xlu0 %3142, %v3105
          %v3144 = vpop.permute.xlu0 %3143
          %3147 = vset.pattern.permute.xlu0 35
          %3148 = vperm.xlu0 %3147, %v3106
          %v3149 = vpop.permute.xlu0 %3148
          %3152 = vset.pattern.permute.xlu0 35
          %3153 = vperm.xlu0 %3152, %v3107
          %v3154 = vpop.permute.xlu0 %3153
          %3157 = vset.pattern.permute.xlu0 35
          %3158 = vperm.xlu0 %3157, %v3108
          %v3159 = vpop.permute.xlu0 %3158
          %3162 = vset.pattern.permute.xlu0 35
          %3163 = vperm.xlu0 %3162, %v3109
          %v3164 = vpop.permute.xlu0 %3163
          %3167 = vset.pattern.permute.xlu0 35
          %3168 = vperm.xlu0 %3167, %v3110
          %v3169 = vpop.permute.xlu0 %3168
          %3172 = vset.pattern.permute.xlu0 35
          %3173 = vperm.xlu0 %3172, %v3111
          %v3174 = vpop.permute.xlu0 %3173
          %3177 = vset.pattern.permute.xlu0 35
          %3178 = vperm.xlu0 %3177, %v3112
          %v3179 = vpop.permute.xlu0 %3178
          %3182 = vset.pattern.permute.xlu0 35
          %3183 = vperm.xlu0 %3182, %v3113
          %v3184 = vpop.permute.xlu0 %3183
          %3187 = vset.pattern.permute.xlu0 35
          %3188 = vperm.xlu0 %3187, %v3114
          %v3189 = vpop.permute.xlu0 %3188
          %3192 = vset.pattern.permute.xlu0 35
          %3193 = vperm.xlu0 %3192, %v3115
          %v3194 = vpop.permute.xlu0 %3193
          %v3196 = vmul.f32 %v3084, %v3119
          %v3197 = vmul.f32 %v3085, %v3124
          %v3198 = vmul.f32 %v3086, %v3129
          %v3199 = vmul.f32 %v3087, %v3134
          %v3200 = vmul.f32 %v3088, %v3139
          %v3201 = vmul.f32 %v3089, %v3144
          %v3202 = vmul.f32 %v3090, %v3149
          %v3203 = vmul.f32 %v3091, %v3154
          %v3204 = vmul.f32 %v3092, %v3159
          %v3205 = vmul.f32 %v3093, %v3164
          %v3206 = vmul.f32 %v3094, %v3169
          %v3207 = vmul.f32 %v3095, %v3174
          %v3208 = vmul.f32 %v3096, %v3179
          %v3209 = vmul.f32 %v3097, %v3184
          %v3210 = vmul.f32 %v3098, %v3189
          %v3211 = vmul.f32 %v3099, %v3194
          %v3212 = vld [vmem:[%s5] sm:$0x1]
          %v3214 = vlaneseq
          %v3215 = vshrl.u32 %v3214, 7
          %v3216 = vsub.s32 0, %v3215
          %v3217 = vrot.slane %v3212, %v3216
          %3218 = vrot.lane.b32.xlu0 %v3217, 3
          %v3219 = vpop.permute.xlu0 %3218
          %v3221 = vadd.f32 %v3196, %v3219
          %v3222 = vadd.f32 %v3197, %v3219
          %v3223 = vadd.f32 %v3198, %v3219
          %v3224 = vadd.f32 %v3199, %v3219
          %v3225 = vadd.f32 %v3200, %v3219
          %v3226 = vadd.f32 %v3201, %v3219
          %v3227 = vadd.f32 %v3202, %v3219
          %v3228 = vadd.f32 %v3203, %v3219
          %v3229 = vadd.f32 %v3204, %v3219
          %v3230 = vadd.f32 %v3205, %v3219
          %v3231 = vadd.f32 %v3206, %v3219
          %v3232 = vadd.f32 %v3207, %v3219
          %v3233 = vadd.f32 %v3208, %v3219
          %v3234 = vadd.f32 %v3209, %v3219
          %v3235 = vadd.f32 %v3210, %v3219
          %v3236 = vadd.f32 %v3211, %v3219
          %3253 = vrot.lane.b32.xlu0 %v3221, 125
          %v3254 = vpop.permute.xlu0 %3253
          %3255 = vrot.lane.b32.xlu0 %v3222, 125
          %v3256 = vpop.permute.xlu0 %3255
          %3257 = vrot.lane.b32.xlu0 %v3223, 125
          %v3258 = vpop.permute.xlu0 %3257
          %3259 = vrot.lane.b32.xlu0 %v3224, 125
          %v3260 = vpop.permute.xlu0 %3259
          %3261 = vrot.lane.b32.xlu0 %v3225, 125
          %v3262 = vpop.permute.xlu0 %3261
          %3263 = vrot.lane.b32.xlu0 %v3226, 125
          %v3264 = vpop.permute.xlu0 %3263
          %3265 = vrot.lane.b32.xlu0 %v3227, 125
          %v3266 = vpop.permute.xlu0 %3265
          %3267 = vrot.lane.b32.xlu0 %v3228, 125
          %v3268 = vpop.permute.xlu0 %3267
          %3269 = vrot.lane.b32.xlu0 %v3229, 125
          %v3270 = vpop.permute.xlu0 %3269
          %3271 = vrot.lane.b32.xlu0 %v3230, 125
          %v3272 = vpop.permute.xlu0 %3271
          %3273 = vrot.lane.b32.xlu0 %v3231, 125
          %v3274 = vpop.permute.xlu0 %3273
          %3275 = vrot.lane.b32.xlu0 %v3232, 125
          %v3276 = vpop.permute.xlu0 %3275
          %3277 = vrot.lane.b32.xlu0 %v3233, 125
          %v3278 = vpop.permute.xlu0 %3277
          %3279 = vrot.lane.b32.xlu0 %v3234, 125
          %v3280 = vpop.permute.xlu0 %3279
          %3281 = vrot.lane.b32.xlu0 %v3235, 125
          %v3282 = vpop.permute.xlu0 %3281
          %3283 = vrot.lane.b32.xlu0 %v3236, 125
          %v3284 = vpop.permute.xlu0 %3283
          %vm3301 = vcmask 261312
          %3302 = vst.msk [vmem:[%s399] sm:$0xff] %vm3301, %v3254
          %3303 = vst.msk [vmem:[%s399 + $0x8] sm:$0xff] %vm3301, %v3256
          %3304 = vst.msk [vmem:[%s399 + $0x10] sm:$0xff] %vm3301, %v3258
          %3305 = vst.msk [vmem:[%s399 + $0x18] sm:$0xff] %vm3301, %v3260
          %3306 = vst.msk [vmem:[%s399 + $0x20] sm:$0xff] %vm3301, %v3262
          %3307 = vst.msk [vmem:[%s399 + $0x28] sm:$0xff] %vm3301, %v3264
          %3308 = vst.msk [vmem:[%s399 + $0x30] sm:$0xff] %vm3301, %v3266
          %3309 = vst.msk [vmem:[%s399 + $0x38] sm:$0xff] %vm3301, %v3268
          %3310 = vst.msk [vmem:[%s399 + $0x40] sm:$0xff] %vm3301, %v3270
          %3311 = vst.msk [vmem:[%s399 + $0x48] sm:$0xff] %vm3301, %v3272
          %3312 = vst.msk [vmem:[%s399 + $0x50] sm:$0xff] %vm3301, %v3274
          %3313 = vst.msk [vmem:[%s399 + $0x58] sm:$0xff] %vm3301, %v3276
          %3314 = vst.msk [vmem:[%s399 + $0x60] sm:$0xff] %vm3301, %v3278
          %3315 = vst.msk [vmem:[%s399 + $0x68] sm:$0xff] %vm3301, %v3280
          %3316 = vst.msk [vmem:[%s399 + $0x70] sm:$0xff] %vm3301, %v3282
          %3317 = vst.msk [vmem:[%s399 + $0x78] sm:$0xff] %vm3301, %v3284
        $region90: #{gat_conv_pallas.3} parent=77 // pred_fallthru
          _
        %s3318 = smul.u32 16, %s21
        %p3319 = scmp.lt.s32.totalorder %s3318, 31
        %s3320 = scalar_select %p3319, %s3318, 31
        %s3321 = smul.addr %s3320, 8
        %s3322 = scalar_lea.vmem %s6, %s3321
        // Predicated region
        $region91: #{gat_conv_pallas.3} parent=77 // pred_check
          %p3323 = pneg %p200
        $region92: #{gat_conv_pallas.3} parent=77 // pred_check_branch
          %3325 = sbr.rel (%p3323) target = $region94
        $region93: #{gat_conv_pallas.3} parent=77 // pred_region
          %s3326 = smul.u32 16, %s21
        $region94: #{gat_conv_pallas.3} parent=77 // pred_fallthru
          _
      $region78: #{gat_conv_pallas.3} parent=5 // pred_fallthru
        _
      %p3327 = scmp.le.s32.totalorder 2, %s12
      // Predicated region
      $region95: #{gat_conv_pallas.3} parent=5 // pred_check
        %p3328 = pneg %p3327
      $region96: #{gat_conv_pallas.3} parent=5 // pred_check_branch
        %3330 = sbr.rel (%p3328) target = $region98
      $region97: #{gat_conv_pallas.3} parent=5 // pred_region
        %s3331 = ssub.s32 %s12, 2
        // Predicated region
        $region99: #{gat_conv_pallas.3} parent=97 // pred_check
          %p3332 = pneg %p206
        $region100: #{gat_conv_pallas.3} parent=97 // pred_check_branch
          %3334 = sbr.rel (%p3332) target = $region102
        $region101: #{gat_conv_pallas.3} parent=97 // pred_region
          %s3335 = smul.u32 16, %s23
          %p3336 = scmp.lt.s32.totalorder %s3335, 31
          %s3337 = scalar_select %p3336, %s3335, 31
          %s3338 = smul.addr %s3337, 8
          %s3339 = scalar_lea.vmem %s6, %s3338
        $region102: #{gat_conv_pallas.3} parent=97 // pred_fallthru
          _
      $region98: #{gat_conv_pallas.3} parent=5 // pred_fallthru
        _
    $region6: #{gat_conv_pallas.3} parent=1 // loop_footer
      %s16 = sadd.s32 1, %s12
    $region7: #{gat_conv_pallas.3} parent=1 // loop_footer_branch
      %11 = sbr.rel target = $region3
    $region8: #{gat_conv_pallas.3} parent=1 // loop_exit
      _

</llo_original>
